<compile_context>
chip_gen: v6e
topology: v6e:2x2x1
jax: 0.10.0
libtpu: 0.0.40
codegen_flags: <defaults>
</compile_context>

<pallas_src>
import math
import functools

import jax
import jax.numpy as jnp
import numpy as np
from jax.experimental import pallas as pl
from jax.experimental.pallas import tpu as pltpu


def _round_up(x, m):
    return ((x + m - 1) // m) * m


# -----------------------------------------------------------------------------
# Kernel
# -----------------------------------------------------------------------------
def _lstm_layer_kernel(x_ref, wi_ref, wh_ref, b_ref,
                       y_ref, hN_ref, cN_ref,
                       *, hp, t_blk, seq):
    """One LSTM layer; grid axis 0 = block of t_blk timesteps (sequential).

    x_ref : (t_blk, bs, in_p)  lane-padded inputs for this time block
    wi_ref: (in_p, 4*hp)       input->gates weights, per-gate lane-padded
    wh_ref: (hp,   4*hp)       hidden->gates weights, per-gate lane-padded
    b_ref : (1,    4*hp)       combined bias (bi + bh), per-gate lane-padded
    y_ref : (t_blk, bs, hp)    per-timestep hidden outputs for this block
    hN_ref: (bs, hp)           final hidden state (grid-resident carry)
    cN_ref: (bs, hp)           final cell state   (grid-resident carry)
    """
    tb = pl.program_id(0)

    @pl.when(tb == 0)
    def _():
        hN_ref[...] = jnp.zeros_like(hN_ref)
        cN_ref[...] = jnp.zeros_like(cN_ref)

    bs = y_ref.shape[1]
    # Hoist the bias broadcast out of the unrolled time loop.
    bias = jnp.broadcast_to(b_ref[...], (bs, 4 * hp))

    h = hN_ref[...]                      # (bs, hp)  carry from previous block
    c = cN_ref[...]                      # (bs, hp)

    needs_mask = (seq % t_blk) != 0      # static Python bool
    t0 = tb * t_blk

    # Statically unrolled loop over the timesteps of this block.
    for step in range(t_blk):
        x_t = x_ref[step]                # (bs, in_p), static leading index

        gates = (jnp.dot(x_t, wi_ref[...],
                         preferred_element_type=jnp.float32)
                 + jnp.dot(h, wh_ref[...],
                           preferred_element_type=jnp.float32)
                 + bias)                 # (bs, 4*hp)

        # Lane-aligned 128-wide gate slices (hp is a multiple of 128).
        i_g = jax.nn.sigmoid(gates[:, 0 * hp:1 * hp])
        f_g = jax.nn.sigmoid(gates[:, 1 * hp:2 * hp])
        g_g = jnp.tanh(gates[:, 2 * hp:3 * hp])
        o_g = jax.nn.sigmoid(gates[:, 3 * hp:4 * hp])

        c_new = f_g * c + i_g * g_g
        h_new = o_g * jnp.tanh(c_new)

        if needs_mask:
            # Only emitted when seq is not a multiple of t_blk.
            valid = (t0 + step) < seq
            c = jnp.where(valid, c_new, c)
            h = jnp.where(valid, h_new, h)
        else:
            c = c_new
            h = h_new

        # Lane-dense store into the VMEM-resident output block.
        y_ref[step] = h.astype(y_ref.dtype)

    # Write the carries once per grid block (not per timestep).
    hN_ref[...] = h.astype(hN_ref.dtype)
    cN_ref[...] = c.astype(cN_ref.dtype)


# -----------------------------------------------------------------------------
# Per-layer pallas_call wrapper
# -----------------------------------------------------------------------------
def lstm_layer(x_tbp, wi_p, wh_p, b_p, *, hp, t_blk, seq):
    """x_tbp: (seq_pad, bs, in_p) lane/time-padded. Returns (y, h_final, c_final)."""
    seq_pad, bs, in_p = x_tbp.shape
    n_blocks = seq_pad // t_blk
    kernel = functools.partial(_lstm_layer_kernel, hp=hp, t_blk=t_blk, seq=seq)
    return pl.pallas_call(
        kernel,
        out_shape=(
            jax.ShapeDtypeStruct((seq_pad, bs, hp), jnp.float32),
            jax.ShapeDtypeStruct((bs, hp), jnp.float32),
            jax.ShapeDtypeStruct((bs, hp), jnp.float32),
        ),
        grid_spec=pltpu.PrefetchScalarGridSpec(
            num_scalar_prefetch=0,
            grid=(n_blocks,),
            in_specs=[
                pl.BlockSpec((t_blk, bs, in_p), lambda t: (t, 0, 0)),
                pl.BlockSpec((in_p, 4 * hp), lambda t: (0, 0)),
                pl.BlockSpec((hp, 4 * hp), lambda t: (0, 0)),
                pl.BlockSpec((1, 4 * hp), lambda t: (0, 0)),
            ],
            out_specs=[
                pl.BlockSpec((t_blk, bs, hp), lambda t: (t, 0, 0)),
                pl.BlockSpec((bs, hp), lambda t: (0, 0)),
                pl.BlockSpec((bs, hp), lambda t: (0, 0)),
            ],
        ),
        compiler_params=pltpu.CompilerParams(
            dimension_semantics=("arbitrary",)),
    )(x_tbp, wi_p, wh_p, b_p)


# -----------------------------------------------------------------------------
# Weight preparation: transpose + per-gate lane padding (done once, plain JAX)
# -----------------------------------------------------------------------------
def _prep_weights(p, in_f, hidden, in_p, hp):
    """Build (in_p, 4*hp) / (hp, 4*hp) / (1, 4*hp) padded, transposed weights.

    Gate g occupies columns [g*hp, g*hp + hidden); padded columns/rows are zero
    so padded hidden lanes stay exactly zero through the recurrence.
    """
    Wi, Wh, bi, bh = p["Wi"], p["Wh"], p["bi"], p["bh"]
    wi_t = jnp.zeros((in_p, 4 * hp), jnp.float32)
    wh_t = jnp.zeros((hp, 4 * hp), jnp.float32)
    b = jnp.zeros((1, 4 * hp), jnp.float32)
    for g in range(4):
        wi_t = wi_t.at[:in_f, g * hp:g * hp + hidden].set(
            Wi[g * hidden:(g + 1) * hidden, :].T)
        wh_t = wh_t.at[:hidden, g * hp:g * hp + hidden].set(
            Wh[g * hidden:(g + 1) * hidden, :].T)
        b = b.at[0, g * hp:g * hp + hidden].set(
            bi[g * hidden:(g + 1) * hidden] + bh[g * hidden:(g + 1) * hidden])
    return wi_t, wh_t, b


# -----------------------------------------------------------------------------
# Multi-layer forward (matches the PyTorch LSTM module)
# -----------------------------------------------------------------------------
def lstm_forward(inputs_bsf, params, hidden, t_blk=8):
    """inputs_bsf: (bs, seq, input_size) f32.
    Returns (outputs (bs, seq, H), (h_stack (L, bs, H), c_stack (L, bs, H)))."""
    bs, seq, in_f = inputs_bsf.shape
    hp = _round_up(hidden, 128)
    t_blk = max(1, min(t_blk, seq))
    n_blocks = -(-seq // t_blk)
    seq_pad = n_blocks * t_blk

    # (seq, bs, feat) layout, lane-pad features, zero-pad time to seq_pad.
    x = jnp.transpose(inputs_bsf, (1, 0, 2))
    in_p0 = _round_up(in_f, 128)
    x = jnp.pad(x, ((0, seq_pad - seq), (0, 0), (0, in_p0 - in_f)))

    # TODO(synk): all layers could be fused into a single pallas_call (layer as
    # an outer 'arbitrary' grid axis) to avoid the per-layer HBM round-trip of
    # y; kept as one pallas_call per layer here for clarity/robustness.
    h_list, c_list = [], []
    for li, p in enumerate(params):
        layer_in = in_f if li == 0 else hidden
        in_p = in_p0 if li == 0 else hp
        wi_p, wh_p, b_p = _prep_weights(p, layer_in, hidden, in_p, hp)
        y, h_fin, c_fin = lstm_layer(x, wi_p, wh_p, b_p,
                                     hp=hp, t_blk=t_blk, seq=seq)
        h_list.append(h_fin[:, :hidden])
        c_list.append(c_fin[:, :hidden])
        x = y  # (seq_pad, bs, hp) — already padded for the next layer

    outputs = jnp.transpose(x[:seq, :, :hidden], (1, 0, 2))
    return outputs, (jnp.stack(h_list), jnp.stack(c_list))


# -----------------------------------------------------------------------------
# Pure-JAX reference (mirrors the PyTorch semantics exactly)
# -----------------------------------------------------------------------------
def lstm_forward_ref(inputs_bsf, params, hidden):
    bs, seq, _ = inputs_bsf.shape
    x = inputs_bsf
    h_list, c_list = [], []
    for p in params:
        h = jnp.zeros((bs, hidden), jnp.float32)
        c = jnp.zeros((bs, hidden), jnp.float32)
        outs = []
        for t in range(seq):
            X = x[:, t, :]
            gates = X @ p["Wi"].T + p["bi"] + h @ p["Wh"].T + p["bh"]
            i_g, f_g, c_g, o_g = jnp.split(gates, 4, axis=1)
            i_g = jax.nn.sigmoid(i_g)
            f_g = jax.nn.sigmoid(f_g)
            c_g = jnp.tanh(c_g)
            o_g = jax.nn.sigmoid(o_g)
            c = f_g * c + i_g * c_g
            h = o_g * jnp.tanh(c)
            outs.append(h)
        h_list.append(h)
        c_list.append(c)
        x = jnp.stack(outs, axis=1)
    return x, (jnp.stack(h_list), jnp.stack(c_list))


def init_params(key, input_size, hidden, layer_num):
    """Deterministic uniform(-stdv, stdv) init, matching reset_parameters()."""
    stdv = 1.0 / math.sqrt(hidden) if hidden > 0 else 0.0
    params = []
    for layer in range(layer_num):
        in_f = input_size if layer == 0 else hidden
        key, k1, k2, k3, k4 = jax.random.split(key, 5)
        params.append({
            "Wi": jax.random.uniform(k1, (4 * hidden, in_f), jnp.float32, -stdv, stdv),
            "Wh": jax.random.uniform(k2, (4 * hidden, hidden), jnp.float32, -stdv, stdv),
            "bi": jax.random.uniform(k3, (4 * hidden,), jnp.float32, -stdv, stdv),
            "bh": jax.random.uniform(k4, (4 * hidden,), jnp.float32, -stdv, stdv),
        })
    return params


if __name__ == "__main__":
    bs, seq, input_size, hidden, layer_num = 2, 8, 16, 32, 2

    key = jax.random.PRNGKey(0)
    key, kx = jax.random.split(key)
    x = jax.random.normal(kx, (bs, seq, input_size), jnp.float32)
    params = init_params(key, input_size, hidden, layer_num)

    out, (h_n, c_n) = lstm_forward(x, params, hidden, t_blk=8)
    out = jax.block_until_ready(out)
    h_n = jax.block_until_ready(h_n)
    c_n = jax.block_until_ready(c_n)

    # Cross-check against a pure-JAX reference.
    out_r, (h_r, c_r) = lstm_forward_ref(x, params, hidden)
    np.testing.assert_allclose(np.asarray(out), np.asarray(out_r), rtol=1e-5, atol=1e-5)
    np.testing.assert_allclose(np.asarray(h_n), np.asarray(h_r), rtol=1e-5, atol=1e-5)
    np.testing.assert_allclose(np.asarray(c_n), np.asarray(c_r), rtol=1e-5, atol=1e-5)

    assert out.shape == (bs, seq, hidden)
    assert h_n.shape == (layer_num, bs, hidden)
    assert c_n.shape == (layer_num, bs, hidden)
    print("KERNEL_OK")
</pallas_src>

<mosaic_0001>
module attributes {stable_mosaic.version = 11 : i64} {
  func.func @_lstm_layer_kernel(%arg0: i32, %arg1: memref<8x2x128xf32, #tpu.memory_space<vmem>>, %arg2: memref<128x512xf32, #tpu.memory_space<vmem>>, %arg3: memref<128x512xf32, #tpu.memory_space<vmem>>, %arg4: memref<1x512xf32, #tpu.memory_space<vmem>>, %arg5: memref<8x2x128xf32, #tpu.memory_space<vmem>>, %arg6: memref<2x128xf32, #tpu.memory_space<vmem>>, %arg7: memref<2x128xf32, #tpu.memory_space<vmem>>) attributes {dimension_semantics = [#tpu.dimension_semantics<arbitrary>], iteration_bounds = array<i64: 1>, scalar_prefetch = 0 : i64, scratch_operands = 0 : i64, tpu.core_type = #tpu.core_type<tc>, window_params = [{transform_indices = @transform_0, window_bounds = array<i64: 8, 2, 128>}, {pipeline_mode = #tpu.pipeline_mode<synchronous>, transform_indices = @transform_1, window_bounds = array<i64: 128, 512>}, {pipeline_mode = #tpu.pipeline_mode<synchronous>, transform_indices = @transform_2, window_bounds = array<i64: 128, 512>}, {pipeline_mode = #tpu.pipeline_mode<synchronous>, transform_indices = @transform_3, window_bounds = array<i64: 1, 512>}, {transform_indices = @transform_4, window_bounds = array<i64: 8, 2, 128>}, {pipeline_mode = #tpu.pipeline_mode<synchronous>, transform_indices = @transform_5, window_bounds = array<i64: 2, 128>}, {pipeline_mode = #tpu.pipeline_mode<synchronous>, transform_indices = @transform_6, window_bounds = array<i64: 2, 128>}]} {
    %c0_i32 = arith.constant 0 : i32
    %0 = arith.cmpi eq, %arg0, %c0_i32 : i32
    %1 = arith.extui %0 : i1 to i32
    %c0_i32_0 = arith.constant 0 : i32
    %2 = arith.cmpi ne, %1, %c0_i32_0 : i32
    scf.if %2 {
      %cst_122 = arith.constant 0.000000e+00 : f32
      %298 = vector.broadcast %cst_122 : f32 to vector<2x128xf32>
      %c0_123 = arith.constant 0 : index
      %c0_124 = arith.constant 0 : index
      %299 = vector.load %arg6[%c0_123, %c0_124] : memref<2x128xf32, #tpu.memory_space<vmem>>, vector<2x128xf32>
      tpu.vector_store %arg6[%c0_123, %c0_124], %298 {strides = array<i32>} : memref<2x128xf32, #tpu.memory_space<vmem>>, vector<2x128xf32>,
      %cst_125 = arith.constant 0.000000e+00 : f32
      %300 = vector.broadcast %cst_125 : f32 to vector<2x128xf32>
      %c0_126 = arith.constant 0 : index
      %c0_127 = arith.constant 0 : index
      %301 = vector.load %arg7[%c0_126, %c0_127] : memref<2x128xf32, #tpu.memory_space<vmem>>, vector<2x128xf32>
      tpu.vector_store %arg7[%c0_126, %c0_127], %300 {strides = array<i32>} : memref<2x128xf32, #tpu.memory_space<vmem>>, vector<2x128xf32>,
    } else {
    }
    %c0 = arith.constant 0 : index
    %c0_1 = arith.constant 0 : index
    %3 = vector.load %arg4[%c0, %c0_1] : memref<1x512xf32, #tpu.memory_space<vmem>>, vector<1x512xf32>
    %4 = vector.shape_cast %3 : vector<1x512xf32> to vector<1x512xf32>
    %5 = vector.broadcast %4 : vector<1x512xf32> to vector<2x512xf32>
    %c0_2 = arith.constant 0 : index
    %c0_3 = arith.constant 0 : index
    %6 = vector.load %arg6[%c0_2, %c0_3] : memref<2x128xf32, #tpu.memory_space<vmem>>, vector<2x128xf32>
    %c0_4 = arith.constant 0 : index
    %c0_5 = arith.constant 0 : index
    %7 = vector.load %arg7[%c0_4, %c0_5] : memref<2x128xf32, #tpu.memory_space<vmem>>, vector<2x128xf32>
    %c0_6 = arith.constant 0 : index
    %c0_7 = arith.constant 0 : index
    %c0_8 = arith.constant 0 : index
    %8 = vector.load %arg1[%c0_6, %c0_7, %c0_8] : memref<8x2x128xf32, #tpu.memory_space<vmem>>, vector<1x2x128xf32>
    %9 = vector.shape_cast %8 : vector<1x2x128xf32> to vector<2x128xf32>
    %c0_9 = arith.constant 0 : index
    %c0_10 = arith.constant 0 : index
    %10 = vector.load %arg2[%c0_9, %c0_10] : memref<128x512xf32, #tpu.memory_space<vmem>>, vector<128x512xf32>
    %cst = arith.constant dense<0.000000e+00> : vector<2x512xf32>
    %11 = tpu.matmul %9, %10, %cst {dimension_numbers = #tpu.dot_dimension_numbers<[1], [0], [0], [1], [0, 0, 1, 1], [], []>} : vector<2x128xf32>, vector<128x512xf32>, vector<2x512xf32> -> vector<2x512xf32>
    %c0_11 = arith.constant 0 : index
    %c0_12 = arith.constant 0 : index
    %12 = vector.load %arg3[%c0_11, %c0_12] : memref<128x512xf32, #tpu.memory_space<vmem>>, vector<128x512xf32>
    %cst_13 = arith.constant dense<0.000000e+00> : vector<2x512xf32>
    %13 = tpu.matmul %6, %12, %cst_13 {dimension_numbers = #tpu.dot_dimension_numbers<[1], [0], [0], [1], [0, 0, 1, 1], [], []>} : vector<2x128xf32>, vector<128x512xf32>, vector<2x512xf32> -> vector<2x512xf32>
    %14 = arith.addf %11, %13 : vector<2x512xf32>
    %15 = arith.addf %14, %5 : vector<2x512xf32>
    %16 = vector.extract_strided_slice %15 {offsets = [0, 0], sizes = [2, 128], strides = [1, 1]} : vector<2x512xf32> to vector<2x128xf32>
    %17 = arith.negf %16 : vector<2x128xf32>
    %18 = math.exp %17 : vector<2x128xf32>
    %cst_14 = arith.constant 1.000000e+00 : f32
    %19 = vector.broadcast %cst_14 : f32 to vector<2x128xf32>
    %20 = arith.addf %19, %18 : vector<2x128xf32>
    %21 = arith.divf %19, %20 : vector<2x128xf32>
    %22 = vector.extract_strided_slice %15 {offsets = [0, 128], sizes = [2, 128], strides = [1, 1]} : vector<2x512xf32> to vector<2x128xf32>
    %23 = arith.negf %22 : vector<2x128xf32>
    %24 = math.exp %23 : vector<2x128xf32>
    %cst_15 = arith.constant 1.000000e+00 : f32
    %25 = vector.broadcast %cst_15 : f32 to vector<2x128xf32>
    %26 = arith.addf %25, %24 : vector<2x128xf32>
    %27 = arith.divf %25, %26 : vector<2x128xf32>
    %28 = vector.extract_strided_slice %15 {offsets = [0, 256], sizes = [2, 128], strides = [1, 1]} : vector<2x512xf32> to vector<2x128xf32>
    %29 = math.tanh %28 : vector<2x128xf32>
    %30 = vector.extract_strided_slice %15 {offsets = [0, 384], sizes = [2, 128], strides = [1, 1]} : vector<2x512xf32> to vector<2x128xf32>
    %31 = arith.negf %30 : vector<2x128xf32>
    %32 = math.exp %31 : vector<2x128xf32>
    %cst_16 = arith.constant 1.000000e+00 : f32
    %33 = vector.broadcast %cst_16 : f32 to vector<2x128xf32>
    %34 = arith.addf %33, %32 : vector<2x128xf32>
    %35 = arith.divf %33, %34 : vector<2x128xf32>
    %36 = arith.mulf %27, %7 : vector<2x128xf32>
    %37 = arith.mulf %21, %29 : vector<2x128xf32>
    %38 = arith.addf %36, %37 : vector<2x128xf32>
    %39 = math.tanh %38 : vector<2x128xf32>
    %40 = arith.mulf %35, %39 : vector<2x128xf32>
    %c0_17 = arith.constant 0 : index
    %c0_18 = arith.constant 0 : index
    %c0_19 = arith.constant 0 : index
    %41 = vector.load %arg5[%c0_17, %c0_18, %c0_19] : memref<8x2x128xf32, #tpu.memory_space<vmem>>, vector<1x2x128xf32>
    %42 = vector.shape_cast %41 : vector<1x2x128xf32> to vector<2x128xf32>
    %43 = vector.shape_cast %40 : vector<2x128xf32> to vector<1x2x128xf32>
    tpu.vector_store %arg5[%c0_17, %c0_18, %c0_19], %43 {strides = array<i32>} : memref<8x2x128xf32, #tpu.memory_space<vmem>>, vector<1x2x128xf32>,
    %c1 = arith.constant 1 : index
    %c0_20 = arith.constant 0 : index
    %c0_21 = arith.constant 0 : index
    %44 = vector.load %arg1[%c1, %c0_20, %c0_21] : memref<8x2x128xf32, #tpu.memory_space<vmem>>, vector<1x2x128xf32>
    %45 = vector.shape_cast %44 : vector<1x2x128xf32> to vector<2x128xf32>
    %c0_22 = arith.constant 0 : index
    %c0_23 = arith.constant 0 : index
    %46 = vector.load %arg2[%c0_22, %c0_23] : memref<128x512xf32, #tpu.memory_space<vmem>>, vector<128x512xf32>
    %cst_24 = arith.constant dense<0.000000e+00> : vector<2x512xf32>
    %47 = tpu.matmul %45, %46, %cst_24 {dimension_numbers = #tpu.dot_dimension_numbers<[1], [0], [0], [1], [0, 0, 1, 1], [], []>} : vector<2x128xf32>, vector<128x512xf32>, vector<2x512xf32> -> vector<2x512xf32>
    %c0_25 = arith.constant 0 : index
    %c0_26 = arith.constant 0 : index
    %48 = vector.load %arg3[%c0_25, %c0_26] : memref<128x512xf32, #tpu.memory_space<vmem>>, vector<128x512xf32>
    %cst_27 = arith.constant dense<0.000000e+00> : vector<2x512xf32>
    %49 = tpu.matmul %40, %48, %cst_27 {dimension_numbers = #tpu.dot_dimension_numbers<[1], [0], [0], [1], [0, 0, 1, 1], [], []>} : vector<2x128xf32>, vector<128x512xf32>, vector<2x512xf32> -> vector<2x512xf32>
    %50 = arith.addf %47, %49 : vector<2x512xf32>
    %51 = arith.addf %50, %5 : vector<2x512xf32>
    %52 = vector.extract_strided_slice %51 {offsets = [0, 0], sizes = [2, 128], strides = [1, 1]} : vector<2x512xf32> to vector<2x128xf32>
    %53 = arith.negf %52 : vector<2x128xf32>
    %54 = math.exp %53 : vector<2x128xf32>
    %cst_28 = arith.constant 1.000000e+00 : f32
    %55 = vector.broadcast %cst_28 : f32 to vector<2x128xf32>
    %56 = arith.addf %55, %54 : vector<2x128xf32>
    %57 = arith.divf %55, %56 : vector<2x128xf32>
    %58 = vector.extract_strided_slice %51 {offsets = [0, 128], sizes = [2, 128], strides = [1, 1]} : vector<2x512xf32> to vector<2x128xf32>
    %59 = arith.negf %58 : vector<2x128xf32>
    %60 = math.exp %59 : vector<2x128xf32>
    %cst_29 = arith.constant 1.000000e+00 : f32
    %61 = vector.broadcast %cst_29 : f32 to vector<2x128xf32>
    %62 = arith.addf %61, %60 : vector<2x128xf32>
    %63 = arith.divf %61, %62 : vector<2x128xf32>
    %64 = vector.extract_strided_slice %51 {offsets = [0, 256], sizes = [2, 128], strides = [1, 1]} : vector<2x512xf32> to vector<2x128xf32>
    %65 = math.tanh %64 : vector<2x128xf32>
    %66 = vector.extract_strided_slice %51 {offsets = [0, 384], sizes = [2, 128], strides = [1, 1]} : vector<2x512xf32> to vector<2x128xf32>
    %67 = arith.negf %66 : vector<2x128xf32>
    %68 = math.exp %67 : vector<2x128xf32>
    %cst_30 = arith.constant 1.000000e+00 : f32
    %69 = vector.broadcast %cst_30 : f32 to vector<2x128xf32>
    %70 = arith.addf %69, %68 : vector<2x128xf32>
    %71 = arith.divf %69, %70 : vector<2x128xf32>
    %72 = arith.mulf %63, %38 : vector<2x128xf32>
    %73 = arith.mulf %57, %65 : vector<2x128xf32>
    %74 = arith.addf %72, %73 : vector<2x128xf32>
    %75 = math.tanh %74 : vector<2x128xf32>
    %76 = arith.mulf %71, %75 : vector<2x128xf32>
    %c1_31 = arith.constant 1 : index
    %c0_32 = arith.constant 0 : index
    %c0_33 = arith.constant 0 : index
    %77 = vector.load %arg5[%c1_31, %c0_32, %c0_33] : memref<8x2x128xf32, #tpu.memory_space<vmem>>, vector<1x2x128xf32>
    %78 = vector.shape_cast %77 : vector<1x2x128xf32> to vector<2x128xf32>
    %79 = vector.shape_cast %76 : vector<2x128xf32> to vector<1x2x128xf32>
    tpu.vector_store %arg5[%c1_31, %c0_32, %c0_33], %79 {strides = array<i32>} : memref<8x2x128xf32, #tpu.memory_space<vmem>>, vector<1x2x128xf32>,
    %c2 = arith.constant 2 : index
    %c0_34 = arith.constant 0 : index
    %c0_35 = arith.constant 0 : index
    %80 = vector.load %arg1[%c2, %c0_34, %c0_35] : memref<8x2x128xf32, #tpu.memory_space<vmem>>, vector<1x2x128xf32>
    %81 = vector.shape_cast %80 : vector<1x2x128xf32> to vector<2x128xf32>
    %c0_36 = arith.constant 0 : index
    %c0_37 = arith.constant 0 : index
    %82 = vector.load %arg2[%c0_36, %c0_37] : memref<128x512xf32, #tpu.memory_space<vmem>>, vector<128x512xf32>
    %cst_38 = arith.constant dense<0.000000e+00> : vector<2x512xf32>
    %83 = tpu.matmul %81, %82, %cst_38 {dimension_numbers = #tpu.dot_dimension_numbers<[1], [0], [0], [1], [0, 0, 1, 1], [], []>} : vector<2x128xf32>, vector<128x512xf32>, vector<2x512xf32> -> vector<2x512xf32>
    %c0_39 = arith.constant 0 : index
    %c0_40 = arith.constant 0 : index
    %84 = vector.load %arg3[%c0_39, %c0_40] : memref<128x512xf32, #tpu.memory_space<vmem>>, vector<128x512xf32>
    %cst_41 = arith.constant dense<0.000000e+00> : vector<2x512xf32>
    %85 = tpu.matmul %76, %84, %cst_41 {dimension_numbers = #tpu.dot_dimension_numbers<[1], [0], [0], [1], [0, 0, 1, 1], [], []>} : vector<2x128xf32>, vector<128x512xf32>, vector<2x512xf32> -> vector<2x512xf32>
    %86 = arith.addf %83, %85 : vector<2x512xf32>
    %87 = arith.addf %86, %5 : vector<2x512xf32>
    %88 = vector.extract_strided_slice %87 {offsets = [0, 0], sizes = [2, 128], strides = [1, 1]} : vector<2x512xf32> to vector<2x128xf32>
    %89 = arith.negf %88 : vector<2x128xf32>
    %90 = math.exp %89 : vector<2x128xf32>
    %cst_42 = arith.constant 1.000000e+00 : f32
    %91 = vector.broadcast %cst_42 : f32 to vector<2x128xf32>
    %92 = arith.addf %91, %90 : vector<2x128xf32>
    %93 = arith.divf %91, %92 : vector<2x128xf32>
    %94 = vector.extract_strided_slice %87 {offsets = [0, 128], sizes = [2, 128], strides = [1, 1]} : vector<2x512xf32> to vector<2x128xf32>
    %95 = arith.negf %94 : vector<2x128xf32>
    %96 = math.exp %95 : vector<2x128xf32>
    %cst_43 = arith.constant 1.000000e+00 : f32
    %97 = vector.broadcast %cst_43 : f32 to vector<2x128xf32>
    %98 = arith.addf %97, %96 : vector<2x128xf32>
    %99 = arith.divf %97, %98 : vector<2x128xf32>
    %100 = vector.extract_strided_slice %87 {offsets = [0, 256], sizes = [2, 128], strides = [1, 1]} : vector<2x512xf32> to vector<2x128xf32>
    %101 = math.tanh %100 : vector<2x128xf32>
    %102 = vector.extract_strided_slice %87 {offsets = [0, 384], sizes = [2, 128], strides = [1, 1]} : vector<2x512xf32> to vector<2x128xf32>
    %103 = arith.negf %102 : vector<2x128xf32>
    %104 = math.exp %103 : vector<2x128xf32>
    %cst_44 = arith.constant 1.000000e+00 : f32
    %105 = vector.broadcast %cst_44 : f32 to vector<2x128xf32>
    %106 = arith.addf %105, %104 : vector<2x128xf32>
    %107 = arith.divf %105, %106 : vector<2x128xf32>
    %108 = arith.mulf %99, %74 : vector<2x128xf32>
    %109 = arith.mulf %93, %101 : vector<2x128xf32>
    %110 = arith.addf %108, %109 : vector<2x128xf32>
    %111 = math.tanh %110 : vector<2x128xf32>
    %112 = arith.mulf %107, %111 : vector<2x128xf32>
    %c2_45 = arith.constant 2 : index
    %c0_46 = arith.constant 0 : index
    %c0_47 = arith.constant 0 : index
    %113 = vector.load %arg5[%c2_45, %c0_46, %c0_47] : memref<8x2x128xf32, #tpu.memory_space<vmem>>, vector<1x2x128xf32>
    %114 = vector.shape_cast %113 : vector<1x2x128xf32> to vector<2x128xf32>
    %115 = vector.shape_cast %112 : vector<2x128xf32> to vector<1x2x128xf32>
    tpu.vector_store %arg5[%c2_45, %c0_46, %c0_47], %115 {strides = array<i32>} : memref<8x2x128xf32, #tpu.memory_space<vmem>>, vector<1x2x128xf32>,
    %c3 = arith.constant 3 : index
    %c0_48 = arith.constant 0 : index
    %c0_49 = arith.constant 0 : index
    %116 = vector.load %arg1[%c3, %c0_48, %c0_49] : memref<8x2x128xf32, #tpu.memory_space<vmem>>, vector<1x2x128xf32>
    %117 = vector.shape_cast %116 : vector<1x2x128xf32> to vector<2x128xf32>
    %c0_50 = arith.constant 0 : index
    %c0_51 = arith.constant 0 : index
    %118 = vector.load %arg2[%c0_50, %c0_51] : memref<128x512xf32, #tpu.memory_space<vmem>>, vector<128x512xf32>
    %cst_52 = arith.constant dense<0.000000e+00> : vector<2x512xf32>
    %119 = tpu.matmul %117, %118, %cst_52 {dimension_numbers = #tpu.dot_dimension_numbers<[1], [0], [0], [1], [0, 0, 1, 1], [], []>} : vector<2x128xf32>, vector<128x512xf32>, vector<2x512xf32> -> vector<2x512xf32>
    %c0_53 = arith.constant 0 : index
    %c0_54 = arith.constant 0 : index
    %120 = vector.load %arg3[%c0_53, %c0_54] : memref<128x512xf32, #tpu.memory_space<vmem>>, vector<128x512xf32>
    %cst_55 = arith.constant dense<0.000000e+00> : vector<2x512xf32>
    %121 = tpu.matmul %112, %120, %cst_55 {dimension_numbers = #tpu.dot_dimension_numbers<[1], [0], [0], [1], [0, 0, 1, 1], [], []>} : vector<2x128xf32>, vector<128x512xf32>, vector<2x512xf32> -> vector<2x512xf32>
    %122 = arith.addf %119, %121 : vector<2x512xf32>
    %123 = arith.addf %122, %5 : vector<2x512xf32>
    %124 = vector.extract_strided_slice %123 {offsets = [0, 0], sizes = [2, 128], strides = [1, 1]} : vector<2x512xf32> to vector<2x128xf32>
    %125 = arith.negf %124 : vector<2x128xf32>
    %126 = math.exp %125 : vector<2x128xf32>
    %cst_56 = arith.constant 1.000000e+00 : f32
    %127 = vector.broadcast %cst_56 : f32 to vector<2x128xf32>
    %128 = arith.addf %127, %126 : vector<2x128xf32>
    %129 = arith.divf %127, %128 : vector<2x128xf32>
    %130 = vector.extract_strided_slice %123 {offsets = [0, 128], sizes = [2, 128], strides = [1, 1]} : vector<2x512xf32> to vector<2x128xf32>
    %131 = arith.negf %130 : vector<2x128xf32>
    %132 = math.exp %131 : vector<2x128xf32>
    %cst_57 = arith.constant 1.000000e+00 : f32
    %133 = vector.broadcast %cst_57 : f32 to vector<2x128xf32>
    %134 = arith.addf %133, %132 : vector<2x128xf32>
    %135 = arith.divf %133, %134 : vector<2x128xf32>
    %136 = vector.extract_strided_slice %123 {offsets = [0, 256], sizes = [2, 128], strides = [1, 1]} : vector<2x512xf32> to vector<2x128xf32>
    %137 = math.tanh %136 : vector<2x128xf32>
    %138 = vector.extract_strided_slice %123 {offsets = [0, 384], sizes = [2, 128], strides = [1, 1]} : vector<2x512xf32> to vector<2x128xf32>
    %139 = arith.negf %138 : vector<2x128xf32>
    %140 = math.exp %139 : vector<2x128xf32>
    %cst_58 = arith.constant 1.000000e+00 : f32
    %141 = vector.broadcast %cst_58 : f32 to vector<2x128xf32>
    %142 = arith.addf %141, %140 : vector<2x128xf32>
    %143 = arith.divf %141, %142 : vector<2x128xf32>
    %144 = arith.mulf %135, %110 : vector<2x128xf32>
    %145 = arith.mulf %129, %137 : vector<2x128xf32>
    %146 = arith.addf %144, %145 : vector<2x128xf32>
    %147 = math.tanh %146 : vector<2x128xf32>
    %148 = arith.mulf %143, %147 : vector<2x128xf32>
    %c3_59 = arith.constant 3 : index
    %c0_60 = arith.constant 0 : index
    %c0_61 = arith.constant 0 : index
    %149 = vector.load %arg5[%c3_59, %c0_60, %c0_61] : memref<8x2x128xf32, #tpu.memory_space<vmem>>, vector<1x2x128xf32>
    %150 = vector.shape_cast %149 : vector<1x2x128xf32> to vector<2x128xf32>
    %151 = vector.shape_cast %148 : vector<2x128xf32> to vector<1x2x128xf32>
    tpu.vector_store %arg5[%c3_59, %c0_60, %c0_61], %151 {strides = array<i32>} : memref<8x2x128xf32, #tpu.memory_space<vmem>>, vector<1x2x128xf32>,
    %c4 = arith.constant 4 : index
    %c0_62 = arith.constant 0 : index
    %c0_63 = arith.constant 0 : index
    %152 = vector.load %arg1[%c4, %c0_62, %c0_63] : memref<8x2x128xf32, #tpu.memory_space<vmem>>, vector<1x2x128xf32>
    %153 = vector.shape_cast %152 : vector<1x2x128xf32> to vector<2x128xf32>
    %c0_64 = arith.constant 0 : index
    %c0_65 = arith.constant 0 : index
    %154 = vector.load %arg2[%c0_64, %c0_65] : memref<128x512xf32, #tpu.memory_space<vmem>>, vector<128x512xf32>
    %cst_66 = arith.constant dense<0.000000e+00> : vector<2x512xf32>
    %155 = tpu.matmul %153, %154, %cst_66 {dimension_numbers = #tpu.dot_dimension_numbers<[1], [0], [0], [1], [0, 0, 1, 1], [], []>} : vector<2x128xf32>, vector<128x512xf32>, vector<2x512xf32> -> vector<2x512xf32>
    %c0_67 = arith.constant 0 : index
    %c0_68 = arith.constant 0 : index
    %156 = vector.load %arg3[%c0_67, %c0_68] : memref<128x512xf32, #tpu.memory_space<vmem>>, vector<128x512xf32>
    %cst_69 = arith.constant dense<0.000000e+00> : vector<2x512xf32>
    %157 = tpu.matmul %148, %156, %cst_69 {dimension_numbers = #tpu.dot_dimension_numbers<[1], [0], [0], [1], [0, 0, 1, 1], [], []>} : vector<2x128xf32>, vector<128x512xf32>, vector<2x512xf32> -> vector<2x512xf32>
    %158 = arith.addf %155, %157 : vector<2x512xf32>
    %159 = arith.addf %158, %5 : vector<2x512xf32>
    %160 = vector.extract_strided_slice %159 {offsets = [0, 0], sizes = [2, 128], strides = [1, 1]} : vector<2x512xf32> to vector<2x128xf32>
    %161 = arith.negf %160 : vector<2x128xf32>
    %162 = math.exp %161 : vector<2x128xf32>
    %cst_70 = arith.constant 1.000000e+00 : f32
    %163 = vector.broadcast %cst_70 : f32 to vector<2x128xf32>
    %164 = arith.addf %163, %162 : vector<2x128xf32>
    %165 = arith.divf %163, %164 : vector<2x128xf32>
    %166 = vector.extract_strided_slice %159 {offsets = [0, 128], sizes = [2, 128], strides = [1, 1]} : vector<2x512xf32> to vector<2x128xf32>
    %167 = arith.negf %166 : vector<2x128xf32>
    %168 = math.exp %167 : vector<2x128xf32>
    %cst_71 = arith.constant 1.000000e+00 : f32
    %169 = vector.broadcast %cst_71 : f32 to vector<2x128xf32>
    %170 = arith.addf %169, %168 : vector<2x128xf32>
    %171 = arith.divf %169, %170 : vector<2x128xf32>
    %172 = vector.extract_strided_slice %159 {offsets = [0, 256], sizes = [2, 128], strides = [1, 1]} : vector<2x512xf32> to vector<2x128xf32>
    %173 = math.tanh %172 : vector<2x128xf32>
    %174 = vector.extract_strided_slice %159 {offsets = [0, 384], sizes = [2, 128], strides = [1, 1]} : vector<2x512xf32> to vector<2x128xf32>
    %175 = arith.negf %174 : vector<2x128xf32>
    %176 = math.exp %175 : vector<2x128xf32>
    %cst_72 = arith.constant 1.000000e+00 : f32
    %177 = vector.broadcast %cst_72 : f32 to vector<2x128xf32>
    %178 = arith.addf %177, %176 : vector<2x128xf32>
    %179 = arith.divf %177, %178 : vector<2x128xf32>
    %180 = arith.mulf %171, %146 : vector<2x128xf32>
    %181 = arith.mulf %165, %173 : vector<2x128xf32>
    %182 = arith.addf %180, %181 : vector<2x128xf32>
    %183 = math.tanh %182 : vector<2x128xf32>
    %184 = arith.mulf %179, %183 : vector<2x128xf32>
    %c4_73 = arith.constant 4 : index
    %c0_74 = arith.constant 0 : index
    %c0_75 = arith.constant 0 : index
    %185 = vector.load %arg5[%c4_73, %c0_74, %c0_75] : memref<8x2x128xf32, #tpu.memory_space<vmem>>, vector<1x2x128xf32>
    %186 = vector.shape_cast %185 : vector<1x2x128xf32> to vector<2x128xf32>
    %187 = vector.shape_cast %184 : vector<2x128xf32> to vector<1x2x128xf32>
    tpu.vector_store %arg5[%c4_73, %c0_74, %c0_75], %187 {strides = array<i32>} : memref<8x2x128xf32, #tpu.memory_space<vmem>>, vector<1x2x128xf32>,
    %c5 = arith.constant 5 : index
    %c0_76 = arith.constant 0 : index
    %c0_77 = arith.constant 0 : index
    %188 = vector.load %arg1[%c5, %c0_76, %c0_77] : memref<8x2x128xf32, #tpu.memory_space<vmem>>, vector<1x2x128xf32>
    %189 = vector.shape_cast %188 : vector<1x2x128xf32> to vector<2x128xf32>
    %c0_78 = arith.constant 0 : index
    %c0_79 = arith.constant 0 : index
    %190 = vector.load %arg2[%c0_78, %c0_79] : memref<128x512xf32, #tpu.memory_space<vmem>>, vector<128x512xf32>
    %cst_80 = arith.constant dense<0.000000e+00> : vector<2x512xf32>
    %191 = tpu.matmul %189, %190, %cst_80 {dimension_numbers = #tpu.dot_dimension_numbers<[1], [0], [0], [1], [0, 0, 1, 1], [], []>} : vector<2x128xf32>, vector<128x512xf32>, vector<2x512xf32> -> vector<2x512xf32>
    %c0_81 = arith.constant 0 : index
    %c0_82 = arith.constant 0 : index
    %192 = vector.load %arg3[%c0_81, %c0_82] : memref<128x512xf32, #tpu.memory_space<vmem>>, vector<128x512xf32>
    %cst_83 = arith.constant dense<0.000000e+00> : vector<2x512xf32>
    %193 = tpu.matmul %184, %192, %cst_83 {dimension_numbers = #tpu.dot_dimension_numbers<[1], [0], [0], [1], [0, 0, 1, 1], [], []>} : vector<2x128xf32>, vector<128x512xf32>, vector<2x512xf32> -> vector<2x512xf32>
    %194 = arith.addf %191, %193 : vector<2x512xf32>
    %195 = arith.addf %194, %5 : vector<2x512xf32>
    %196 = vector.extract_strided_slice %195 {offsets = [0, 0], sizes = [2, 128], strides = [1, 1]} : vector<2x512xf32> to vector<2x128xf32>
    %197 = arith.negf %196 : vector<2x128xf32>
    %198 = math.exp %197 : vector<2x128xf32>
    %cst_84 = arith.constant 1.000000e+00 : f32
    %199 = vector.broadcast %cst_84 : f32 to vector<2x128xf32>
    %200 = arith.addf %199, %198 : vector<2x128xf32>
    %201 = arith.divf %199, %200 : vector<2x128xf32>
    %202 = vector.extract_strided_slice %195 {offsets = [0, 128], sizes = [2, 128], strides = [1, 1]} : vector<2x512xf32> to vector<2x128xf32>
    %203 = arith.negf %202 : vector<2x128xf32>
    %204 = math.exp %203 : vector<2x128xf32>
    %cst_85 = arith.constant 1.000000e+00 : f32
    %205 = vector.broadcast %cst_85 : f32 to vector<2x128xf32>
    %206 = arith.addf %205, %204 : vector<2x128xf32>
    %207 = arith.divf %205, %206 : vector<2x128xf32>
    %208 = vector.extract_strided_slice %195 {offsets = [0, 256], sizes = [2, 128], strides = [1, 1]} : vector<2x512xf32> to vector<2x128xf32>
    %209 = math.tanh %208 : vector<2x128xf32>
    %210 = vector.extract_strided_slice %195 {offsets = [0, 384], sizes = [2, 128], strides = [1, 1]} : vector<2x512xf32> to vector<2x128xf32>
    %211 = arith.negf %210 : vector<2x128xf32>
    %212 = math.exp %211 : vector<2x128xf32>
    %cst_86 = arith.constant 1.000000e+00 : f32
    %213 = vector.broadcast %cst_86 : f32 to vector<2x128xf32>
    %214 = arith.addf %213, %212 : vector<2x128xf32>
    %215 = arith.divf %213, %214 : vector<2x128xf32>
    %216 = arith.mulf %207, %182 : vector<2x128xf32>
    %217 = arith.mulf %201, %209 : vector<2x128xf32>
    %218 = arith.addf %216, %217 : vector<2x128xf32>
    %219 = math.tanh %218 : vector<2x128xf32>
    %220 = arith.mulf %215, %219 : vector<2x128xf32>
    %c5_87 = arith.constant 5 : index
    %c0_88 = arith.constant 0 : index
    %c0_89 = arith.constant 0 : index
    %221 = vector.load %arg5[%c5_87, %c0_88, %c0_89] : memref<8x2x128xf32, #tpu.memory_space<vmem>>, vector<1x2x128xf32>
    %222 = vector.shape_cast %221 : vector<1x2x128xf32> to vector<2x128xf32>
    %223 = vector.shape_cast %220 : vector<2x128xf32> to vector<1x2x128xf32>
    tpu.vector_store %arg5[%c5_87, %c0_88, %c0_89], %223 {strides = array<i32>} : memref<8x2x128xf32, #tpu.memory_space<vmem>>, vector<1x2x128xf32>,
    %c6 = arith.constant 6 : index
    %c0_90 = arith.constant 0 : index
    %c0_91 = arith.constant 0 : index
    %224 = vector.load %arg1[%c6, %c0_90, %c0_91] : memref<8x2x128xf32, #tpu.memory_space<vmem>>, vector<1x2x128xf32>
    %225 = vector.shape_cast %224 : vector<1x2x128xf32> to vector<2x128xf32>
    %c0_92 = arith.constant 0 : index
    %c0_93 = arith.constant 0 : index
    %226 = vector.load %arg2[%c0_92, %c0_93] : memref<128x512xf32, #tpu.memory_space<vmem>>, vector<128x512xf32>
    %cst_94 = arith.constant dense<0.000000e+00> : vector<2x512xf32>
    %227 = tpu.matmul %225, %226, %cst_94 {dimension_numbers = #tpu.dot_dimension_numbers<[1], [0], [0], [1], [0, 0, 1, 1], [], []>} : vector<2x128xf32>, vector<128x512xf32>, vector<2x512xf32> -> vector<2x512xf32>
    %c0_95 = arith.constant 0 : index
    %c0_96 = arith.constant 0 : index
    %228 = vector.load %arg3[%c0_95, %c0_96] : memref<128x512xf32, #tpu.memory_space<vmem>>, vector<128x512xf32>
    %cst_97 = arith.constant dense<0.000000e+00> : vector<2x512xf32>
    %229 = tpu.matmul %220, %228, %cst_97 {dimension_numbers = #tpu.dot_dimension_numbers<[1], [0], [0], [1], [0, 0, 1, 1], [], []>} : vector<2x128xf32>, vector<128x512xf32>, vector<2x512xf32> -> vector<2x512xf32>
    %230 = arith.addf %227, %229 : vector<2x512xf32>
    %231 = arith.addf %230, %5 : vector<2x512xf32>
    %232 = vector.extract_strided_slice %231 {offsets = [0, 0], sizes = [2, 128], strides = [1, 1]} : vector<2x512xf32> to vector<2x128xf32>
    %233 = arith.negf %232 : vector<2x128xf32>
    %234 = math.exp %233 : vector<2x128xf32>
    %cst_98 = arith.constant 1.000000e+00 : f32
    %235 = vector.broadcast %cst_98 : f32 to vector<2x128xf32>
    %236 = arith.addf %235, %234 : vector<2x128xf32>
    %237 = arith.divf %235, %236 : vector<2x128xf32>
    %238 = vector.extract_strided_slice %231 {offsets = [0, 128], sizes = [2, 128], strides = [1, 1]} : vector<2x512xf32> to vector<2x128xf32>
    %239 = arith.negf %238 : vector<2x128xf32>
    %240 = math.exp %239 : vector<2x128xf32>
    %cst_99 = arith.constant 1.000000e+00 : f32
    %241 = vector.broadcast %cst_99 : f32 to vector<2x128xf32>
    %242 = arith.addf %241, %240 : vector<2x128xf32>
    %243 = arith.divf %241, %242 : vector<2x128xf32>
    %244 = vector.extract_strided_slice %231 {offsets = [0, 256], sizes = [2, 128], strides = [1, 1]} : vector<2x512xf32> to vector<2x128xf32>
    %245 = math.tanh %244 : vector<2x128xf32>
    %246 = vector.extract_strided_slice %231 {offsets = [0, 384], sizes = [2, 128], strides = [1, 1]} : vector<2x512xf32> to vector<2x128xf32>
    %247 = arith.negf %246 : vector<2x128xf32>
    %248 = math.exp %247 : vector<2x128xf32>
    %cst_100 = arith.constant 1.000000e+00 : f32
    %249 = vector.broadcast %cst_100 : f32 to vector<2x128xf32>
    %250 = arith.addf %249, %248 : vector<2x128xf32>
    %251 = arith.divf %249, %250 : vector<2x128xf32>
    %252 = arith.mulf %243, %218 : vector<2x128xf32>
    %253 = arith.mulf %237, %245 : vector<2x128xf32>
    %254 = arith.addf %252, %253 : vector<2x128xf32>
    %255 = math.tanh %254 : vector<2x128xf32>
    %256 = arith.mulf %251, %255 : vector<2x128xf32>
    %c6_101 = arith.constant 6 : index
    %c0_102 = arith.constant 0 : index
    %c0_103 = arith.constant 0 : index
    %257 = vector.load %arg5[%c6_101, %c0_102, %c0_103] : memref<8x2x128xf32, #tpu.memory_space<vmem>>, vector<1x2x128xf32>
    %258 = vector.shape_cast %257 : vector<1x2x128xf32> to vector<2x128xf32>
    %259 = vector.shape_cast %256 : vector<2x128xf32> to vector<1x2x128xf32>
    tpu.vector_store %arg5[%c6_101, %c0_102, %c0_103], %259 {strides = array<i32>} : memref<8x2x128xf32, #tpu.memory_space<vmem>>, vector<1x2x128xf32>,
    %c7 = arith.constant 7 : index
    %c0_104 = arith.constant 0 : index
    %c0_105 = arith.constant 0 : index
    %260 = vector.load %arg1[%c7, %c0_104, %c0_105] : memref<8x2x128xf32, #tpu.memory_space<vmem>>, vector<1x2x128xf32>
    %261 = vector.shape_cast %260 : vector<1x2x128xf32> to vector<2x128xf32>
    %c0_106 = arith.constant 0 : index
    %c0_107 = arith.constant 0 : index
    %262 = vector.load %arg2[%c0_106, %c0_107] : memref<128x512xf32, #tpu.memory_space<vmem>>, vector<128x512xf32>
    %cst_108 = arith.constant dense<0.000000e+00> : vector<2x512xf32>
    %263 = tpu.matmul %261, %262, %cst_108 {dimension_numbers = #tpu.dot_dimension_numbers<[1], [0], [0], [1], [0, 0, 1, 1], [], []>} : vector<2x128xf32>, vector<128x512xf32>, vector<2x512xf32> -> vector<2x512xf32>
    %c0_109 = arith.constant 0 : index
    %c0_110 = arith.constant 0 : index
    %264 = vector.load %arg3[%c0_109, %c0_110] : memref<128x512xf32, #tpu.memory_space<vmem>>, vector<128x512xf32>
    %cst_111 = arith.constant dense<0.000000e+00> : vector<2x512xf32>
    %265 = tpu.matmul %256, %264, %cst_111 {dimension_numbers = #tpu.dot_dimension_numbers<[1], [0], [0], [1], [0, 0, 1, 1], [], []>} : vector<2x128xf32>, vector<128x512xf32>, vector<2x512xf32> -> vector<2x512xf32>
    %266 = arith.addf %263, %265 : vector<2x512xf32>
    %267 = arith.addf %266, %5 : vector<2x512xf32>
    %268 = vector.extract_strided_slice %267 {offsets = [0, 0], sizes = [2, 128], strides = [1, 1]} : vector<2x512xf32> to vector<2x128xf32>
    %269 = arith.negf %268 : vector<2x128xf32>
    %270 = math.exp %269 : vector<2x128xf32>
    %cst_112 = arith.constant 1.000000e+00 : f32
    %271 = vector.broadcast %cst_112 : f32 to vector<2x128xf32>
    %272 = arith.addf %271, %270 : vector<2x128xf32>
    %273 = arith.divf %271, %272 : vector<2x128xf32>
    %274 = vector.extract_strided_slice %267 {offsets = [0, 128], sizes = [2, 128], strides = [1, 1]} : vector<2x512xf32> to vector<2x128xf32>
    %275 = arith.negf %274 : vector<2x128xf32>
    %276 = math.exp %275 : vector<2x128xf32>
    %cst_113 = arith.constant 1.000000e+00 : f32
    %277 = vector.broadcast %cst_113 : f32 to vector<2x128xf32>
    %278 = arith.addf %277, %276 : vector<2x128xf32>
    %279 = arith.divf %277, %278 : vector<2x128xf32>
    %280 = vector.extract_strided_slice %267 {offsets = [0, 256], sizes = [2, 128], strides = [1, 1]} : vector<2x512xf32> to vector<2x128xf32>
    %281 = math.tanh %280 : vector<2x128xf32>
    %282 = vector.extract_strided_slice %267 {offsets = [0, 384], sizes = [2, 128], strides = [1, 1]} : vector<2x512xf32> to vector<2x128xf32>
    %283 = arith.negf %282 : vector<2x128xf32>
    %284 = math.exp %283 : vector<2x128xf32>
    %cst_114 = arith.constant 1.000000e+00 : f32
    %285 = vector.broadcast %cst_114 : f32 to vector<2x128xf32>
    %286 = arith.addf %285, %284 : vector<2x128xf32>
    %287 = arith.divf %285, %286 : vector<2x128xf32>
    %288 = arith.mulf %279, %254 : vector<2x128xf32>
    %289 = arith.mulf %273, %281 : vector<2x128xf32>
    %290 = arith.addf %288, %289 : vector<2x128xf32>
    %291 = math.tanh %290 : vector<2x128xf32>
    %292 = arith.mulf %287, %291 : vector<2x128xf32>
    %c7_115 = arith.constant 7 : index
    %c0_116 = arith.constant 0 : index
    %c0_117 = arith.constant 0 : index
    %293 = vector.load %arg5[%c7_115, %c0_116, %c0_117] : memref<8x2x128xf32, #tpu.memory_space<vmem>>, vector<1x2x128xf32>
    %294 = vector.shape_cast %293 : vector<1x2x128xf32> to vector<2x128xf32>
    %295 = vector.shape_cast %292 : vector<2x128xf32> to vector<1x2x128xf32>
    tpu.vector_store %arg5[%c7_115, %c0_116, %c0_117], %295 {strides = array<i32>} : memref<8x2x128xf32, #tpu.memory_space<vmem>>, vector<1x2x128xf32>,
    %c0_118 = arith.constant 0 : index
    %c0_119 = arith.constant 0 : index
    %296 = vector.load %arg6[%c0_118, %c0_119] : memref<2x128xf32, #tpu.memory_space<vmem>>, vector<2x128xf32>
    tpu.vector_store %arg6[%c0_118, %c0_119], %292 {strides = array<i32>} : memref<2x128xf32, #tpu.memory_space<vmem>>, vector<2x128xf32>,
    %c0_120 = arith.constant 0 : index
    %c0_121 = arith.constant 0 : index
    %297 = vector.load %arg7[%c0_120, %c0_121] : memref<2x128xf32, #tpu.memory_space<vmem>>, vector<2x128xf32>
    tpu.vector_store %arg7[%c0_120, %c0_121], %290 {strides = array<i32>} : memref<2x128xf32, #tpu.memory_space<vmem>>, vector<2x128xf32>,
    return
  }
  func.func @transform_0(%arg0: i32) -> (i32, i32, i32) {
    %c0_i32 = arith.constant 0 : i32
    %c0_i32_0 = arith.constant 0 : i32
    %c0_i32_1 = arith.constant 0 : i32
    return %arg0, %c0_i32, %c0_i32_0 : i32, i32, i32
  }
  func.func @transform_1(%arg0: i32) -> (i32, i32) {
    %c0_i32 = arith.constant 0 : i32
    %c0_i32_0 = arith.constant 0 : i32
    %c0_i32_1 = arith.constant 0 : i32
    return %c0_i32, %c0_i32_0 : i32, i32
  }
  func.func @transform_2(%arg0: i32) -> (i32, i32) {
    %c0_i32 = arith.constant 0 : i32
    %c0_i32_0 = arith.constant 0 : i32
    %c0_i32_1 = arith.constant 0 : i32
    return %c0_i32, %c0_i32_0 : i32, i32
  }
  func.func @transform_3(%arg0: i32) -> (i32, i32) {
    %c0_i32 = arith.constant 0 : i32
    %c0_i32_0 = arith.constant 0 : i32
    %c0_i32_1 = arith.constant 0 : i32
    return %c0_i32, %c0_i32_0 : i32, i32
  }
  func.func @transform_4(%arg0: i32) -> (i32, i32, i32) {
    %c0_i32 = arith.constant 0 : i32
    %c0_i32_0 = arith.constant 0 : i32
    %c0_i32_1 = arith.constant 0 : i32
    return %arg0, %c0_i32, %c0_i32_0 : i32, i32, i32
  }
  func.func @transform_5(%arg0: i32) -> (i32, i32) {
    %c0_i32 = arith.constant 0 : i32
    %c0_i32_0 = arith.constant 0 : i32
    %c0_i32_1 = arith.constant 0 : i32
    return %c0_i32, %c0_i32_0 : i32, i32
  }
  func.func @transform_6(%arg0: i32) -> (i32, i32) {
    %c0_i32 = arith.constant 0 : i32
    %c0_i32_0 = arith.constant 0 : i32
    %c0_i32_1 = arith.constant 0 : i32
    return %c0_i32, %c0_i32_0 : i32, i32
  }
}

</mosaic_0001>

<llo_original>
// kernel: tpu_custom_call.1
$region0: #{tpu_custom_call.1}
  #allocation0 [shape = 'u32[]', space=smem, size = 0x4, offset = 0x4, fixed_abs, tag = 'smem constant byte address 0x4 - core index']
  #allocation1 [shape = 'u32[144,128]{1,0:T(1,128)}', space=vmem, size = 0x12000, scoped, tag = 'internal scratch']
  %s0 = inlined_call_operand.hbm [shape: f32[8,2,128], index: 0, kind: input, shape index: {}]
  %s1 = inlined_call_operand.hbm [shape: f32[128,512], index: 1, kind: input, shape index: {}]
  %s2 = inlined_call_operand.hbm [shape: f32[128,512], index: 2, kind: input, shape index: {}]
  %s3 = inlined_call_operand.vmem [shape: f32[1,512], index: 3, kind: input, shape index: {}]
  %s4 = inlined_call_operand.hbm [shape: f32[8,2,128], index: 4, kind: output, shape index: {0}]
  %s5 = inlined_call_operand.hbm [shape: f32[2,128], index: 5, kind: output, shape index: {1}]
  %s6 = inlined_call_operand.hbm [shape: f32[2,128], index: 6, kind: output, shape index: {2}]
  %7 = xla_tuple %s4, %s5, %s6
  %s8 = sld [smem:[#allocation0]]
  $region58: #{tpu_custom_call.1} parent=0
    _
  %s10 = ssub.s32 1, %s8
  %s11 = scalar_select 0, %s10, %s8
  $region1: #{tpu_custom_call.1} parent=0
    #allocation2 [shape = 'u8[8192]{0}', space=vmem, size = 0x2000, scoped, tag = 'input window, operand 0, single buffered']
    #allocation3 [shape = 's32[1]{0}', space=sflag, size = 0x4, scoped, tag = 'scoped memory for tpu_custom_call.1']
    #allocation4 [shape = 's32[1]{0}', space=sflag, size = 0x4, scoped, tag = 'scoped memory for tpu_custom_call.1']
    #allocation5 [shape = 'u8[262144]{0}', space=vmem, size = 0x40000, scoped, tag = 'input window, operand 1, single buffered']
    #allocation6 [shape = 's32[1]{0}', space=sflag, size = 0x4, scoped, tag = 'scoped memory for tpu_custom_call.1']
    #allocation7 [shape = 'u8[262144]{0}', space=vmem, size = 0x40000, scoped, tag = 'input window, operand 2, single buffered']
    #allocation8 [shape = 'u8[8192]{0}', space=vmem, size = 0x2000, scoped, tag = 'output window, operand 0, single buffered']
    #allocation9 [shape = 'u8[1024]{0}', space=vmem, size = 0x400, scoped, tag = 'output window, operand 1, single buffered']
    #allocation10 [shape = 's32[1]{0}', space=sflag, size = 0x4, scoped, tag = 'scoped memory for tpu_custom_call.1']
    #allocation11 [shape = 'u8[1024]{0}', space=vmem, size = 0x400, scoped, tag = 'output window, operand 2, single buffered']
    %12 = vsyncpa [#allocation3], 0
    %13 = vsyncpa [#allocation6], 0
    %14 = vsyncpa [#allocation4], 0
    %15 = vsyncpa [#allocation10], 0
    // Predicated region
    $region2: #{tpu_custom_call.1} parent=1 // pred_check
      _
    $region3: #{tpu_custom_call.1} parent=1 // pred_check_branch
      %17 = sbr.rel (0) target = $region5
    $region4: #{tpu_custom_call.1} parent=1 // pred_region
      %s19 = ssub.s32 256, 256
      %20 = vsyncadd [#allocation3], %s19
      %s21 = sshll.u32 [#allocation2], 4
      %s22 = int_to_ptr.vmem [resolvable:$true] %s21
      %27 = dma.hbm_to_vmem [thread:$0]  %s0, 256, %s22, [#allocation3], 32, 32, 2
    $region5: #{tpu_custom_call.1} parent=1 // pred_fallthru
      _
    // Predicated region
    $region6: #{tpu_custom_call.1} parent=1 // pred_check
      _
    $region7: #{tpu_custom_call.1} parent=1 // pred_check_branch
      %29 = sbr.rel (0) target = $region9
    $region8: #{tpu_custom_call.1} parent=1 // pred_region
      %s31 = ssub.s32 8192, 8192
      %32 = vsyncadd [#allocation6], %s31
      %s33 = sshll.u32 [#allocation5], 4
      %s34 = int_to_ptr.vmem [resolvable:$true] %s33
      %39 = dma.hbm_to_vmem [thread:$0]  %s1, 8192, %s34, [#allocation6], 512, 512, 32
    $region9: #{tpu_custom_call.1} parent=1 // pred_fallthru
      _
    // Predicated region
    $region10: #{tpu_custom_call.1} parent=1 // pred_check
      _
    $region11: #{tpu_custom_call.1} parent=1 // pred_check_branch
      %41 = sbr.rel (0) target = $region13
    $region12: #{tpu_custom_call.1} parent=1 // pred_region
      %s43 = ssub.s32 8192, 8192
      %44 = vsyncadd [#allocation6], %s43
      %s45 = sshll.u32 [#allocation7], 4
      %s46 = int_to_ptr.vmem [resolvable:$true] %s45
      %51 = dma.hbm_to_vmem [thread:$0]  %s2, 8192, %s46, [#allocation6], 512, 512, 32
    $region13: #{tpu_custom_call.1} parent=1 // pred_fallthru
      _
    // Predicated region
    $region14: #{tpu_custom_call.1} parent=1 // pred_check
      _
    $region15: #{tpu_custom_call.1} parent=1 // pred_check_branch
      %53 = sbr.rel (0) target = $region17
    $region16: #{tpu_custom_call.1} parent=1 // pred_region
      _
    $region17: #{tpu_custom_call.1} parent=1 // pred_fallthru
      _
    // Predicated region
    $region18: #{tpu_custom_call.1} parent=1 // pred_check
      _
    $region19: #{tpu_custom_call.1} parent=1 // pred_check_branch
      %55 = sbr.rel (0) target = $region21
    $region20: #{tpu_custom_call.1} parent=1 // pred_region
      %56 = dma.done [#allocation3], 256
    $region21: #{tpu_custom_call.1} parent=1 // pred_fallthru
      _
    // Predicated region
    $region22: #{tpu_custom_call.1} parent=1 // pred_check
      _
    $region23: #{tpu_custom_call.1} parent=1 // pred_check_branch
      %58 = sbr.rel (0) target = $region25
    $region24: #{tpu_custom_call.1} parent=1 // pred_region
      %59 = dma.done [#allocation6], 8192
    $region25: #{tpu_custom_call.1} parent=1 // pred_fallthru
      _
    // Predicated region
    $region26: #{tpu_custom_call.1} parent=1 // pred_check
      _
    $region27: #{tpu_custom_call.1} parent=1 // pred_check_branch
      %61 = sbr.rel (0) target = $region29
    $region28: #{tpu_custom_call.1} parent=1 // pred_region
      %62 = dma.done [#allocation6], 8192
    $region29: #{tpu_custom_call.1} parent=1 // pred_fallthru
      _
    %p63 = scmp.eq.s32.totalorder 0, 0
    // Predicated region
    $region30: #{tpu_custom_call.1} parent=1 // pred_check
      %p64 = pneg %p63
    $region31: #{tpu_custom_call.1} parent=1 // pred_check_branch
      %66 = sbr.rel (%p64) target = $region33
    $region32: #{tpu_custom_call.1} parent=1 // pred_region
      %67 = vst [vmem:[#allocation9] sm:$0x3] 0.0
      %68 = vst [vmem:[#allocation11] sm:$0x3] 0.0
    $region33: #{tpu_custom_call.1} parent=1 // pred_fallthru
      _
    %v69 = vld [vmem:[%s3] sm:$0xf]
    %v71 = vlaneseq
    %v72 = vshrl.u32 %v71, 7
    %v73 = vsub.s32 0, %v72
    %v74 = vrot.slane %v69, %v73
    %v75 = vlaneseq
    %v76 = vshrl.u32 %v75, 7
    %v77 = vsub.s32 1, %v76
    %v78 = vrot.slane %v69, %v77
    %v79 = vlaneseq
    %v80 = vshrl.u32 %v79, 7
    %v81 = vsub.s32 2, %v80
    %v82 = vrot.slane %v69, %v81
    %v83 = vlaneseq
    %v84 = vshrl.u32 %v83, 7
    %v85 = vsub.s32 3, %v84
    %v86 = vrot.slane %v69, %v85
    %v91 = vld [vmem:[#allocation9] sm:$0x3]
    %v92 = vld [vmem:[#allocation11] sm:$0x3]
    %v93 = vld [vmem:[#allocation2] sm:$0x3]
    %v94 = vld [vmem:[#allocation5] sm:$0xff]
    %v95 = vld [vmem:[#allocation5 + $0x8] sm:$0xff]
    %v96 = vld [vmem:[#allocation5 + $0x10] sm:$0xff]
    %v97 = vld [vmem:[#allocation5 + $0x18] sm:$0xff]
    %v98 = vld [vmem:[#allocation5 + $0x20] sm:$0xff]
    %v99 = vld [vmem:[#allocation5 + $0x28] sm:$0xff]
    %v100 = vld [vmem:[#allocation5 + $0x30] sm:$0xff]
    %v101 = vld [vmem:[#allocation5 + $0x38] sm:$0xff]
    %v102 = vld [vmem:[#allocation5 + $0x40] sm:$0xff]
    %v103 = vld [vmem:[#allocation5 + $0x48] sm:$0xff]
    %v104 = vld [vmem:[#allocation5 + $0x50] sm:$0xff]
    %v105 = vld [vmem:[#allocation5 + $0x58] sm:$0xff]
    %v106 = vld [vmem:[#allocation5 + $0x60] sm:$0xff]
    %v107 = vld [vmem:[#allocation5 + $0x68] sm:$0xff]
    %v108 = vld [vmem:[#allocation5 + $0x70] sm:$0xff]
    %v109 = vld [vmem:[#allocation5 + $0x78] sm:$0xff]
    %v110 = vld [vmem:[#allocation5 + $0x80] sm:$0xff]
    %v111 = vld [vmem:[#allocation5 + $0x88] sm:$0xff]
    %v112 = vld [vmem:[#allocation5 + $0x90] sm:$0xff]
    %v113 = vld [vmem:[#allocation5 + $0x98] sm:$0xff]
    %v114 = vld [vmem:[#allocation5 + $0xa0] sm:$0xff]
    %v115 = vld [vmem:[#allocation5 + $0xa8] sm:$0xff]
    %v116 = vld [vmem:[#allocation5 + $0xb0] sm:$0xff]
    %v117 = vld [vmem:[#allocation5 + $0xb8] sm:$0xff]
    %v118 = vld [vmem:[#allocation5 + $0xc0] sm:$0xff]
    %v119 = vld [vmem:[#allocation5 + $0xc8] sm:$0xff]
    %v120 = vld [vmem:[#allocation5 + $0xd0] sm:$0xff]
    %v121 = vld [vmem:[#allocation5 + $0xd8] sm:$0xff]
    %v122 = vld [vmem:[#allocation5 + $0xe0] sm:$0xff]
    %v123 = vld [vmem:[#allocation5 + $0xe8] sm:$0xff]
    %v124 = vld [vmem:[#allocation5 + $0xf0] sm:$0xff]
    %v125 = vld [vmem:[#allocation5 + $0xf8] sm:$0xff]
    %v126 = vld [vmem:[#allocation5 + $0x100] sm:$0xff]
    %v127 = vld [vmem:[#allocation5 + $0x108] sm:$0xff]
    %v128 = vld [vmem:[#allocation5 + $0x110] sm:$0xff]
    %v129 = vld [vmem:[#allocation5 + $0x118] sm:$0xff]
    %v130 = vld [vmem:[#allocation5 + $0x120] sm:$0xff]
    %v131 = vld [vmem:[#allocation5 + $0x128] sm:$0xff]
    %v132 = vld [vmem:[#allocation5 + $0x130] sm:$0xff]
    %v133 = vld [vmem:[#allocation5 + $0x138] sm:$0xff]
    %v134 = vld [vmem:[#allocation5 + $0x140] sm:$0xff]
    %v135 = vld [vmem:[#allocation5 + $0x148] sm:$0xff]
    %v136 = vld [vmem:[#allocation5 + $0x150] sm:$0xff]
    %v137 = vld [vmem:[#allocation5 + $0x158] sm:$0xff]
    %v138 = vld [vmem:[#allocation5 + $0x160] sm:$0xff]
    %v139 = vld [vmem:[#allocation5 + $0x168] sm:$0xff]
    %v140 = vld [vmem:[#allocation5 + $0x170] sm:$0xff]
    %v141 = vld [vmem:[#allocation5 + $0x178] sm:$0xff]
    %v142 = vld [vmem:[#allocation5 + $0x180] sm:$0xff]
    %v143 = vld [vmem:[#allocation5 + $0x188] sm:$0xff]
    %v144 = vld [vmem:[#allocation5 + $0x190] sm:$0xff]
    %v145 = vld [vmem:[#allocation5 + $0x198] sm:$0xff]
    %v146 = vld [vmem:[#allocation5 + $0x1a0] sm:$0xff]
    %v147 = vld [vmem:[#allocation5 + $0x1a8] sm:$0xff]
    %v148 = vld [vmem:[#allocation5 + $0x1b0] sm:$0xff]
    %v149 = vld [vmem:[#allocation5 + $0x1b8] sm:$0xff]
    %v150 = vld [vmem:[#allocation5 + $0x1c0] sm:$0xff]
    %v151 = vld [vmem:[#allocation5 + $0x1c8] sm:$0xff]
    %v152 = vld [vmem:[#allocation5 + $0x1d0] sm:$0xff]
    %v153 = vld [vmem:[#allocation5 + $0x1d8] sm:$0xff]
    %v154 = vld [vmem:[#allocation5 + $0x1e0] sm:$0xff]
    %v155 = vld [vmem:[#allocation5 + $0x1e8] sm:$0xff]
    %v156 = vld [vmem:[#allocation5 + $0x1f0] sm:$0xff]
    %v157 = vld [vmem:[#allocation5 + $0x1f8] sm:$0xff]
    %v158 = vld [vmem:[#allocation7] sm:$0xff]
    %v159 = vld [vmem:[#allocation7 + $0x8] sm:$0xff]
    %v160 = vld [vmem:[#allocation7 + $0x10] sm:$0xff]
    %v161 = vld [vmem:[#allocation7 + $0x18] sm:$0xff]
    %v162 = vld [vmem:[#allocation7 + $0x20] sm:$0xff]
    %v163 = vld [vmem:[#allocation7 + $0x28] sm:$0xff]
    %v164 = vld [vmem:[#allocation7 + $0x30] sm:$0xff]
    %v165 = vld [vmem:[#allocation7 + $0x38] sm:$0xff]
    %v166 = vld [vmem:[#allocation7 + $0x40] sm:$0xff]
    %v167 = vld [vmem:[#allocation7 + $0x48] sm:$0xff]
    %v168 = vld [vmem:[#allocation7 + $0x50] sm:$0xff]
    %v169 = vld [vmem:[#allocation7 + $0x58] sm:$0xff]
    %v170 = vld [vmem:[#allocation7 + $0x60] sm:$0xff]
    %v171 = vld [vmem:[#allocation7 + $0x68] sm:$0xff]
    %v172 = vld [vmem:[#allocation7 + $0x70] sm:$0xff]
    %v173 = vld [vmem:[#allocation7 + $0x78] sm:$0xff]
    %v174 = vld [vmem:[#allocation7 + $0x80] sm:$0xff]
    %v175 = vld [vmem:[#allocation7 + $0x88] sm:$0xff]
    %v176 = vld [vmem:[#allocation7 + $0x90] sm:$0xff]
    %v177 = vld [vmem:[#allocation7 + $0x98] sm:$0xff]
    %v178 = vld [vmem:[#allocation7 + $0xa0] sm:$0xff]
    %v179 = vld [vmem:[#allocation7 + $0xa8] sm:$0xff]
    %v180 = vld [vmem:[#allocation7 + $0xb0] sm:$0xff]
    %v181 = vld [vmem:[#allocation7 + $0xb8] sm:$0xff]
    %v182 = vld [vmem:[#allocation7 + $0xc0] sm:$0xff]
    %v183 = vld [vmem:[#allocation7 + $0xc8] sm:$0xff]
    %v184 = vld [vmem:[#allocation7 + $0xd0] sm:$0xff]
    %v185 = vld [vmem:[#allocation7 + $0xd8] sm:$0xff]
    %v186 = vld [vmem:[#allocation7 + $0xe0] sm:$0xff]
    %v187 = vld [vmem:[#allocation7 + $0xe8] sm:$0xff]
    %v188 = vld [vmem:[#allocation7 + $0xf0] sm:$0xff]
    %v189 = vld [vmem:[#allocation7 + $0xf8] sm:$0xff]
    %v190 = vld [vmem:[#allocation7 + $0x100] sm:$0xff]
    %v191 = vld [vmem:[#allocation7 + $0x108] sm:$0xff]
    %v192 = vld [vmem:[#allocation7 + $0x110] sm:$0xff]
    %v193 = vld [vmem:[#allocation7 + $0x118] sm:$0xff]
    %v194 = vld [vmem:[#allocation7 + $0x120] sm:$0xff]
    %v195 = vld [vmem:[#allocation7 + $0x128] sm:$0xff]
    %v196 = vld [vmem:[#allocation7 + $0x130] sm:$0xff]
    %v197 = vld [vmem:[#allocation7 + $0x138] sm:$0xff]
    %v198 = vld [vmem:[#allocation7 + $0x140] sm:$0xff]
    %v199 = vld [vmem:[#allocation7 + $0x148] sm:$0xff]
    %v200 = vld [vmem:[#allocation7 + $0x150] sm:$0xff]
    %v201 = vld [vmem:[#allocation7 + $0x158] sm:$0xff]
    %v202 = vld [vmem:[#allocation7 + $0x160] sm:$0xff]
    %v203 = vld [vmem:[#allocation7 + $0x168] sm:$0xff]
    %v204 = vld [vmem:[#allocation7 + $0x170] sm:$0xff]
    %v205 = vld [vmem:[#allocation7 + $0x178] sm:$0xff]
    %v206 = vld [vmem:[#allocation7 + $0x180] sm:$0xff]
    %v207 = vld [vmem:[#allocation7 + $0x188] sm:$0xff]
    %v208 = vld [vmem:[#allocation7 + $0x190] sm:$0xff]
    %v209 = vld [vmem:[#allocation7 + $0x198] sm:$0xff]
    %v210 = vld [vmem:[#allocation7 + $0x1a0] sm:$0xff]
    %v211 = vld [vmem:[#allocation7 + $0x1a8] sm:$0xff]
    %v212 = vld [vmem:[#allocation7 + $0x1b0] sm:$0xff]
    %v213 = vld [vmem:[#allocation7 + $0x1b8] sm:$0xff]
    %v214 = vld [vmem:[#allocation7 + $0x1c0] sm:$0xff]
    %v215 = vld [vmem:[#allocation7 + $0x1c8] sm:$0xff]
    %v216 = vld [vmem:[#allocation7 + $0x1d0] sm:$0xff]
    %v217 = vld [vmem:[#allocation7 + $0x1d8] sm:$0xff]
    %v218 = vld [vmem:[#allocation7 + $0x1e0] sm:$0xff]
    %v219 = vld [vmem:[#allocation7 + $0x1e8] sm:$0xff]
    %v220 = vld [vmem:[#allocation7 + $0x1f0] sm:$0xff]
    %v221 = vld [vmem:[#allocation7 + $0x1f8] sm:$0xff]
    %222 = vmatprep.subr.mxu0 %v219
    %223 = vmatpush1.msra.mxu0 %v218
    %224 = vmatprep.subr.mxu0 %v215
    %225 = vmatpush1.msra.mxu0 %v214
    %226 = vmatprep.subr.mxu0 %v211
    %227 = vmatpush1.msra.mxu0 %v210
    %228 = vmatprep.subr.mxu0 %v207
    %229 = vmatpush1.msra.mxu0 %v206
    %230 = vmatprep.subr.mxu0 %v203
    %231 = vmatpush1.msra.mxu0 %v202
    %232 = vmatprep.subr.mxu0 %v199
    %233 = vmatpush1.msra.mxu0 %v198
    %234 = vmatprep.subr.mxu0 %v195
    %235 = vmatpush1.msra.mxu0 %v194
    %236 = vmatprep.subr.mxu0 %v191
    %237 = vmatpush1.msra.mxu0 %v190
    %238 = vmatprep.subr.mxu0 %v187
    %239 = vmatpush1.msra.mxu0 %v186
    %240 = vmatprep.subr.mxu0 %v183
    %241 = vmatpush1.msra.mxu0 %v182
    %242 = vmatprep.subr.mxu0 %v179
    %243 = vmatpush1.msra.mxu0 %v178
    %244 = vmatprep.subr.mxu0 %v175
    %245 = vmatpush1.msra.mxu0 %v174
    %246 = vmatprep.subr.mxu0 %v171
    %247 = vmatpush1.msra.mxu0 %v170
    %248 = vmatprep.subr.mxu0 %v167
    %249 = vmatpush1.msra.mxu0 %v166
    %250 = vmatprep.subr.mxu0 %v163
    %251 = vmatpush1.msra.mxu0 %v162
    %252 = vmatprep.subr.mxu0 %v159
    %253 = vmatpush1.msra.mxu0 %v158
    %254 = vmatprep.subr.mxu0 0.0
    %255 = vmatpush2.msra.mxu0 0.0
    %256 = vmatprep.subr.mxu0 0.0
    %257 = vmatpush2.msra.mxu0 0.0
    %258 = vmatprep.subr.mxu0 0.0
    %259 = vmatpush2.msra.mxu0 0.0
    %260 = vmatprep.subr.mxu0 0.0
    %261 = vmatpush2.msra.mxu0 0.0
    %262 = vmatprep.subr.mxu0 0.0
    %263 = vmatpush2.msra.mxu0 0.0
    %264 = vmatprep.subr.mxu0 0.0
    %265 = vmatpush2.msra.mxu0 0.0
    %266 = vmatprep.subr.mxu0 0.0
    %267 = vmatpush2.msra.mxu0 0.0
    %268 = vmatprep.subr.mxu0 0.0
    %269 = vmatpush2.msra.mxu0 0.0
    %270 = vmatprep.subr.mxu0 0.0
    %271 = vmatpush2.msra.mxu0 0.0
    %272 = vmatprep.subr.mxu0 0.0
    %273 = vmatpush2.msra.mxu0 0.0
    %274 = vmatprep.subr.mxu0 0.0
    %275 = vmatpush2.msra.mxu0 0.0
    %276 = vmatprep.subr.mxu0 0.0
    %277 = vmatpush2.msra.mxu0 0.0
    %278 = vmatprep.subr.mxu0 0.0
    %279 = vmatpush2.msra.mxu0 0.0
    %280 = vmatprep.subr.mxu0 0.0
    %281 = vmatpush2.msra.mxu0 0.0
    %282 = vmatprep.subr.mxu0 0.0
    %283 = vmatpush2.msra.mxu0 0.0
    %284 = vmatprep.subr.mxu0 0.0
    %285 = vmatpush2.msra.mxu0 0.0
    %286 = vmatprep.mubr.f32.mxu0 0.0
    %287 = vmatmul.mubr.f32.gmra.mxu0 %v91
    %v288 = vpop.f32.mrf.mxu0
    %v289 = vadd.f32 0.0, %v288
    %v290 = vpop.f32.mrf.mxu0
    %v291 = vadd.f32 0.0, %v290
    %292 = vdwg.mxu0
    %293 = vmatprep.subr.mxu0 %v221
    %294 = vmatpush1.msra.mxu0 %v220
    %295 = vmatprep.subr.mxu0 %v217
    %296 = vmatpush1.msra.mxu0 %v216
    %297 = vmatprep.subr.mxu0 %v213
    %298 = vmatpush1.msra.mxu0 %v212
    %299 = vmatprep.subr.mxu0 %v209
    %300 = vmatpush1.msra.mxu0 %v208
    %301 = vmatprep.subr.mxu0 %v205
    %302 = vmatpush1.msra.mxu0 %v204
    %303 = vmatprep.subr.mxu0 %v201
    %304 = vmatpush1.msra.mxu0 %v200
    %305 = vmatprep.subr.mxu0 %v197
    %306 = vmatpush1.msra.mxu0 %v196
    %307 = vmatprep.subr.mxu0 %v193
    %308 = vmatpush1.msra.mxu0 %v192
    %309 = vmatprep.subr.mxu0 %v189
    %310 = vmatpush1.msra.mxu0 %v188
    %311 = vmatprep.subr.mxu0 %v185
    %312 = vmatpush1.msra.mxu0 %v184
    %313 = vmatprep.subr.mxu0 %v181
    %314 = vmatpush1.msra.mxu0 %v180
    %315 = vmatprep.subr.mxu0 %v177
    %316 = vmatpush1.msra.mxu0 %v176
    %317 = vmatprep.subr.mxu0 %v173
    %318 = vmatpush1.msra.mxu0 %v172
    %319 = vmatprep.subr.mxu0 %v169
    %320 = vmatpush1.msra.mxu0 %v168
    %321 = vmatprep.subr.mxu0 %v165
    %322 = vmatpush1.msra.mxu0 %v164
    %323 = vmatprep.subr.mxu0 %v161
    %324 = vmatpush1.msra.mxu0 %v160
    %325 = vmatprep.subr.mxu0 0.0
    %326 = vmatpush2.msra.mxu0 0.0
    %327 = vmatprep.subr.mxu0 0.0
    %328 = vmatpush2.msra.mxu0 0.0
    %329 = vmatprep.subr.mxu0 0.0
    %330 = vmatpush2.msra.mxu0 0.0
    %331 = vmatprep.subr.mxu0 0.0
    %332 = vmatpush2.msra.mxu0 0.0
    %333 = vmatprep.subr.mxu0 0.0
    %334 = vmatpush2.msra.mxu0 0.0
    %335 = vmatprep.subr.mxu0 0.0
    %336 = vmatpush2.msra.mxu0 0.0
    %337 = vmatprep.subr.mxu0 0.0
    %338 = vmatpush2.msra.mxu0 0.0
    %339 = vmatprep.subr.mxu0 0.0
    %340 = vmatpush2.msra.mxu0 0.0
    %341 = vmatprep.subr.mxu0 0.0
    %342 = vmatpush2.msra.mxu0 0.0
    %343 = vmatprep.subr.mxu0 0.0
    %344 = vmatpush2.msra.mxu0 0.0
    %345 = vmatprep.subr.mxu0 0.0
    %346 = vmatpush2.msra.mxu0 0.0
    %347 = vmatprep.subr.mxu0 0.0
    %348 = vmatpush2.msra.mxu0 0.0
    %349 = vmatprep.subr.mxu0 0.0
    %350 = vmatpush2.msra.mxu0 0.0
    %351 = vmatprep.subr.mxu0 0.0
    %352 = vmatpush2.msra.mxu0 0.0
    %353 = vmatprep.subr.mxu0 0.0
    %354 = vmatpush2.msra.mxu0 0.0
    %355 = vmatprep.subr.mxu0 0.0
    %356 = vmatpush2.msra.mxu0 0.0
    %357 = vmatprep.mubr.f32.mxu0 0.0
    %358 = vmatmul.mubr.f32.gmra.mxu0 %v91
    %v359 = vpop.f32.mrf.mxu0
    %v360 = vadd.f32 0.0, %v359
    %v361 = vpop.f32.mrf.mxu0
    %v362 = vadd.f32 0.0, %v361
    %363 = vdwg.mxu0
    %364 = vmatprep.subr.mxu0 %v155
    %365 = vmatpush1.msra.mxu0 %v154
    %366 = vmatprep.subr.mxu0 %v151
    %367 = vmatpush1.msra.mxu0 %v150
    %368 = vmatprep.subr.mxu0 %v147
    %369 = vmatpush1.msra.mxu0 %v146
    %370 = vmatprep.subr.mxu0 %v143
    %371 = vmatpush1.msra.mxu0 %v142
    %372 = vmatprep.subr.mxu0 %v139
    %373 = vmatpush1.msra.mxu0 %v138
    %374 = vmatprep.subr.mxu0 %v135
    %375 = vmatpush1.msra.mxu0 %v134
    %376 = vmatprep.subr.mxu0 %v131
    %377 = vmatpush1.msra.mxu0 %v130
    %378 = vmatprep.subr.mxu0 %v127
    %379 = vmatpush1.msra.mxu0 %v126
    %380 = vmatprep.subr.mxu0 %v123
    %381 = vmatpush1.msra.mxu0 %v122
    %382 = vmatprep.subr.mxu0 %v119
    %383 = vmatpush1.msra.mxu0 %v118
    %384 = vmatprep.subr.mxu0 %v115
    %385 = vmatpush1.msra.mxu0 %v114
    %386 = vmatprep.subr.mxu0 %v111
    %387 = vmatpush1.msra.mxu0 %v110
    %388 = vmatprep.subr.mxu0 %v107
    %389 = vmatpush1.msra.mxu0 %v106
    %390 = vmatprep.subr.mxu0 %v103
    %391 = vmatpush1.msra.mxu0 %v102
    %392 = vmatprep.subr.mxu0 %v99
    %393 = vmatpush1.msra.mxu0 %v98
    %394 = vmatprep.subr.mxu0 %v95
    %395 = vmatpush1.msra.mxu0 %v94
    %396 = vmatprep.subr.mxu0 0.0
    %397 = vmatpush2.msra.mxu0 0.0
    %398 = vmatprep.subr.mxu0 0.0
    %399 = vmatpush2.msra.mxu0 0.0
    %400 = vmatprep.subr.mxu0 0.0
    %401 = vmatpush2.msra.mxu0 0.0
    %402 = vmatprep.subr.mxu0 0.0
    %403 = vmatpush2.msra.mxu0 0.0
    %404 = vmatprep.subr.mxu0 0.0
    %405 = vmatpush2.msra.mxu0 0.0
    %406 = vmatprep.subr.mxu0 0.0
    %407 = vmatpush2.msra.mxu0 0.0
    %408 = vmatprep.subr.mxu0 0.0
    %409 = vmatpush2.msra.mxu0 0.0
    %410 = vmatprep.subr.mxu0 0.0
    %411 = vmatpush2.msra.mxu0 0.0
    %412 = vmatprep.subr.mxu0 0.0
    %413 = vmatpush2.msra.mxu0 0.0
    %414 = vmatprep.subr.mxu0 0.0
    %415 = vmatpush2.msra.mxu0 0.0
    %416 = vmatprep.subr.mxu0 0.0
    %417 = vmatpush2.msra.mxu0 0.0
    %418 = vmatprep.subr.mxu0 0.0
    %419 = vmatpush2.msra.mxu0 0.0
    %420 = vmatprep.subr.mxu0 0.0
    %421 = vmatpush2.msra.mxu0 0.0
    %422 = vmatprep.subr.mxu0 0.0
    %423 = vmatpush2.msra.mxu0 0.0
    %424 = vmatprep.subr.mxu0 0.0
    %425 = vmatpush2.msra.mxu0 0.0
    %426 = vmatprep.subr.mxu0 0.0
    %427 = vmatpush2.msra.mxu0 0.0
    %428 = vmatprep.mubr.f32.mxu0 0.0
    %429 = vmatmul.mubr.f32.gmra.mxu0 %v93
    %v430 = vpop.f32.mrf.mxu0
    %v431 = vadd.f32 %v289, %v430
    %v432 = vpop.f32.mrf.mxu0
    %v433 = vadd.f32 %v291, %v432
    %434 = vdwg.mxu0
    %435 = vmatprep.subr.mxu0 %v157
    %436 = vmatpush1.msra.mxu0 %v156
    %437 = vmatprep.subr.mxu0 %v153
    %438 = vmatpush1.msra.mxu0 %v152
    %439 = vmatprep.subr.mxu0 %v149
    %440 = vmatpush1.msra.mxu0 %v148
    %441 = vmatprep.subr.mxu0 %v145
    %442 = vmatpush1.msra.mxu0 %v144
    %443 = vmatprep.subr.mxu0 %v141
    %444 = vmatpush1.msra.mxu0 %v140
    %445 = vmatprep.subr.mxu0 %v137
    %446 = vmatpush1.msra.mxu0 %v136
    %447 = vmatprep.subr.mxu0 %v133
    %448 = vmatpush1.msra.mxu0 %v132
    %449 = vmatprep.subr.mxu0 %v129
    %450 = vmatpush1.msra.mxu0 %v128
    %451 = vmatprep.subr.mxu0 %v125
    %452 = vmatpush1.msra.mxu0 %v124
    %453 = vmatprep.subr.mxu0 %v121
    %454 = vmatpush1.msra.mxu0 %v120
    %455 = vmatprep.subr.mxu0 %v117
    %456 = vmatpush1.msra.mxu0 %v116
    %457 = vmatprep.subr.mxu0 %v113
    %458 = vmatpush1.msra.mxu0 %v112
    %459 = vmatprep.subr.mxu0 %v109
    %460 = vmatpush1.msra.mxu0 %v108
    %461 = vmatprep.subr.mxu0 %v105
    %462 = vmatpush1.msra.mxu0 %v104
    %463 = vmatprep.subr.mxu0 %v101
    %464 = vmatpush1.msra.mxu0 %v100
    %465 = vmatprep.subr.mxu0 %v97
    %466 = vmatpush1.msra.mxu0 %v96
    %467 = vmatprep.subr.mxu0 0.0
    %468 = vmatpush2.msra.mxu0 0.0
    %469 = vmatprep.subr.mxu0 0.0
    %470 = vmatpush2.msra.mxu0 0.0
    %471 = vmatprep.subr.mxu0 0.0
    %472 = vmatpush2.msra.mxu0 0.0
    %473 = vmatprep.subr.mxu0 0.0
    %474 = vmatpush2.msra.mxu0 0.0
    %475 = vmatprep.subr.mxu0 0.0
    %476 = vmatpush2.msra.mxu0 0.0
    %477 = vmatprep.subr.mxu0 0.0
    %478 = vmatpush2.msra.mxu0 0.0
    %479 = vmatprep.subr.mxu0 0.0
    %480 = vmatpush2.msra.mxu0 0.0
    %481 = vmatprep.subr.mxu0 0.0
    %482 = vmatpush2.msra.mxu0 0.0
    %483 = vmatprep.subr.mxu0 0.0
    %484 = vmatpush2.msra.mxu0 0.0
    %485 = vmatprep.subr.mxu0 0.0
    %486 = vmatpush2.msra.mxu0 0.0
    %487 = vmatprep.subr.mxu0 0.0
    %488 = vmatpush2.msra.mxu0 0.0
    %489 = vmatprep.subr.mxu0 0.0
    %490 = vmatpush2.msra.mxu0 0.0
    %491 = vmatprep.subr.mxu0 0.0
    %492 = vmatpush2.msra.mxu0 0.0
    %493 = vmatprep.subr.mxu0 0.0
    %494 = vmatpush2.msra.mxu0 0.0
    %495 = vmatprep.subr.mxu0 0.0
    %496 = vmatpush2.msra.mxu0 0.0
    %497 = vmatprep.subr.mxu0 0.0
    %498 = vmatpush2.msra.mxu0 0.0
    %499 = vmatprep.mubr.f32.mxu0 0.0
    %500 = vmatmul.mubr.f32.gmra.mxu0 %v93
    %v501 = vpop.f32.mrf.mxu0
    %v502 = vadd.f32 %v360, %v501
    %v503 = vpop.f32.mrf.mxu0
    %v504 = vadd.f32 %v362, %v503
    %505 = vdwg.mxu0
    %v506 = vadd.f32 %v431, %v74
    %v507 = vadd.f32 %v433, %v78
    %v508 = vadd.f32 %v502, %v82
    %v509 = vadd.f32 %v504, %v86
    %v510 = vxor.u32 %v506, 2147483648
    %v511 = vmul.f32 %v510, 1.442695
    %v512 = vpow.pop %v511
    %v513 = vadd.f32 %v512, 1.0
    %v514 = vrcp.pop %v513
    %v515 = vmul.f32 1.0, %v514
    %v516 = vxor.u32 %v507, 2147483648
    %v517 = vmul.f32 %v516, 1.442695
    %v518 = vpow.pop %v517
    %v519 = vadd.f32 %v518, 1.0
    %v520 = vrcp.pop %v519
    %v521 = vmul.f32 1.0, %v520
    %v522 = vtanh.pop %v508
    %v523 = vxor.u32 %v509, 2147483648
    %v524 = vmul.f32 %v523, 1.442695
    %v525 = vpow.pop %v524
    %v526 = vadd.f32 %v525, 1.0
    %v527 = vrcp.pop %v526
    %v528 = vmul.f32 1.0, %v527
    %v529 = vmul.f32 %v521, %v92
    %v530 = vmul.f32 %v515, %v522
    %v531 = vadd.f32 %v529, %v530
    %v532 = vtanh.pop %v531
    %v533 = vmul.f32 %v528, %v532
    %534 = vst [vmem:[#allocation8] sm:$0x3] %v533
    %s535 = scalar_lea.vmem [#allocation2], 2
    %v536 = vld [vmem:[%s535] sm:$0x3]
    %v537 = vld [vmem:[#allocation5] sm:$0xff]
    %v538 = vld [vmem:[#allocation5 + $0x8] sm:$0xff]
    %v539 = vld [vmem:[#allocation5 + $0x10] sm:$0xff]
    %v540 = vld [vmem:[#allocation5 + $0x18] sm:$0xff]
    %v541 = vld [vmem:[#allocation5 + $0x20] sm:$0xff]
    %v542 = vld [vmem:[#allocation5 + $0x28] sm:$0xff]
    %v543 = vld [vmem:[#allocation5 + $0x30] sm:$0xff]
    %v544 = vld [vmem:[#allocation5 + $0x38] sm:$0xff]
    %v545 = vld [vmem:[#allocation5 + $0x40] sm:$0xff]
    %v546 = vld [vmem:[#allocation5 + $0x48] sm:$0xff]
    %v547 = vld [vmem:[#allocation5 + $0x50] sm:$0xff]
    %v548 = vld [vmem:[#allocation5 + $0x58] sm:$0xff]
    %v549 = vld [vmem:[#allocation5 + $0x60] sm:$0xff]
    %v550 = vld [vmem:[#allocation5 + $0x68] sm:$0xff]
    %v551 = vld [vmem:[#allocation5 + $0x70] sm:$0xff]
    %v552 = vld [vmem:[#allocation5 + $0x78] sm:$0xff]
    %v553 = vld [vmem:[#allocation5 + $0x80] sm:$0xff]
    %v554 = vld [vmem:[#allocation5 + $0x88] sm:$0xff]
    %v555 = vld [vmem:[#allocation5 + $0x90] sm:$0xff]
    %v556 = vld [vmem:[#allocation5 + $0x98] sm:$0xff]
    %v557 = vld [vmem:[#allocation5 + $0xa0] sm:$0xff]
    %v558 = vld [vmem:[#allocation5 + $0xa8] sm:$0xff]
    %v559 = vld [vmem:[#allocation5 + $0xb0] sm:$0xff]
    %v560 = vld [vmem:[#allocation5 + $0xb8] sm:$0xff]
    %v561 = vld [vmem:[#allocation5 + $0xc0] sm:$0xff]
    %v562 = vld [vmem:[#allocation5 + $0xc8] sm:$0xff]
    %v563 = vld [vmem:[#allocation5 + $0xd0] sm:$0xff]
    %v564 = vld [vmem:[#allocation5 + $0xd8] sm:$0xff]
    %v565 = vld [vmem:[#allocation5 + $0xe0] sm:$0xff]
    %v566 = vld [vmem:[#allocation5 + $0xe8] sm:$0xff]
    %v567 = vld [vmem:[#allocation5 + $0xf0] sm:$0xff]
    %v568 = vld [vmem:[#allocation5 + $0xf8] sm:$0xff]
    %v569 = vld [vmem:[#allocation5 + $0x100] sm:$0xff]
    %v570 = vld [vmem:[#allocation5 + $0x108] sm:$0xff]
    %v571 = vld [vmem:[#allocation5 + $0x110] sm:$0xff]
    %v572 = vld [vmem:[#allocation5 + $0x118] sm:$0xff]
    %v573 = vld [vmem:[#allocation5 + $0x120] sm:$0xff]
    %v574 = vld [vmem:[#allocation5 + $0x128] sm:$0xff]
    %v575 = vld [vmem:[#allocation5 + $0x130] sm:$0xff]
    %v576 = vld [vmem:[#allocation5 + $0x138] sm:$0xff]
    %v577 = vld [vmem:[#allocation5 + $0x140] sm:$0xff]
    %v578 = vld [vmem:[#allocation5 + $0x148] sm:$0xff]
    %v579 = vld [vmem:[#allocation5 + $0x150] sm:$0xff]
    %v580 = vld [vmem:[#allocation5 + $0x158] sm:$0xff]
    %v581 = vld [vmem:[#allocation5 + $0x160] sm:$0xff]
    %v582 = vld [vmem:[#allocation5 + $0x168] sm:$0xff]
    %v583 = vld [vmem:[#allocation5 + $0x170] sm:$0xff]
    %v584 = vld [vmem:[#allocation5 + $0x178] sm:$0xff]
    %v585 = vld [vmem:[#allocation5 + $0x180] sm:$0xff]
    %v586 = vld [vmem:[#allocation5 + $0x188] sm:$0xff]
    %v587 = vld [vmem:[#allocation5 + $0x190] sm:$0xff]
    %v588 = vld [vmem:[#allocation5 + $0x198] sm:$0xff]
    %v589 = vld [vmem:[#allocation5 + $0x1a0] sm:$0xff]
    %v590 = vld [vmem:[#allocation5 + $0x1a8] sm:$0xff]
    %v591 = vld [vmem:[#allocation5 + $0x1b0] sm:$0xff]
    %v592 = vld [vmem:[#allocation5 + $0x1b8] sm:$0xff]
    %v593 = vld [vmem:[#allocation5 + $0x1c0] sm:$0xff]
    %v594 = vld [vmem:[#allocation5 + $0x1c8] sm:$0xff]
    %v595 = vld [vmem:[#allocation5 + $0x1d0] sm:$0xff]
    %v596 = vld [vmem:[#allocation5 + $0x1d8] sm:$0xff]
    %v597 = vld [vmem:[#allocation5 + $0x1e0] sm:$0xff]
    %v598 = vld [vmem:[#allocation5 + $0x1e8] sm:$0xff]
    %v599 = vld [vmem:[#allocation5 + $0x1f0] sm:$0xff]
    %v600 = vld [vmem:[#allocation5 + $0x1f8] sm:$0xff]
    %v601 = vld [vmem:[#allocation7] sm:$0xff]
    %v602 = vld [vmem:[#allocation7 + $0x8] sm:$0xff]
    %v603 = vld [vmem:[#allocation7 + $0x10] sm:$0xff]
    %v604 = vld [vmem:[#allocation7 + $0x18] sm:$0xff]
    %v605 = vld [vmem:[#allocation7 + $0x20] sm:$0xff]
    %v606 = vld [vmem:[#allocation7 + $0x28] sm:$0xff]
    %v607 = vld [vmem:[#allocation7 + $0x30] sm:$0xff]
    %v608 = vld [vmem:[#allocation7 + $0x38] sm:$0xff]
    %v609 = vld [vmem:[#allocation7 + $0x40] sm:$0xff]
    %v610 = vld [vmem:[#allocation7 + $0x48] sm:$0xff]
    %v611 = vld [vmem:[#allocation7 + $0x50] sm:$0xff]
    %v612 = vld [vmem:[#allocation7 + $0x58] sm:$0xff]
    %v613 = vld [vmem:[#allocation7 + $0x60] sm:$0xff]
    %v614 = vld [vmem:[#allocation7 + $0x68] sm:$0xff]
    %v615 = vld [vmem:[#allocation7 + $0x70] sm:$0xff]
    %v616 = vld [vmem:[#allocation7 + $0x78] sm:$0xff]
    %v617 = vld [vmem:[#allocation7 + $0x80] sm:$0xff]
    %v618 = vld [vmem:[#allocation7 + $0x88] sm:$0xff]
    %v619 = vld [vmem:[#allocation7 + $0x90] sm:$0xff]
    %v620 = vld [vmem:[#allocation7 + $0x98] sm:$0xff]
    %v621 = vld [vmem:[#allocation7 + $0xa0] sm:$0xff]
    %v622 = vld [vmem:[#allocation7 + $0xa8] sm:$0xff]
    %v623 = vld [vmem:[#allocation7 + $0xb0] sm:$0xff]
    %v624 = vld [vmem:[#allocation7 + $0xb8] sm:$0xff]
    %v625 = vld [vmem:[#allocation7 + $0xc0] sm:$0xff]
    %v626 = vld [vmem:[#allocation7 + $0xc8] sm:$0xff]
    %v627 = vld [vmem:[#allocation7 + $0xd0] sm:$0xff]
    %v628 = vld [vmem:[#allocation7 + $0xd8] sm:$0xff]
    %v629 = vld [vmem:[#allocation7 + $0xe0] sm:$0xff]
    %v630 = vld [vmem:[#allocation7 + $0xe8] sm:$0xff]
    %v631 = vld [vmem:[#allocation7 + $0xf0] sm:$0xff]
    %v632 = vld [vmem:[#allocation7 + $0xf8] sm:$0xff]
    %v633 = vld [vmem:[#allocation7 + $0x100] sm:$0xff]
    %v634 = vld [vmem:[#allocation7 + $0x108] sm:$0xff]
    %v635 = vld [vmem:[#allocation7 + $0x110] sm:$0xff]
    %v636 = vld [vmem:[#allocation7 + $0x118] sm:$0xff]
    %v637 = vld [vmem:[#allocation7 + $0x120] sm:$0xff]
    %v638 = vld [vmem:[#allocation7 + $0x128] sm:$0xff]
    %v639 = vld [vmem:[#allocation7 + $0x130] sm:$0xff]
    %v640 = vld [vmem:[#allocation7 + $0x138] sm:$0xff]
    %v641 = vld [vmem:[#allocation7 + $0x140] sm:$0xff]
    %v642 = vld [vmem:[#allocation7 + $0x148] sm:$0xff]
    %v643 = vld [vmem:[#allocation7 + $0x150] sm:$0xff]
    %v644 = vld [vmem:[#allocation7 + $0x158] sm:$0xff]
    %v645 = vld [vmem:[#allocation7 + $0x160] sm:$0xff]
    %v646 = vld [vmem:[#allocation7 + $0x168] sm:$0xff]
    %v647 = vld [vmem:[#allocation7 + $0x170] sm:$0xff]
    %v648 = vld [vmem:[#allocation7 + $0x178] sm:$0xff]
    %v649 = vld [vmem:[#allocation7 + $0x180] sm:$0xff]
    %v650 = vld [vmem:[#allocation7 + $0x188] sm:$0xff]
    %v651 = vld [vmem:[#allocation7 + $0x190] sm:$0xff]
    %v652 = vld [vmem:[#allocation7 + $0x198] sm:$0xff]
    %v653 = vld [vmem:[#allocation7 + $0x1a0] sm:$0xff]
    %v654 = vld [vmem:[#allocation7 + $0x1a8] sm:$0xff]
    %v655 = vld [vmem:[#allocation7 + $0x1b0] sm:$0xff]
    %v656 = vld [vmem:[#allocation7 + $0x1b8] sm:$0xff]
    %v657 = vld [vmem:[#allocation7 + $0x1c0] sm:$0xff]
    %v658 = vld [vmem:[#allocation7 + $0x1c8] sm:$0xff]
    %v659 = vld [vmem:[#allocation7 + $0x1d0] sm:$0xff]
    %v660 = vld [vmem:[#allocation7 + $0x1d8] sm:$0xff]
    %v661 = vld [vmem:[#allocation7 + $0x1e0] sm:$0xff]
    %v662 = vld [vmem:[#allocation7 + $0x1e8] sm:$0xff]
    %v663 = vld [vmem:[#allocation7 + $0x1f0] sm:$0xff]
    %v664 = vld [vmem:[#allocation7 + $0x1f8] sm:$0xff]
    %665 = vmatprep.subr.mxu0 %v662
    %666 = vmatpush1.msra.mxu0 %v661
    %667 = vmatprep.subr.mxu0 %v658
    %668 = vmatpush1.msra.mxu0 %v657
    %669 = vmatprep.subr.mxu0 %v654
    %670 = vmatpush1.msra.mxu0 %v653
    %671 = vmatprep.subr.mxu0 %v650
    %672 = vmatpush1.msra.mxu0 %v649
    %673 = vmatprep.subr.mxu0 %v646
    %674 = vmatpush1.msra.mxu0 %v645
    %675 = vmatprep.subr.mxu0 %v642
    %676 = vmatpush1.msra.mxu0 %v641
    %677 = vmatprep.subr.mxu0 %v638
    %678 = vmatpush1.msra.mxu0 %v637
    %679 = vmatprep.subr.mxu0 %v634
    %680 = vmatpush1.msra.mxu0 %v633
    %681 = vmatprep.subr.mxu0 %v630
    %682 = vmatpush1.msra.mxu0 %v629
    %683 = vmatprep.subr.mxu0 %v626
    %684 = vmatpush1.msra.mxu0 %v625
    %685 = vmatprep.subr.mxu0 %v622
    %686 = vmatpush1.msra.mxu0 %v621
    %687 = vmatprep.subr.mxu0 %v618
    %688 = vmatpush1.msra.mxu0 %v617
    %689 = vmatprep.subr.mxu0 %v614
    %690 = vmatpush1.msra.mxu0 %v613
    %691 = vmatprep.subr.mxu0 %v610
    %692 = vmatpush1.msra.mxu0 %v609
    %693 = vmatprep.subr.mxu0 %v606
    %694 = vmatpush1.msra.mxu0 %v605
    %695 = vmatprep.subr.mxu0 %v602
    %696 = vmatpush1.msra.mxu0 %v601
    %697 = vmatprep.subr.mxu0 0.0
    %698 = vmatpush2.msra.mxu0 0.0
    %699 = vmatprep.subr.mxu0 0.0
    %700 = vmatpush2.msra.mxu0 0.0
    %701 = vmatprep.subr.mxu0 0.0
    %702 = vmatpush2.msra.mxu0 0.0
    %703 = vmatprep.subr.mxu0 0.0
    %704 = vmatpush2.msra.mxu0 0.0
    %705 = vmatprep.subr.mxu0 0.0
    %706 = vmatpush2.msra.mxu0 0.0
    %707 = vmatprep.subr.mxu0 0.0
    %708 = vmatpush2.msra.mxu0 0.0
    %709 = vmatprep.subr.mxu0 0.0
    %710 = vmatpush2.msra.mxu0 0.0
    %711 = vmatprep.subr.mxu0 0.0
    %712 = vmatpush2.msra.mxu0 0.0
    %713 = vmatprep.subr.mxu0 0.0
    %714 = vmatpush2.msra.mxu0 0.0
    %715 = vmatprep.subr.mxu0 0.0
    %716 = vmatpush2.msra.mxu0 0.0
    %717 = vmatprep.subr.mxu0 0.0
    %718 = vmatpush2.msra.mxu0 0.0
    %719 = vmatprep.subr.mxu0 0.0
    %720 = vmatpush2.msra.mxu0 0.0
    %721 = vmatprep.subr.mxu0 0.0
    %722 = vmatpush2.msra.mxu0 0.0
    %723 = vmatprep.subr.mxu0 0.0
    %724 = vmatpush2.msra.mxu0 0.0
    %725 = vmatprep.subr.mxu0 0.0
    %726 = vmatpush2.msra.mxu0 0.0
    %727 = vmatprep.subr.mxu0 0.0
    %728 = vmatpush2.msra.mxu0 0.0
    %729 = vmatprep.mubr.f32.mxu0 0.0
    %730 = vmatmul.mubr.f32.gmra.mxu0 %v533
    %v731 = vpop.f32.mrf.mxu0
    %v732 = vadd.f32 0.0, %v731
    %v733 = vpop.f32.mrf.mxu0
    %v734 = vadd.f32 0.0, %v733
    %735 = vdwg.mxu0
    %736 = vmatprep.subr.mxu0 %v664
    %737 = vmatpush1.msra.mxu0 %v663
    %738 = vmatprep.subr.mxu0 %v660
    %739 = vmatpush1.msra.mxu0 %v659
    %740 = vmatprep.subr.mxu0 %v656
    %741 = vmatpush1.msra.mxu0 %v655
    %742 = vmatprep.subr.mxu0 %v652
    %743 = vmatpush1.msra.mxu0 %v651
    %744 = vmatprep.subr.mxu0 %v648
    %745 = vmatpush1.msra.mxu0 %v647
    %746 = vmatprep.subr.mxu0 %v644
    %747 = vmatpush1.msra.mxu0 %v643
    %748 = vmatprep.subr.mxu0 %v640
    %749 = vmatpush1.msra.mxu0 %v639
    %750 = vmatprep.subr.mxu0 %v636
    %751 = vmatpush1.msra.mxu0 %v635
    %752 = vmatprep.subr.mxu0 %v632
    %753 = vmatpush1.msra.mxu0 %v631
    %754 = vmatprep.subr.mxu0 %v628
    %755 = vmatpush1.msra.mxu0 %v627
    %756 = vmatprep.subr.mxu0 %v624
    %757 = vmatpush1.msra.mxu0 %v623
    %758 = vmatprep.subr.mxu0 %v620
    %759 = vmatpush1.msra.mxu0 %v619
    %760 = vmatprep.subr.mxu0 %v616
    %761 = vmatpush1.msra.mxu0 %v615
    %762 = vmatprep.subr.mxu0 %v612
    %763 = vmatpush1.msra.mxu0 %v611
    %764 = vmatprep.subr.mxu0 %v608
    %765 = vmatpush1.msra.mxu0 %v607
    %766 = vmatprep.subr.mxu0 %v604
    %767 = vmatpush1.msra.mxu0 %v603
    %768 = vmatprep.subr.mxu0 0.0
    %769 = vmatpush2.msra.mxu0 0.0
    %770 = vmatprep.subr.mxu0 0.0
    %771 = vmatpush2.msra.mxu0 0.0
    %772 = vmatprep.subr.mxu0 0.0
    %773 = vmatpush2.msra.mxu0 0.0
    %774 = vmatprep.subr.mxu0 0.0
    %775 = vmatpush2.msra.mxu0 0.0
    %776 = vmatprep.subr.mxu0 0.0
    %777 = vmatpush2.msra.mxu0 0.0
    %778 = vmatprep.subr.mxu0 0.0
    %779 = vmatpush2.msra.mxu0 0.0
    %780 = vmatprep.subr.mxu0 0.0
    %781 = vmatpush2.msra.mxu0 0.0
    %782 = vmatprep.subr.mxu0 0.0
    %783 = vmatpush2.msra.mxu0 0.0
    %784 = vmatprep.subr.mxu0 0.0
    %785 = vmatpush2.msra.mxu0 0.0
    %786 = vmatprep.subr.mxu0 0.0
    %787 = vmatpush2.msra.mxu0 0.0
    %788 = vmatprep.subr.mxu0 0.0
    %789 = vmatpush2.msra.mxu0 0.0
    %790 = vmatprep.subr.mxu0 0.0
    %791 = vmatpush2.msra.mxu0 0.0
    %792 = vmatprep.subr.mxu0 0.0
    %793 = vmatpush2.msra.mxu0 0.0
    %794 = vmatprep.subr.mxu0 0.0
    %795 = vmatpush2.msra.mxu0 0.0
    %796 = vmatprep.subr.mxu0 0.0
    %797 = vmatpush2.msra.mxu0 0.0
    %798 = vmatprep.subr.mxu0 0.0
    %799 = vmatpush2.msra.mxu0 0.0
    %800 = vmatprep.mubr.f32.mxu0 0.0
    %801 = vmatmul.mubr.f32.gmra.mxu0 %v533
    %v802 = vpop.f32.mrf.mxu0
    %v803 = vadd.f32 0.0, %v802
    %v804 = vpop.f32.mrf.mxu0
    %v805 = vadd.f32 0.0, %v804
    %806 = vdwg.mxu0
    %807 = vmatprep.subr.mxu0 %v598
    %808 = vmatpush1.msra.mxu0 %v597
    %809 = vmatprep.subr.mxu0 %v594
    %810 = vmatpush1.msra.mxu0 %v593
    %811 = vmatprep.subr.mxu0 %v590
    %812 = vmatpush1.msra.mxu0 %v589
    %813 = vmatprep.subr.mxu0 %v586
    %814 = vmatpush1.msra.mxu0 %v585
    %815 = vmatprep.subr.mxu0 %v582
    %816 = vmatpush1.msra.mxu0 %v581
    %817 = vmatprep.subr.mxu0 %v578
    %818 = vmatpush1.msra.mxu0 %v577
    %819 = vmatprep.subr.mxu0 %v574
    %820 = vmatpush1.msra.mxu0 %v573
    %821 = vmatprep.subr.mxu0 %v570
    %822 = vmatpush1.msra.mxu0 %v569
    %823 = vmatprep.subr.mxu0 %v566
    %824 = vmatpush1.msra.mxu0 %v565
    %825 = vmatprep.subr.mxu0 %v562
    %826 = vmatpush1.msra.mxu0 %v561
    %827 = vmatprep.subr.mxu0 %v558
    %828 = vmatpush1.msra.mxu0 %v557
    %829 = vmatprep.subr.mxu0 %v554
    %830 = vmatpush1.msra.mxu0 %v553
    %831 = vmatprep.subr.mxu0 %v550
    %832 = vmatpush1.msra.mxu0 %v549
    %833 = vmatprep.subr.mxu0 %v546
    %834 = vmatpush1.msra.mxu0 %v545
    %835 = vmatprep.subr.mxu0 %v542
    %836 = vmatpush1.msra.mxu0 %v541
    %837 = vmatprep.subr.mxu0 %v538
    %838 = vmatpush1.msra.mxu0 %v537
    %839 = vmatprep.subr.mxu0 0.0
    %840 = vmatpush2.msra.mxu0 0.0
    %841 = vmatprep.subr.mxu0 0.0
    %842 = vmatpush2.msra.mxu0 0.0
    %843 = vmatprep.subr.mxu0 0.0
    %844 = vmatpush2.msra.mxu0 0.0
    %845 = vmatprep.subr.mxu0 0.0
    %846 = vmatpush2.msra.mxu0 0.0
    %847 = vmatprep.subr.mxu0 0.0
    %848 = vmatpush2.msra.mxu0 0.0
    %849 = vmatprep.subr.mxu0 0.0
    %850 = vmatpush2.msra.mxu0 0.0
    %851 = vmatprep.subr.mxu0 0.0
    %852 = vmatpush2.msra.mxu0 0.0
    %853 = vmatprep.subr.mxu0 0.0
    %854 = vmatpush2.msra.mxu0 0.0
    %855 = vmatprep.subr.mxu0 0.0
    %856 = vmatpush2.msra.mxu0 0.0
    %857 = vmatprep.subr.mxu0 0.0
    %858 = vmatpush2.msra.mxu0 0.0
    %859 = vmatprep.subr.mxu0 0.0
    %860 = vmatpush2.msra.mxu0 0.0
    %861 = vmatprep.subr.mxu0 0.0
    %862 = vmatpush2.msra.mxu0 0.0
    %863 = vmatprep.subr.mxu0 0.0
    %864 = vmatpush2.msra.mxu0 0.0
    %865 = vmatprep.subr.mxu0 0.0
    %866 = vmatpush2.msra.mxu0 0.0
    %867 = vmatprep.subr.mxu0 0.0
    %868 = vmatpush2.msra.mxu0 0.0
    %869 = vmatprep.subr.mxu0 0.0
    %870 = vmatpush2.msra.mxu0 0.0
    %871 = vmatprep.mubr.f32.mxu0 0.0
    %872 = vmatmul.mubr.f32.gmra.mxu0 %v536
    %v873 = vpop.f32.mrf.mxu0
    %v874 = vadd.f32 %v732, %v873
    %v875 = vpop.f32.mrf.mxu0
    %v876 = vadd.f32 %v734, %v875
    %877 = vdwg.mxu0
    %878 = vmatprep.subr.mxu0 %v600
    %879 = vmatpush1.msra.mxu0 %v599
    %880 = vmatprep.subr.mxu0 %v596
    %881 = vmatpush1.msra.mxu0 %v595
    %882 = vmatprep.subr.mxu0 %v592
    %883 = vmatpush1.msra.mxu0 %v591
    %884 = vmatprep.subr.mxu0 %v588
    %885 = vmatpush1.msra.mxu0 %v587
    %886 = vmatprep.subr.mxu0 %v584
    %887 = vmatpush1.msra.mxu0 %v583
    %888 = vmatprep.subr.mxu0 %v580
    %889 = vmatpush1.msra.mxu0 %v579
    %890 = vmatprep.subr.mxu0 %v576
    %891 = vmatpush1.msra.mxu0 %v575
    %892 = vmatprep.subr.mxu0 %v572
    %893 = vmatpush1.msra.mxu0 %v571
    %894 = vmatprep.subr.mxu0 %v568
    %895 = vmatpush1.msra.mxu0 %v567
    %896 = vmatprep.subr.mxu0 %v564
    %897 = vmatpush1.msra.mxu0 %v563
    %898 = vmatprep.subr.mxu0 %v560
    %899 = vmatpush1.msra.mxu0 %v559
    %900 = vmatprep.subr.mxu0 %v556
    %901 = vmatpush1.msra.mxu0 %v555
    %902 = vmatprep.subr.mxu0 %v552
    %903 = vmatpush1.msra.mxu0 %v551
    %904 = vmatprep.subr.mxu0 %v548
    %905 = vmatpush1.msra.mxu0 %v547
    %906 = vmatprep.subr.mxu0 %v544
    %907 = vmatpush1.msra.mxu0 %v543
    %908 = vmatprep.subr.mxu0 %v540
    %909 = vmatpush1.msra.mxu0 %v539
    %910 = vmatprep.subr.mxu0 0.0
    %911 = vmatpush2.msra.mxu0 0.0
    %912 = vmatprep.subr.mxu0 0.0
    %913 = vmatpush2.msra.mxu0 0.0
    %914 = vmatprep.subr.mxu0 0.0
    %915 = vmatpush2.msra.mxu0 0.0
    %916 = vmatprep.subr.mxu0 0.0
    %917 = vmatpush2.msra.mxu0 0.0
    %918 = vmatprep.subr.mxu0 0.0
    %919 = vmatpush2.msra.mxu0 0.0
    %920 = vmatprep.subr.mxu0 0.0
    %921 = vmatpush2.msra.mxu0 0.0
    %922 = vmatprep.subr.mxu0 0.0
    %923 = vmatpush2.msra.mxu0 0.0
    %924 = vmatprep.subr.mxu0 0.0
    %925 = vmatpush2.msra.mxu0 0.0
    %926 = vmatprep.subr.mxu0 0.0
    %927 = vmatpush2.msra.mxu0 0.0
    %928 = vmatprep.subr.mxu0 0.0
    %929 = vmatpush2.msra.mxu0 0.0
    %930 = vmatprep.subr.mxu0 0.0
    %931 = vmatpush2.msra.mxu0 0.0
    %932 = vmatprep.subr.mxu0 0.0
    %933 = vmatpush2.msra.mxu0 0.0
    %934 = vmatprep.subr.mxu0 0.0
    %935 = vmatpush2.msra.mxu0 0.0
    %936 = vmatprep.subr.mxu0 0.0
    %937 = vmatpush2.msra.mxu0 0.0
    %938 = vmatprep.subr.mxu0 0.0
    %939 = vmatpush2.msra.mxu0 0.0
    %940 = vmatprep.subr.mxu0 0.0
    %941 = vmatpush2.msra.mxu0 0.0
    %942 = vmatprep.mubr.f32.mxu0 0.0
    %943 = vmatmul.mubr.f32.gmra.mxu0 %v536
    %v944 = vpop.f32.mrf.mxu0
    %v945 = vadd.f32 %v803, %v944
    %v946 = vpop.f32.mrf.mxu0
    %v947 = vadd.f32 %v805, %v946
    %948 = vdwg.mxu0
    %v949 = vadd.f32 %v874, %v74
    %v950 = vadd.f32 %v876, %v78
    %v951 = vadd.f32 %v945, %v82
    %v952 = vadd.f32 %v947, %v86
    %v953 = vxor.u32 %v949, 2147483648
    %v954 = vmul.f32 %v953, 1.442695
    %v955 = vpow.pop %v954
    %v956 = vadd.f32 %v955, 1.0
    %v957 = vrcp.pop %v956
    %v958 = vmul.f32 1.0, %v957
    %v959 = vxor.u32 %v950, 2147483648
    %v960 = vmul.f32 %v959, 1.442695
    %v961 = vpow.pop %v960
    %v962 = vadd.f32 %v961, 1.0
    %v963 = vrcp.pop %v962
    %v964 = vmul.f32 1.0, %v963
    %v965 = vtanh.pop %v951
    %v966 = vxor.u32 %v952, 2147483648
    %v967 = vmul.f32 %v966, 1.442695
    %v968 = vpow.pop %v967
    %v969 = vadd.f32 %v968, 1.0
    %v970 = vrcp.pop %v969
    %v971 = vmul.f32 1.0, %v970
    %v972 = vmul.f32 %v964, %v531
    %v973 = vmul.f32 %v958, %v965
    %v974 = vadd.f32 %v972, %v973
    %v975 = vtanh.pop %v974
    %v976 = vmul.f32 %v971, %v975
    %s977 = scalar_lea.vmem [#allocation8], 2
    %978 = vst [vmem:[%s977] sm:$0x3] %v976
    %s979 = scalar_lea.vmem [#allocation2], 4
    %v980 = vld [vmem:[%s979] sm:$0x3]
    %v981 = vld [vmem:[#allocation5] sm:$0xff]
    %v982 = vld [vmem:[#allocation5 + $0x8] sm:$0xff]
    %v983 = vld [vmem:[#allocation5 + $0x10] sm:$0xff]
    %v984 = vld [vmem:[#allocation5 + $0x18] sm:$0xff]
    %v985 = vld [vmem:[#allocation5 + $0x20] sm:$0xff]
    %v986 = vld [vmem:[#allocation5 + $0x28] sm:$0xff]
    %v987 = vld [vmem:[#allocation5 + $0x30] sm:$0xff]
    %v988 = vld [vmem:[#allocation5 + $0x38] sm:$0xff]
    %v989 = vld [vmem:[#allocation5 + $0x40] sm:$0xff]
    %v990 = vld [vmem:[#allocation5 + $0x48] sm:$0xff]
    %v991 = vld [vmem:[#allocation5 + $0x50] sm:$0xff]
    %v992 = vld [vmem:[#allocation5 + $0x58] sm:$0xff]
    %v993 = vld [vmem:[#allocation5 + $0x60] sm:$0xff]
    %v994 = vld [vmem:[#allocation5 + $0x68] sm:$0xff]
    %v995 = vld [vmem:[#allocation5 + $0x70] sm:$0xff]
    %v996 = vld [vmem:[#allocation5 + $0x78] sm:$0xff]
    %v997 = vld [vmem:[#allocation5 + $0x80] sm:$0xff]
    %v998 = vld [vmem:[#allocation5 + $0x88] sm:$0xff]
    %v999 = vld [vmem:[#allocation5 + $0x90] sm:$0xff]
    %v1000 = vld [vmem:[#allocation5 + $0x98] sm:$0xff]
    %v1001 = vld [vmem:[#allocation5 + $0xa0] sm:$0xff]
    %v1002 = vld [vmem:[#allocation5 + $0xa8] sm:$0xff]
    %v1003 = vld [vmem:[#allocation5 + $0xb0] sm:$0xff]
    %v1004 = vld [vmem:[#allocation5 + $0xb8] sm:$0xff]
    %v1005 = vld [vmem:[#allocation5 + $0xc0] sm:$0xff]
    %v1006 = vld [vmem:[#allocation5 + $0xc8] sm:$0xff]
    %v1007 = vld [vmem:[#allocation5 + $0xd0] sm:$0xff]
    %v1008 = vld [vmem:[#allocation5 + $0xd8] sm:$0xff]
    %v1009 = vld [vmem:[#allocation5 + $0xe0] sm:$0xff]
    %v1010 = vld [vmem:[#allocation5 + $0xe8] sm:$0xff]
    %v1011 = vld [vmem:[#allocation5 + $0xf0] sm:$0xff]
    %v1012 = vld [vmem:[#allocation5 + $0xf8] sm:$0xff]
    %v1013 = vld [vmem:[#allocation5 + $0x100] sm:$0xff]
    %v1014 = vld [vmem:[#allocation5 + $0x108] sm:$0xff]
    %v1015 = vld [vmem:[#allocation5 + $0x110] sm:$0xff]
    %v1016 = vld [vmem:[#allocation5 + $0x118] sm:$0xff]
    %v1017 = vld [vmem:[#allocation5 + $0x120] sm:$0xff]
    %v1018 = vld [vmem:[#allocation5 + $0x128] sm:$0xff]
    %v1019 = vld [vmem:[#allocation5 + $0x130] sm:$0xff]
    %v1020 = vld [vmem:[#allocation5 + $0x138] sm:$0xff]
    %v1021 = vld [vmem:[#allocation5 + $0x140] sm:$0xff]
    %v1022 = vld [vmem:[#allocation5 + $0x148] sm:$0xff]
    %v1023 = vld [vmem:[#allocation5 + $0x150] sm:$0xff]
    %v1024 = vld [vmem:[#allocation5 + $0x158] sm:$0xff]
    %v1025 = vld [vmem:[#allocation5 + $0x160] sm:$0xff]
    %v1026 = vld [vmem:[#allocation5 + $0x168] sm:$0xff]
    %v1027 = vld [vmem:[#allocation5 + $0x170] sm:$0xff]
    %v1028 = vld [vmem:[#allocation5 + $0x178] sm:$0xff]
    %v1029 = vld [vmem:[#allocation5 + $0x180] sm:$0xff]
    %v1030 = vld [vmem:[#allocation5 + $0x188] sm:$0xff]
    %v1031 = vld [vmem:[#allocation5 + $0x190] sm:$0xff]
    %v1032 = vld [vmem:[#allocation5 + $0x198] sm:$0xff]
    %v1033 = vld [vmem:[#allocation5 + $0x1a0] sm:$0xff]
    %v1034 = vld [vmem:[#allocation5 + $0x1a8] sm:$0xff]
    %v1035 = vld [vmem:[#allocation5 + $0x1b0] sm:$0xff]
    %v1036 = vld [vmem:[#allocation5 + $0x1b8] sm:$0xff]
    %v1037 = vld [vmem:[#allocation5 + $0x1c0] sm:$0xff]
    %v1038 = vld [vmem:[#allocation5 + $0x1c8] sm:$0xff]
    %v1039 = vld [vmem:[#allocation5 + $0x1d0] sm:$0xff]
    %v1040 = vld [vmem:[#allocation5 + $0x1d8] sm:$0xff]
    %v1041 = vld [vmem:[#allocation5 + $0x1e0] sm:$0xff]
    %v1042 = vld [vmem:[#allocation5 + $0x1e8] sm:$0xff]
    %v1043 = vld [vmem:[#allocation5 + $0x1f0] sm:$0xff]
    %v1044 = vld [vmem:[#allocation5 + $0x1f8] sm:$0xff]
    %v1045 = vld [vmem:[#allocation7] sm:$0xff]
    %v1046 = vld [vmem:[#allocation7 + $0x8] sm:$0xff]
    %v1047 = vld [vmem:[#allocation7 + $0x10] sm:$0xff]
    %v1048 = vld [vmem:[#allocation7 + $0x18] sm:$0xff]
    %v1049 = vld [vmem:[#allocation7 + $0x20] sm:$0xff]
    %v1050 = vld [vmem:[#allocation7 + $0x28] sm:$0xff]
    %v1051 = vld [vmem:[#allocation7 + $0x30] sm:$0xff]
    %v1052 = vld [vmem:[#allocation7 + $0x38] sm:$0xff]
    %v1053 = vld [vmem:[#allocation7 + $0x40] sm:$0xff]
    %v1054 = vld [vmem:[#allocation7 + $0x48] sm:$0xff]
    %v1055 = vld [vmem:[#allocation7 + $0x50] sm:$0xff]
    %v1056 = vld [vmem:[#allocation7 + $0x58] sm:$0xff]
    %v1057 = vld [vmem:[#allocation7 + $0x60] sm:$0xff]
    %v1058 = vld [vmem:[#allocation7 + $0x68] sm:$0xff]
    %v1059 = vld [vmem:[#allocation7 + $0x70] sm:$0xff]
    %v1060 = vld [vmem:[#allocation7 + $0x78] sm:$0xff]
    %v1061 = vld [vmem:[#allocation7 + $0x80] sm:$0xff]
    %v1062 = vld [vmem:[#allocation7 + $0x88] sm:$0xff]
    %v1063 = vld [vmem:[#allocation7 + $0x90] sm:$0xff]
    %v1064 = vld [vmem:[#allocation7 + $0x98] sm:$0xff]
    %v1065 = vld [vmem:[#allocation7 + $0xa0] sm:$0xff]
    %v1066 = vld [vmem:[#allocation7 + $0xa8] sm:$0xff]
    %v1067 = vld [vmem:[#allocation7 + $0xb0] sm:$0xff]
    %v1068 = vld [vmem:[#allocation7 + $0xb8] sm:$0xff]
    %v1069 = vld [vmem:[#allocation7 + $0xc0] sm:$0xff]
    %v1070 = vld [vmem:[#allocation7 + $0xc8] sm:$0xff]
    %v1071 = vld [vmem:[#allocation7 + $0xd0] sm:$0xff]
    %v1072 = vld [vmem:[#allocation7 + $0xd8] sm:$0xff]
    %v1073 = vld [vmem:[#allocation7 + $0xe0] sm:$0xff]
    %v1074 = vld [vmem:[#allocation7 + $0xe8] sm:$0xff]
    %v1075 = vld [vmem:[#allocation7 + $0xf0] sm:$0xff]
    %v1076 = vld [vmem:[#allocation7 + $0xf8] sm:$0xff]
    %v1077 = vld [vmem:[#allocation7 + $0x100] sm:$0xff]
    %v1078 = vld [vmem:[#allocation7 + $0x108] sm:$0xff]
    %v1079 = vld [vmem:[#allocation7 + $0x110] sm:$0xff]
    %v1080 = vld [vmem:[#allocation7 + $0x118] sm:$0xff]
    %v1081 = vld [vmem:[#allocation7 + $0x120] sm:$0xff]
    %v1082 = vld [vmem:[#allocation7 + $0x128] sm:$0xff]
    %v1083 = vld [vmem:[#allocation7 + $0x130] sm:$0xff]
    %v1084 = vld [vmem:[#allocation7 + $0x138] sm:$0xff]
    %v1085 = vld [vmem:[#allocation7 + $0x140] sm:$0xff]
    %v1086 = vld [vmem:[#allocation7 + $0x148] sm:$0xff]
    %v1087 = vld [vmem:[#allocation7 + $0x150] sm:$0xff]
    %v1088 = vld [vmem:[#allocation7 + $0x158] sm:$0xff]
    %v1089 = vld [vmem:[#allocation7 + $0x160] sm:$0xff]
    %v1090 = vld [vmem:[#allocation7 + $0x168] sm:$0xff]
    %v1091 = vld [vmem:[#allocation7 + $0x170] sm:$0xff]
    %v1092 = vld [vmem:[#allocation7 + $0x178] sm:$0xff]
    %v1093 = vld [vmem:[#allocation7 + $0x180] sm:$0xff]
    %v1094 = vld [vmem:[#allocation7 + $0x188] sm:$0xff]
    %v1095 = vld [vmem:[#allocation7 + $0x190] sm:$0xff]
    %v1096 = vld [vmem:[#allocation7 + $0x198] sm:$0xff]
    %v1097 = vld [vmem:[#allocation7 + $0x1a0] sm:$0xff]
    %v1098 = vld [vmem:[#allocation7 + $0x1a8] sm:$0xff]
    %v1099 = vld [vmem:[#allocation7 + $0x1b0] sm:$0xff]
    %v1100 = vld [vmem:[#allocation7 + $0x1b8] sm:$0xff]
    %v1101 = vld [vmem:[#allocation7 + $0x1c0] sm:$0xff]
    %v1102 = vld [vmem:[#allocation7 + $0x1c8] sm:$0xff]
    %v1103 = vld [vmem:[#allocation7 + $0x1d0] sm:$0xff]
    %v1104 = vld [vmem:[#allocation7 + $0x1d8] sm:$0xff]
    %v1105 = vld [vmem:[#allocation7 + $0x1e0] sm:$0xff]
    %v1106 = vld [vmem:[#allocation7 + $0x1e8] sm:$0xff]
    %v1107 = vld [vmem:[#allocation7 + $0x1f0] sm:$0xff]
    %v1108 = vld [vmem:[#allocation7 + $0x1f8] sm:$0xff]
    %1109 = vmatprep.subr.mxu0 %v1106
    %1110 = vmatpush1.msra.mxu0 %v1105
    %1111 = vmatprep.subr.mxu0 %v1102
    %1112 = vmatpush1.msra.mxu0 %v1101
    %1113 = vmatprep.subr.mxu0 %v1098
    %1114 = vmatpush1.msra.mxu0 %v1097
    %1115 = vmatprep.subr.mxu0 %v1094
    %1116 = vmatpush1.msra.mxu0 %v1093
    %1117 = vmatprep.subr.mxu0 %v1090
    %1118 = vmatpush1.msra.mxu0 %v1089
    %1119 = vmatprep.subr.mxu0 %v1086
    %1120 = vmatpush1.msra.mxu0 %v1085
    %1121 = vmatprep.subr.mxu0 %v1082
    %1122 = vmatpush1.msra.mxu0 %v1081
    %1123 = vmatprep.subr.mxu0 %v1078
    %1124 = vmatpush1.msra.mxu0 %v1077
    %1125 = vmatprep.subr.mxu0 %v1074
    %1126 = vmatpush1.msra.mxu0 %v1073
    %1127 = vmatprep.subr.mxu0 %v1070
    %1128 = vmatpush1.msra.mxu0 %v1069
    %1129 = vmatprep.subr.mxu0 %v1066
    %1130 = vmatpush1.msra.mxu0 %v1065
    %1131 = vmatprep.subr.mxu0 %v1062
    %1132 = vmatpush1.msra.mxu0 %v1061
    %1133 = vmatprep.subr.mxu0 %v1058
    %1134 = vmatpush1.msra.mxu0 %v1057
    %1135 = vmatprep.subr.mxu0 %v1054
    %1136 = vmatpush1.msra.mxu0 %v1053
    %1137 = vmatprep.subr.mxu0 %v1050
    %1138 = vmatpush1.msra.mxu0 %v1049
    %1139 = vmatprep.subr.mxu0 %v1046
    %1140 = vmatpush1.msra.mxu0 %v1045
    %1141 = vmatprep.subr.mxu0 0.0
    %1142 = vmatpush2.msra.mxu0 0.0
    %1143 = vmatprep.subr.mxu0 0.0
    %1144 = vmatpush2.msra.mxu0 0.0
    %1145 = vmatprep.subr.mxu0 0.0
    %1146 = vmatpush2.msra.mxu0 0.0
    %1147 = vmatprep.subr.mxu0 0.0
    %1148 = vmatpush2.msra.mxu0 0.0
    %1149 = vmatprep.subr.mxu0 0.0
    %1150 = vmatpush2.msra.mxu0 0.0
    %1151 = vmatprep.subr.mxu0 0.0
    %1152 = vmatpush2.msra.mxu0 0.0
    %1153 = vmatprep.subr.mxu0 0.0
    %1154 = vmatpush2.msra.mxu0 0.0
    %1155 = vmatprep.subr.mxu0 0.0
    %1156 = vmatpush2.msra.mxu0 0.0
    %1157 = vmatprep.subr.mxu0 0.0
    %1158 = vmatpush2.msra.mxu0 0.0
    %1159 = vmatprep.subr.mxu0 0.0
    %1160 = vmatpush2.msra.mxu0 0.0
    %1161 = vmatprep.subr.mxu0 0.0
    %1162 = vmatpush2.msra.mxu0 0.0
    %1163 = vmatprep.subr.mxu0 0.0
    %1164 = vmatpush2.msra.mxu0 0.0
    %1165 = vmatprep.subr.mxu0 0.0
    %1166 = vmatpush2.msra.mxu0 0.0
    %1167 = vmatprep.subr.mxu0 0.0
    %1168 = vmatpush2.msra.mxu0 0.0
    %1169 = vmatprep.subr.mxu0 0.0
    %1170 = vmatpush2.msra.mxu0 0.0
    %1171 = vmatprep.subr.mxu0 0.0
    %1172 = vmatpush2.msra.mxu0 0.0
    %1173 = vmatprep.mubr.f32.mxu0 0.0
    %1174 = vmatmul.mubr.f32.gmra.mxu0 %v976
    %v1175 = vpop.f32.mrf.mxu0
    %v1176 = vadd.f32 0.0, %v1175
    %v1177 = vpop.f32.mrf.mxu0
    %v1178 = vadd.f32 0.0, %v1177
    %1179 = vdwg.mxu0
    %1180 = vmatprep.subr.mxu0 %v1108
    %1181 = vmatpush1.msra.mxu0 %v1107
    %1182 = vmatprep.subr.mxu0 %v1104
    %1183 = vmatpush1.msra.mxu0 %v1103
    %1184 = vmatprep.subr.mxu0 %v1100
    %1185 = vmatpush1.msra.mxu0 %v1099
    %1186 = vmatprep.subr.mxu0 %v1096
    %1187 = vmatpush1.msra.mxu0 %v1095
    %1188 = vmatprep.subr.mxu0 %v1092
    %1189 = vmatpush1.msra.mxu0 %v1091
    %1190 = vmatprep.subr.mxu0 %v1088
    %1191 = vmatpush1.msra.mxu0 %v1087
    %1192 = vmatprep.subr.mxu0 %v1084
    %1193 = vmatpush1.msra.mxu0 %v1083
    %1194 = vmatprep.subr.mxu0 %v1080
    %1195 = vmatpush1.msra.mxu0 %v1079
    %1196 = vmatprep.subr.mxu0 %v1076
    %1197 = vmatpush1.msra.mxu0 %v1075
    %1198 = vmatprep.subr.mxu0 %v1072
    %1199 = vmatpush1.msra.mxu0 %v1071
    %1200 = vmatprep.subr.mxu0 %v1068
    %1201 = vmatpush1.msra.mxu0 %v1067
    %1202 = vmatprep.subr.mxu0 %v1064
    %1203 = vmatpush1.msra.mxu0 %v1063
    %1204 = vmatprep.subr.mxu0 %v1060
    %1205 = vmatpush1.msra.mxu0 %v1059
    %1206 = vmatprep.subr.mxu0 %v1056
    %1207 = vmatpush1.msra.mxu0 %v1055
    %1208 = vmatprep.subr.mxu0 %v1052
    %1209 = vmatpush1.msra.mxu0 %v1051
    %1210 = vmatprep.subr.mxu0 %v1048
    %1211 = vmatpush1.msra.mxu0 %v1047
    %1212 = vmatprep.subr.mxu0 0.0
    %1213 = vmatpush2.msra.mxu0 0.0
    %1214 = vmatprep.subr.mxu0 0.0
    %1215 = vmatpush2.msra.mxu0 0.0
    %1216 = vmatprep.subr.mxu0 0.0
    %1217 = vmatpush2.msra.mxu0 0.0
    %1218 = vmatprep.subr.mxu0 0.0
    %1219 = vmatpush2.msra.mxu0 0.0
    %1220 = vmatprep.subr.mxu0 0.0
    %1221 = vmatpush2.msra.mxu0 0.0
    %1222 = vmatprep.subr.mxu0 0.0
    %1223 = vmatpush2.msra.mxu0 0.0
    %1224 = vmatprep.subr.mxu0 0.0
    %1225 = vmatpush2.msra.mxu0 0.0
    %1226 = vmatprep.subr.mxu0 0.0
    %1227 = vmatpush2.msra.mxu0 0.0
    %1228 = vmatprep.subr.mxu0 0.0
    %1229 = vmatpush2.msra.mxu0 0.0
    %1230 = vmatprep.subr.mxu0 0.0
    %1231 = vmatpush2.msra.mxu0 0.0
    %1232 = vmatprep.subr.mxu0 0.0
    %1233 = vmatpush2.msra.mxu0 0.0
    %1234 = vmatprep.subr.mxu0 0.0
    %1235 = vmatpush2.msra.mxu0 0.0
    %1236 = vmatprep.subr.mxu0 0.0
    %1237 = vmatpush2.msra.mxu0 0.0
    %1238 = vmatprep.subr.mxu0 0.0
    %1239 = vmatpush2.msra.mxu0 0.0
    %1240 = vmatprep.subr.mxu0 0.0
    %1241 = vmatpush2.msra.mxu0 0.0
    %1242 = vmatprep.subr.mxu0 0.0
    %1243 = vmatpush2.msra.mxu0 0.0
    %1244 = vmatprep.mubr.f32.mxu0 0.0
    %1245 = vmatmul.mubr.f32.gmra.mxu0 %v976
    %v1246 = vpop.f32.mrf.mxu0
    %v1247 = vadd.f32 0.0, %v1246
    %v1248 = vpop.f32.mrf.mxu0
    %v1249 = vadd.f32 0.0, %v1248
    %1250 = vdwg.mxu0
    %1251 = vmatprep.subr.mxu0 %v1042
    %1252 = vmatpush1.msra.mxu0 %v1041
    %1253 = vmatprep.subr.mxu0 %v1038
    %1254 = vmatpush1.msra.mxu0 %v1037
    %1255 = vmatprep.subr.mxu0 %v1034
    %1256 = vmatpush1.msra.mxu0 %v1033
    %1257 = vmatprep.subr.mxu0 %v1030
    %1258 = vmatpush1.msra.mxu0 %v1029
    %1259 = vmatprep.subr.mxu0 %v1026
    %1260 = vmatpush1.msra.mxu0 %v1025
    %1261 = vmatprep.subr.mxu0 %v1022
    %1262 = vmatpush1.msra.mxu0 %v1021
    %1263 = vmatprep.subr.mxu0 %v1018
    %1264 = vmatpush1.msra.mxu0 %v1017
    %1265 = vmatprep.subr.mxu0 %v1014
    %1266 = vmatpush1.msra.mxu0 %v1013
    %1267 = vmatprep.subr.mxu0 %v1010
    %1268 = vmatpush1.msra.mxu0 %v1009
    %1269 = vmatprep.subr.mxu0 %v1006
    %1270 = vmatpush1.msra.mxu0 %v1005
    %1271 = vmatprep.subr.mxu0 %v1002
    %1272 = vmatpush1.msra.mxu0 %v1001
    %1273 = vmatprep.subr.mxu0 %v998
    %1274 = vmatpush1.msra.mxu0 %v997
    %1275 = vmatprep.subr.mxu0 %v994
    %1276 = vmatpush1.msra.mxu0 %v993
    %1277 = vmatprep.subr.mxu0 %v990
    %1278 = vmatpush1.msra.mxu0 %v989
    %1279 = vmatprep.subr.mxu0 %v986
    %1280 = vmatpush1.msra.mxu0 %v985
    %1281 = vmatprep.subr.mxu0 %v982
    %1282 = vmatpush1.msra.mxu0 %v981
    %1283 = vmatprep.subr.mxu0 0.0
    %1284 = vmatpush2.msra.mxu0 0.0
    %1285 = vmatprep.subr.mxu0 0.0
    %1286 = vmatpush2.msra.mxu0 0.0
    %1287 = vmatprep.subr.mxu0 0.0
    %1288 = vmatpush2.msra.mxu0 0.0
    %1289 = vmatprep.subr.mxu0 0.0
    %1290 = vmatpush2.msra.mxu0 0.0
    %1291 = vmatprep.subr.mxu0 0.0
    %1292 = vmatpush2.msra.mxu0 0.0
    %1293 = vmatprep.subr.mxu0 0.0
    %1294 = vmatpush2.msra.mxu0 0.0
    %1295 = vmatprep.subr.mxu0 0.0
    %1296 = vmatpush2.msra.mxu0 0.0
    %1297 = vmatprep.subr.mxu0 0.0
    %1298 = vmatpush2.msra.mxu0 0.0
    %1299 = vmatprep.subr.mxu0 0.0
    %1300 = vmatpush2.msra.mxu0 0.0
    %1301 = vmatprep.subr.mxu0 0.0
    %1302 = vmatpush2.msra.mxu0 0.0
    %1303 = vmatprep.subr.mxu0 0.0
    %1304 = vmatpush2.msra.mxu0 0.0
    %1305 = vmatprep.subr.mxu0 0.0
    %1306 = vmatpush2.msra.mxu0 0.0
    %1307 = vmatprep.subr.mxu0 0.0
    %1308 = vmatpush2.msra.mxu0 0.0
    %1309 = vmatprep.subr.mxu0 0.0
    %1310 = vmatpush2.msra.mxu0 0.0
    %1311 = vmatprep.subr.mxu0 0.0
    %1312 = vmatpush2.msra.mxu0 0.0
    %1313 = vmatprep.subr.mxu0 0.0
    %1314 = vmatpush2.msra.mxu0 0.0
    %1315 = vmatprep.mubr.f32.mxu0 0.0
    %1316 = vmatmul.mubr.f32.gmra.mxu0 %v980
    %v1317 = vpop.f32.mrf.mxu0
    %v1318 = vadd.f32 %v1176, %v1317
    %v1319 = vpop.f32.mrf.mxu0
    %v1320 = vadd.f32 %v1178, %v1319
    %1321 = vdwg.mxu0
    %1322 = vmatprep.subr.mxu0 %v1044
    %1323 = vmatpush1.msra.mxu0 %v1043
    %1324 = vmatprep.subr.mxu0 %v1040
    %1325 = vmatpush1.msra.mxu0 %v1039
    %1326 = vmatprep.subr.mxu0 %v1036
    %1327 = vmatpush1.msra.mxu0 %v1035
    %1328 = vmatprep.subr.mxu0 %v1032
    %1329 = vmatpush1.msra.mxu0 %v1031
    %1330 = vmatprep.subr.mxu0 %v1028
    %1331 = vmatpush1.msra.mxu0 %v1027
    %1332 = vmatprep.subr.mxu0 %v1024
    %1333 = vmatpush1.msra.mxu0 %v1023
    %1334 = vmatprep.subr.mxu0 %v1020
    %1335 = vmatpush1.msra.mxu0 %v1019
    %1336 = vmatprep.subr.mxu0 %v1016
    %1337 = vmatpush1.msra.mxu0 %v1015
    %1338 = vmatprep.subr.mxu0 %v1012
    %1339 = vmatpush1.msra.mxu0 %v1011
    %1340 = vmatprep.subr.mxu0 %v1008
    %1341 = vmatpush1.msra.mxu0 %v1007
    %1342 = vmatprep.subr.mxu0 %v1004
    %1343 = vmatpush1.msra.mxu0 %v1003
    %1344 = vmatprep.subr.mxu0 %v1000
    %1345 = vmatpush1.msra.mxu0 %v999
    %1346 = vmatprep.subr.mxu0 %v996
    %1347 = vmatpush1.msra.mxu0 %v995
    %1348 = vmatprep.subr.mxu0 %v992
    %1349 = vmatpush1.msra.mxu0 %v991
    %1350 = vmatprep.subr.mxu0 %v988
    %1351 = vmatpush1.msra.mxu0 %v987
    %1352 = vmatprep.subr.mxu0 %v984
    %1353 = vmatpush1.msra.mxu0 %v983
    %1354 = vmatprep.subr.mxu0 0.0
    %1355 = vmatpush2.msra.mxu0 0.0
    %1356 = vmatprep.subr.mxu0 0.0
    %1357 = vmatpush2.msra.mxu0 0.0
    %1358 = vmatprep.subr.mxu0 0.0
    %1359 = vmatpush2.msra.mxu0 0.0
    %1360 = vmatprep.subr.mxu0 0.0
    %1361 = vmatpush2.msra.mxu0 0.0
    %1362 = vmatprep.subr.mxu0 0.0
    %1363 = vmatpush2.msra.mxu0 0.0
    %1364 = vmatprep.subr.mxu0 0.0
    %1365 = vmatpush2.msra.mxu0 0.0
    %1366 = vmatprep.subr.mxu0 0.0
    %1367 = vmatpush2.msra.mxu0 0.0
    %1368 = vmatprep.subr.mxu0 0.0
    %1369 = vmatpush2.msra.mxu0 0.0
    %1370 = vmatprep.subr.mxu0 0.0
    %1371 = vmatpush2.msra.mxu0 0.0
    %1372 = vmatprep.subr.mxu0 0.0
    %1373 = vmatpush2.msra.mxu0 0.0
    %1374 = vmatprep.subr.mxu0 0.0
    %1375 = vmatpush2.msra.mxu0 0.0
    %1376 = vmatprep.subr.mxu0 0.0
    %1377 = vmatpush2.msra.mxu0 0.0
    %1378 = vmatprep.subr.mxu0 0.0
    %1379 = vmatpush2.msra.mxu0 0.0
    %1380 = vmatprep.subr.mxu0 0.0
    %1381 = vmatpush2.msra.mxu0 0.0
    %1382 = vmatprep.subr.mxu0 0.0
    %1383 = vmatpush2.msra.mxu0 0.0
    %1384 = vmatprep.subr.mxu0 0.0
    %1385 = vmatpush2.msra.mxu0 0.0
    %1386 = vmatprep.mubr.f32.mxu0 0.0
    %1387 = vmatmul.mubr.f32.gmra.mxu0 %v980
    %v1388 = vpop.f32.mrf.mxu0
    %v1389 = vadd.f32 %v1247, %v1388
    %v1390 = vpop.f32.mrf.mxu0
    %v1391 = vadd.f32 %v1249, %v1390
    %1392 = vdwg.mxu0
    %v1393 = vadd.f32 %v1318, %v74
    %v1394 = vadd.f32 %v1320, %v78
    %v1395 = vadd.f32 %v1389, %v82
    %v1396 = vadd.f32 %v1391, %v86
    %v1397 = vxor.u32 %v1393, 2147483648
    %v1398 = vmul.f32 %v1397, 1.442695
    %v1399 = vpow.pop %v1398
    %v1400 = vadd.f32 %v1399, 1.0
    %v1401 = vrcp.pop %v1400
    %v1402 = vmul.f32 1.0, %v1401
    %v1403 = vxor.u32 %v1394, 2147483648
    %v1404 = vmul.f32 %v1403, 1.442695
    %v1405 = vpow.pop %v1404
    %v1406 = vadd.f32 %v1405, 1.0
    %v1407 = vrcp.pop %v1406
    %v1408 = vmul.f32 1.0, %v1407
    %v1409 = vtanh.pop %v1395
    %v1410 = vxor.u32 %v1396, 2147483648
    %v1411 = vmul.f32 %v1410, 1.442695
    %v1412 = vpow.pop %v1411
    %v1413 = vadd.f32 %v1412, 1.0
    %v1414 = vrcp.pop %v1413
    %v1415 = vmul.f32 1.0, %v1414
    %v1416 = vmul.f32 %v1408, %v974
    %v1417 = vmul.f32 %v1402, %v1409
    %v1418 = vadd.f32 %v1416, %v1417
    %v1419 = vtanh.pop %v1418
    %v1420 = vmul.f32 %v1415, %v1419
    %s1421 = scalar_lea.vmem [#allocation8], 4
    %1422 = vst [vmem:[%s1421] sm:$0x3] %v1420
    %s1423 = scalar_lea.vmem [#allocation2], 6
    %v1424 = vld [vmem:[%s1423] sm:$0x3]
    %v1425 = vld [vmem:[#allocation5] sm:$0xff]
    %v1426 = vld [vmem:[#allocation5 + $0x8] sm:$0xff]
    %v1427 = vld [vmem:[#allocation5 + $0x10] sm:$0xff]
    %v1428 = vld [vmem:[#allocation5 + $0x18] sm:$0xff]
    %v1429 = vld [vmem:[#allocation5 + $0x20] sm:$0xff]
    %v1430 = vld [vmem:[#allocation5 + $0x28] sm:$0xff]
    %v1431 = vld [vmem:[#allocation5 + $0x30] sm:$0xff]
    %v1432 = vld [vmem:[#allocation5 + $0x38] sm:$0xff]
    %v1433 = vld [vmem:[#allocation5 + $0x40] sm:$0xff]
    %v1434 = vld [vmem:[#allocation5 + $0x48] sm:$0xff]
    %v1435 = vld [vmem:[#allocation5 + $0x50] sm:$0xff]
    %v1436 = vld [vmem:[#allocation5 + $0x58] sm:$0xff]
    %v1437 = vld [vmem:[#allocation5 + $0x60] sm:$0xff]
    %v1438 = vld [vmem:[#allocation5 + $0x68] sm:$0xff]
    %v1439 = vld [vmem:[#allocation5 + $0x70] sm:$0xff]
    %v1440 = vld [vmem:[#allocation5 + $0x78] sm:$0xff]
    %v1441 = vld [vmem:[#allocation5 + $0x80] sm:$0xff]
    %v1442 = vld [vmem:[#allocation5 + $0x88] sm:$0xff]
    %v1443 = vld [vmem:[#allocation5 + $0x90] sm:$0xff]
    %v1444 = vld [vmem:[#allocation5 + $0x98] sm:$0xff]
    %v1445 = vld [vmem:[#allocation5 + $0xa0] sm:$0xff]
    %v1446 = vld [vmem:[#allocation5 + $0xa8] sm:$0xff]
    %v1447 = vld [vmem:[#allocation5 + $0xb0] sm:$0xff]
    %v1448 = vld [vmem:[#allocation5 + $0xb8] sm:$0xff]
    %v1449 = vld [vmem:[#allocation5 + $0xc0] sm:$0xff]
    %v1450 = vld [vmem:[#allocation5 + $0xc8] sm:$0xff]
    %v1451 = vld [vmem:[#allocation5 + $0xd0] sm:$0xff]
    %v1452 = vld [vmem:[#allocation5 + $0xd8] sm:$0xff]
    %v1453 = vld [vmem:[#allocation5 + $0xe0] sm:$0xff]
    %v1454 = vld [vmem:[#allocation5 + $0xe8] sm:$0xff]
    %v1455 = vld [vmem:[#allocation5 + $0xf0] sm:$0xff]
    %v1456 = vld [vmem:[#allocation5 + $0xf8] sm:$0xff]
    %v1457 = vld [vmem:[#allocation5 + $0x100] sm:$0xff]
    %v1458 = vld [vmem:[#allocation5 + $0x108] sm:$0xff]
    %v1459 = vld [vmem:[#allocation5 + $0x110] sm:$0xff]
    %v1460 = vld [vmem:[#allocation5 + $0x118] sm:$0xff]
    %v1461 = vld [vmem:[#allocation5 + $0x120] sm:$0xff]
    %v1462 = vld [vmem:[#allocation5 + $0x128] sm:$0xff]
    %v1463 = vld [vmem:[#allocation5 + $0x130] sm:$0xff]
    %v1464 = vld [vmem:[#allocation5 + $0x138] sm:$0xff]
    %v1465 = vld [vmem:[#allocation5 + $0x140] sm:$0xff]
    %v1466 = vld [vmem:[#allocation5 + $0x148] sm:$0xff]
    %v1467 = vld [vmem:[#allocation5 + $0x150] sm:$0xff]
    %v1468 = vld [vmem:[#allocation5 + $0x158] sm:$0xff]
    %v1469 = vld [vmem:[#allocation5 + $0x160] sm:$0xff]
    %v1470 = vld [vmem:[#allocation5 + $0x168] sm:$0xff]
    %v1471 = vld [vmem:[#allocation5 + $0x170] sm:$0xff]
    %v1472 = vld [vmem:[#allocation5 + $0x178] sm:$0xff]
    %v1473 = vld [vmem:[#allocation5 + $0x180] sm:$0xff]
    %v1474 = vld [vmem:[#allocation5 + $0x188] sm:$0xff]
    %v1475 = vld [vmem:[#allocation5 + $0x190] sm:$0xff]
    %v1476 = vld [vmem:[#allocation5 + $0x198] sm:$0xff]
    %v1477 = vld [vmem:[#allocation5 + $0x1a0] sm:$0xff]
    %v1478 = vld [vmem:[#allocation5 + $0x1a8] sm:$0xff]
    %v1479 = vld [vmem:[#allocation5 + $0x1b0] sm:$0xff]
    %v1480 = vld [vmem:[#allocation5 + $0x1b8] sm:$0xff]
    %v1481 = vld [vmem:[#allocation5 + $0x1c0] sm:$0xff]
    %v1482 = vld [vmem:[#allocation5 + $0x1c8] sm:$0xff]
    %v1483 = vld [vmem:[#allocation5 + $0x1d0] sm:$0xff]
    %v1484 = vld [vmem:[#allocation5 + $0x1d8] sm:$0xff]
    %v1485 = vld [vmem:[#allocation5 + $0x1e0] sm:$0xff]
    %v1486 = vld [vmem:[#allocation5 + $0x1e8] sm:$0xff]
    %v1487 = vld [vmem:[#allocation5 + $0x1f0] sm:$0xff]
    %v1488 = vld [vmem:[#allocation5 + $0x1f8] sm:$0xff]
    %v1489 = vld [vmem:[#allocation7] sm:$0xff]
    %v1490 = vld [vmem:[#allocation7 + $0x8] sm:$0xff]
    %v1491 = vld [vmem:[#allocation7 + $0x10] sm:$0xff]
    %v1492 = vld [vmem:[#allocation7 + $0x18] sm:$0xff]
    %v1493 = vld [vmem:[#allocation7 + $0x20] sm:$0xff]
    %v1494 = vld [vmem:[#allocation7 + $0x28] sm:$0xff]
    %v1495 = vld [vmem:[#allocation7 + $0x30] sm:$0xff]
    %v1496 = vld [vmem:[#allocation7 + $0x38] sm:$0xff]
    %v1497 = vld [vmem:[#allocation7 + $0x40] sm:$0xff]
    %v1498 = vld [vmem:[#allocation7 + $0x48] sm:$0xff]
    %v1499 = vld [vmem:[#allocation7 + $0x50] sm:$0xff]
    %v1500 = vld [vmem:[#allocation7 + $0x58] sm:$0xff]
    %v1501 = vld [vmem:[#allocation7 + $0x60] sm:$0xff]
    %v1502 = vld [vmem:[#allocation7 + $0x68] sm:$0xff]
    %v1503 = vld [vmem:[#allocation7 + $0x70] sm:$0xff]
    %v1504 = vld [vmem:[#allocation7 + $0x78] sm:$0xff]
    %v1505 = vld [vmem:[#allocation7 + $0x80] sm:$0xff]
    %v1506 = vld [vmem:[#allocation7 + $0x88] sm:$0xff]
    %v1507 = vld [vmem:[#allocation7 + $0x90] sm:$0xff]
    %v1508 = vld [vmem:[#allocation7 + $0x98] sm:$0xff]
    %v1509 = vld [vmem:[#allocation7 + $0xa0] sm:$0xff]
    %v1510 = vld [vmem:[#allocation7 + $0xa8] sm:$0xff]
    %v1511 = vld [vmem:[#allocation7 + $0xb0] sm:$0xff]
    %v1512 = vld [vmem:[#allocation7 + $0xb8] sm:$0xff]
    %v1513 = vld [vmem:[#allocation7 + $0xc0] sm:$0xff]
    %v1514 = vld [vmem:[#allocation7 + $0xc8] sm:$0xff]
    %v1515 = vld [vmem:[#allocation7 + $0xd0] sm:$0xff]
    %v1516 = vld [vmem:[#allocation7 + $0xd8] sm:$0xff]
    %v1517 = vld [vmem:[#allocation7 + $0xe0] sm:$0xff]
    %v1518 = vld [vmem:[#allocation7 + $0xe8] sm:$0xff]
    %v1519 = vld [vmem:[#allocation7 + $0xf0] sm:$0xff]
    %v1520 = vld [vmem:[#allocation7 + $0xf8] sm:$0xff]
    %v1521 = vld [vmem:[#allocation7 + $0x100] sm:$0xff]
    %v1522 = vld [vmem:[#allocation7 + $0x108] sm:$0xff]
    %v1523 = vld [vmem:[#allocation7 + $0x110] sm:$0xff]
    %v1524 = vld [vmem:[#allocation7 + $0x118] sm:$0xff]
    %v1525 = vld [vmem:[#allocation7 + $0x120] sm:$0xff]
    %v1526 = vld [vmem:[#allocation7 + $0x128] sm:$0xff]
    %v1527 = vld [vmem:[#allocation7 + $0x130] sm:$0xff]
    %v1528 = vld [vmem:[#allocation7 + $0x138] sm:$0xff]
    %v1529 = vld [vmem:[#allocation7 + $0x140] sm:$0xff]
    %v1530 = vld [vmem:[#allocation7 + $0x148] sm:$0xff]
    %v1531 = vld [vmem:[#allocation7 + $0x150] sm:$0xff]
    %v1532 = vld [vmem:[#allocation7 + $0x158] sm:$0xff]
    %v1533 = vld [vmem:[#allocation7 + $0x160] sm:$0xff]
    %v1534 = vld [vmem:[#allocation7 + $0x168] sm:$0xff]
    %v1535 = vld [vmem:[#allocation7 + $0x170] sm:$0xff]
    %v1536 = vld [vmem:[#allocation7 + $0x178] sm:$0xff]
    %v1537 = vld [vmem:[#allocation7 + $0x180] sm:$0xff]
    %v1538 = vld [vmem:[#allocation7 + $0x188] sm:$0xff]
    %v1539 = vld [vmem:[#allocation7 + $0x190] sm:$0xff]
    %v1540 = vld [vmem:[#allocation7 + $0x198] sm:$0xff]
    %v1541 = vld [vmem:[#allocation7 + $0x1a0] sm:$0xff]
    %v1542 = vld [vmem:[#allocation7 + $0x1a8] sm:$0xff]
    %v1543 = vld [vmem:[#allocation7 + $0x1b0] sm:$0xff]
    %v1544 = vld [vmem:[#allocation7 + $0x1b8] sm:$0xff]
    %v1545 = vld [vmem:[#allocation7 + $0x1c0] sm:$0xff]
    %v1546 = vld [vmem:[#allocation7 + $0x1c8] sm:$0xff]
    %v1547 = vld [vmem:[#allocation7 + $0x1d0] sm:$0xff]
    %v1548 = vld [vmem:[#allocation7 + $0x1d8] sm:$0xff]
    %v1549 = vld [vmem:[#allocation7 + $0x1e0] sm:$0xff]
    %v1550 = vld [vmem:[#allocation7 + $0x1e8] sm:$0xff]
    %v1551 = vld [vmem:[#allocation7 + $0x1f0] sm:$0xff]
    %v1552 = vld [vmem:[#allocation7 + $0x1f8] sm:$0xff]
    %1553 = vmatprep.subr.mxu0 %v1550
    %1554 = vmatpush1.msra.mxu0 %v1549
    %1555 = vmatprep.subr.mxu0 %v1546
    %1556 = vmatpush1.msra.mxu0 %v1545
    %1557 = vmatprep.subr.mxu0 %v1542
    %1558 = vmatpush1.msra.mxu0 %v1541
    %1559 = vmatprep.subr.mxu0 %v1538
    %1560 = vmatpush1.msra.mxu0 %v1537
    %1561 = vmatprep.subr.mxu0 %v1534
    %1562 = vmatpush1.msra.mxu0 %v1533
    %1563 = vmatprep.subr.mxu0 %v1530
    %1564 = vmatpush1.msra.mxu0 %v1529
    %1565 = vmatprep.subr.mxu0 %v1526
    %1566 = vmatpush1.msra.mxu0 %v1525
    %1567 = vmatprep.subr.mxu0 %v1522
    %1568 = vmatpush1.msra.mxu0 %v1521
    %1569 = vmatprep.subr.mxu0 %v1518
    %1570 = vmatpush1.msra.mxu0 %v1517
    %1571 = vmatprep.subr.mxu0 %v1514
    %1572 = vmatpush1.msra.mxu0 %v1513
    %1573 = vmatprep.subr.mxu0 %v1510
    %1574 = vmatpush1.msra.mxu0 %v1509
    %1575 = vmatprep.subr.mxu0 %v1506
    %1576 = vmatpush1.msra.mxu0 %v1505
    %1577 = vmatprep.subr.mxu0 %v1502
    %1578 = vmatpush1.msra.mxu0 %v1501
    %1579 = vmatprep.subr.mxu0 %v1498
    %1580 = vmatpush1.msra.mxu0 %v1497
    %1581 = vmatprep.subr.mxu0 %v1494
    %1582 = vmatpush1.msra.mxu0 %v1493
    %1583 = vmatprep.subr.mxu0 %v1490
    %1584 = vmatpush1.msra.mxu0 %v1489
    %1585 = vmatprep.subr.mxu0 0.0
    %1586 = vmatpush2.msra.mxu0 0.0
    %1587 = vmatprep.subr.mxu0 0.0
    %1588 = vmatpush2.msra.mxu0 0.0
    %1589 = vmatprep.subr.mxu0 0.0
    %1590 = vmatpush2.msra.mxu0 0.0
    %1591 = vmatprep.subr.mxu0 0.0
    %1592 = vmatpush2.msra.mxu0 0.0
    %1593 = vmatprep.subr.mxu0 0.0
    %1594 = vmatpush2.msra.mxu0 0.0
    %1595 = vmatprep.subr.mxu0 0.0
    %1596 = vmatpush2.msra.mxu0 0.0
    %1597 = vmatprep.subr.mxu0 0.0
    %1598 = vmatpush2.msra.mxu0 0.0
    %1599 = vmatprep.subr.mxu0 0.0
    %1600 = vmatpush2.msra.mxu0 0.0
    %1601 = vmatprep.subr.mxu0 0.0
    %1602 = vmatpush2.msra.mxu0 0.0
    %1603 = vmatprep.subr.mxu0 0.0
    %1604 = vmatpush2.msra.mxu0 0.0
    %1605 = vmatprep.subr.mxu0 0.0
    %1606 = vmatpush2.msra.mxu0 0.0
    %1607 = vmatprep.subr.mxu0 0.0
    %1608 = vmatpush2.msra.mxu0 0.0
    %1609 = vmatprep.subr.mxu0 0.0
    %1610 = vmatpush2.msra.mxu0 0.0
    %1611 = vmatprep.subr.mxu0 0.0
    %1612 = vmatpush2.msra.mxu0 0.0
    %1613 = vmatprep.subr.mxu0 0.0
    %1614 = vmatpush2.msra.mxu0 0.0
    %1615 = vmatprep.subr.mxu0 0.0
    %1616 = vmatpush2.msra.mxu0 0.0
    %1617 = vmatprep.mubr.f32.mxu0 0.0
    %1618 = vmatmul.mubr.f32.gmra.mxu0 %v1420
    %v1619 = vpop.f32.mrf.mxu0
    %v1620 = vadd.f32 0.0, %v1619
    %v1621 = vpop.f32.mrf.mxu0
    %v1622 = vadd.f32 0.0, %v1621
    %1623 = vdwg.mxu0
    %1624 = vmatprep.subr.mxu0 %v1552
    %1625 = vmatpush1.msra.mxu0 %v1551
    %1626 = vmatprep.subr.mxu0 %v1548
    %1627 = vmatpush1.msra.mxu0 %v1547
    %1628 = vmatprep.subr.mxu0 %v1544
    %1629 = vmatpush1.msra.mxu0 %v1543
    %1630 = vmatprep.subr.mxu0 %v1540
    %1631 = vmatpush1.msra.mxu0 %v1539
    %1632 = vmatprep.subr.mxu0 %v1536
    %1633 = vmatpush1.msra.mxu0 %v1535
    %1634 = vmatprep.subr.mxu0 %v1532
    %1635 = vmatpush1.msra.mxu0 %v1531
    %1636 = vmatprep.subr.mxu0 %v1528
    %1637 = vmatpush1.msra.mxu0 %v1527
    %1638 = vmatprep.subr.mxu0 %v1524
    %1639 = vmatpush1.msra.mxu0 %v1523
    %1640 = vmatprep.subr.mxu0 %v1520
    %1641 = vmatpush1.msra.mxu0 %v1519
    %1642 = vmatprep.subr.mxu0 %v1516
    %1643 = vmatpush1.msra.mxu0 %v1515
    %1644 = vmatprep.subr.mxu0 %v1512
    %1645 = vmatpush1.msra.mxu0 %v1511
    %1646 = vmatprep.subr.mxu0 %v1508
    %1647 = vmatpush1.msra.mxu0 %v1507
    %1648 = vmatprep.subr.mxu0 %v1504
    %1649 = vmatpush1.msra.mxu0 %v1503
    %1650 = vmatprep.subr.mxu0 %v1500
    %1651 = vmatpush1.msra.mxu0 %v1499
    %1652 = vmatprep.subr.mxu0 %v1496
    %1653 = vmatpush1.msra.mxu0 %v1495
    %1654 = vmatprep.subr.mxu0 %v1492
    %1655 = vmatpush1.msra.mxu0 %v1491
    %1656 = vmatprep.subr.mxu0 0.0
    %1657 = vmatpush2.msra.mxu0 0.0
    %1658 = vmatprep.subr.mxu0 0.0
    %1659 = vmatpush2.msra.mxu0 0.0
    %1660 = vmatprep.subr.mxu0 0.0
    %1661 = vmatpush2.msra.mxu0 0.0
    %1662 = vmatprep.subr.mxu0 0.0
    %1663 = vmatpush2.msra.mxu0 0.0
    %1664 = vmatprep.subr.mxu0 0.0
    %1665 = vmatpush2.msra.mxu0 0.0
    %1666 = vmatprep.subr.mxu0 0.0
    %1667 = vmatpush2.msra.mxu0 0.0
    %1668 = vmatprep.subr.mxu0 0.0
    %1669 = vmatpush2.msra.mxu0 0.0
    %1670 = vmatprep.subr.mxu0 0.0
    %1671 = vmatpush2.msra.mxu0 0.0
    %1672 = vmatprep.subr.mxu0 0.0
    %1673 = vmatpush2.msra.mxu0 0.0
    %1674 = vmatprep.subr.mxu0 0.0
    %1675 = vmatpush2.msra.mxu0 0.0
    %1676 = vmatprep.subr.mxu0 0.0
    %1677 = vmatpush2.msra.mxu0 0.0
    %1678 = vmatprep.subr.mxu0 0.0
    %1679 = vmatpush2.msra.mxu0 0.0
    %1680 = vmatprep.subr.mxu0 0.0
    %1681 = vmatpush2.msra.mxu0 0.0
    %1682 = vmatprep.subr.mxu0 0.0
    %1683 = vmatpush2.msra.mxu0 0.0
    %1684 = vmatprep.subr.mxu0 0.0
    %1685 = vmatpush2.msra.mxu0 0.0
    %1686 = vmatprep.subr.mxu0 0.0
    %1687 = vmatpush2.msra.mxu0 0.0
    %1688 = vmatprep.mubr.f32.mxu0 0.0
    %1689 = vmatmul.mubr.f32.gmra.mxu0 %v1420
    %v1690 = vpop.f32.mrf.mxu0
    %v1691 = vadd.f32 0.0, %v1690
    %v1692 = vpop.f32.mrf.mxu0
    %v1693 = vadd.f32 0.0, %v1692
    %1694 = vdwg.mxu0
    %1695 = vmatprep.subr.mxu0 %v1486
    %1696 = vmatpush1.msra.mxu0 %v1485
    %1697 = vmatprep.subr.mxu0 %v1482
    %1698 = vmatpush1.msra.mxu0 %v1481
    %1699 = vmatprep.subr.mxu0 %v1478
    %1700 = vmatpush1.msra.mxu0 %v1477
    %1701 = vmatprep.subr.mxu0 %v1474
    %1702 = vmatpush1.msra.mxu0 %v1473
    %1703 = vmatprep.subr.mxu0 %v1470
    %1704 = vmatpush1.msra.mxu0 %v1469
    %1705 = vmatprep.subr.mxu0 %v1466
    %1706 = vmatpush1.msra.mxu0 %v1465
    %1707 = vmatprep.subr.mxu0 %v1462
    %1708 = vmatpush1.msra.mxu0 %v1461
    %1709 = vmatprep.subr.mxu0 %v1458
    %1710 = vmatpush1.msra.mxu0 %v1457
    %1711 = vmatprep.subr.mxu0 %v1454
    %1712 = vmatpush1.msra.mxu0 %v1453
    %1713 = vmatprep.subr.mxu0 %v1450
    %1714 = vmatpush1.msra.mxu0 %v1449
    %1715 = vmatprep.subr.mxu0 %v1446
    %1716 = vmatpush1.msra.mxu0 %v1445
    %1717 = vmatprep.subr.mxu0 %v1442
    %1718 = vmatpush1.msra.mxu0 %v1441
    %1719 = vmatprep.subr.mxu0 %v1438
    %1720 = vmatpush1.msra.mxu0 %v1437
    %1721 = vmatprep.subr.mxu0 %v1434
    %1722 = vmatpush1.msra.mxu0 %v1433
    %1723 = vmatprep.subr.mxu0 %v1430
    %1724 = vmatpush1.msra.mxu0 %v1429
    %1725 = vmatprep.subr.mxu0 %v1426
    %1726 = vmatpush1.msra.mxu0 %v1425
    %1727 = vmatprep.subr.mxu0 0.0
    %1728 = vmatpush2.msra.mxu0 0.0
    %1729 = vmatprep.subr.mxu0 0.0
    %1730 = vmatpush2.msra.mxu0 0.0
    %1731 = vmatprep.subr.mxu0 0.0
    %1732 = vmatpush2.msra.mxu0 0.0
    %1733 = vmatprep.subr.mxu0 0.0
    %1734 = vmatpush2.msra.mxu0 0.0
    %1735 = vmatprep.subr.mxu0 0.0
    %1736 = vmatpush2.msra.mxu0 0.0
    %1737 = vmatprep.subr.mxu0 0.0
    %1738 = vmatpush2.msra.mxu0 0.0
    %1739 = vmatprep.subr.mxu0 0.0
    %1740 = vmatpush2.msra.mxu0 0.0
    %1741 = vmatprep.subr.mxu0 0.0
    %1742 = vmatpush2.msra.mxu0 0.0
    %1743 = vmatprep.subr.mxu0 0.0
    %1744 = vmatpush2.msra.mxu0 0.0
    %1745 = vmatprep.subr.mxu0 0.0
    %1746 = vmatpush2.msra.mxu0 0.0
    %1747 = vmatprep.subr.mxu0 0.0
    %1748 = vmatpush2.msra.mxu0 0.0
    %1749 = vmatprep.subr.mxu0 0.0
    %1750 = vmatpush2.msra.mxu0 0.0
    %1751 = vmatprep.subr.mxu0 0.0
    %1752 = vmatpush2.msra.mxu0 0.0
    %1753 = vmatprep.subr.mxu0 0.0
    %1754 = vmatpush2.msra.mxu0 0.0
    %1755 = vmatprep.subr.mxu0 0.0
    %1756 = vmatpush2.msra.mxu0 0.0
    %1757 = vmatprep.subr.mxu0 0.0
    %1758 = vmatpush2.msra.mxu0 0.0
    %1759 = vmatprep.mubr.f32.mxu0 0.0
    %1760 = vmatmul.mubr.f32.gmra.mxu0 %v1424
    %v1761 = vpop.f32.mrf.mxu0
    %v1762 = vadd.f32 %v1620, %v1761
    %v1763 = vpop.f32.mrf.mxu0
    %v1764 = vadd.f32 %v1622, %v1763
    %1765 = vdwg.mxu0
    %1766 = vmatprep.subr.mxu0 %v1488
    %1767 = vmatpush1.msra.mxu0 %v1487
    %1768 = vmatprep.subr.mxu0 %v1484
    %1769 = vmatpush1.msra.mxu0 %v1483
    %1770 = vmatprep.subr.mxu0 %v1480
    %1771 = vmatpush1.msra.mxu0 %v1479
    %1772 = vmatprep.subr.mxu0 %v1476
    %1773 = vmatpush1.msra.mxu0 %v1475
    %1774 = vmatprep.subr.mxu0 %v1472
    %1775 = vmatpush1.msra.mxu0 %v1471
    %1776 = vmatprep.subr.mxu0 %v1468
    %1777 = vmatpush1.msra.mxu0 %v1467
    %1778 = vmatprep.subr.mxu0 %v1464
    %1779 = vmatpush1.msra.mxu0 %v1463
    %1780 = vmatprep.subr.mxu0 %v1460
    %1781 = vmatpush1.msra.mxu0 %v1459
    %1782 = vmatprep.subr.mxu0 %v1456
    %1783 = vmatpush1.msra.mxu0 %v1455
    %1784 = vmatprep.subr.mxu0 %v1452
    %1785 = vmatpush1.msra.mxu0 %v1451
    %1786 = vmatprep.subr.mxu0 %v1448
    %1787 = vmatpush1.msra.mxu0 %v1447
    %1788 = vmatprep.subr.mxu0 %v1444
    %1789 = vmatpush1.msra.mxu0 %v1443
    %1790 = vmatprep.subr.mxu0 %v1440
    %1791 = vmatpush1.msra.mxu0 %v1439
    %1792 = vmatprep.subr.mxu0 %v1436
    %1793 = vmatpush1.msra.mxu0 %v1435
    %1794 = vmatprep.subr.mxu0 %v1432
    %1795 = vmatpush1.msra.mxu0 %v1431
    %1796 = vmatprep.subr.mxu0 %v1428
    %1797 = vmatpush1.msra.mxu0 %v1427
    %1798 = vmatprep.subr.mxu0 0.0
    %1799 = vmatpush2.msra.mxu0 0.0
    %1800 = vmatprep.subr.mxu0 0.0
    %1801 = vmatpush2.msra.mxu0 0.0
    %1802 = vmatprep.subr.mxu0 0.0
    %1803 = vmatpush2.msra.mxu0 0.0
    %1804 = vmatprep.subr.mxu0 0.0
    %1805 = vmatpush2.msra.mxu0 0.0
    %1806 = vmatprep.subr.mxu0 0.0
    %1807 = vmatpush2.msra.mxu0 0.0
    %1808 = vmatprep.subr.mxu0 0.0
    %1809 = vmatpush2.msra.mxu0 0.0
    %1810 = vmatprep.subr.mxu0 0.0
    %1811 = vmatpush2.msra.mxu0 0.0
    %1812 = vmatprep.subr.mxu0 0.0
    %1813 = vmatpush2.msra.mxu0 0.0
    %1814 = vmatprep.subr.mxu0 0.0
    %1815 = vmatpush2.msra.mxu0 0.0
    %1816 = vmatprep.subr.mxu0 0.0
    %1817 = vmatpush2.msra.mxu0 0.0
    %1818 = vmatprep.subr.mxu0 0.0
    %1819 = vmatpush2.msra.mxu0 0.0
    %1820 = vmatprep.subr.mxu0 0.0
    %1821 = vmatpush2.msra.mxu0 0.0
    %1822 = vmatprep.subr.mxu0 0.0
    %1823 = vmatpush2.msra.mxu0 0.0
    %1824 = vmatprep.subr.mxu0 0.0
    %1825 = vmatpush2.msra.mxu0 0.0
    %1826 = vmatprep.subr.mxu0 0.0
    %1827 = vmatpush2.msra.mxu0 0.0
    %1828 = vmatprep.subr.mxu0 0.0
    %1829 = vmatpush2.msra.mxu0 0.0
    %1830 = vmatprep.mubr.f32.mxu0 0.0
    %1831 = vmatmul.mubr.f32.gmra.mxu0 %v1424
    %v1832 = vpop.f32.mrf.mxu0
    %v1833 = vadd.f32 %v1691, %v1832
    %v1834 = vpop.f32.mrf.mxu0
    %v1835 = vadd.f32 %v1693, %v1834
    %1836 = vdwg.mxu0
    %v1837 = vadd.f32 %v1762, %v74
    %v1838 = vadd.f32 %v1764, %v78
    %v1839 = vadd.f32 %v1833, %v82
    %v1840 = vadd.f32 %v1835, %v86
    %v1841 = vxor.u32 %v1837, 2147483648
    %v1842 = vmul.f32 %v1841, 1.442695
    %v1843 = vpow.pop %v1842
    %v1844 = vadd.f32 %v1843, 1.0
    %v1845 = vrcp.pop %v1844
    %v1846 = vmul.f32 1.0, %v1845
    %v1847 = vxor.u32 %v1838, 2147483648
    %v1848 = vmul.f32 %v1847, 1.442695
    %v1849 = vpow.pop %v1848
    %v1850 = vadd.f32 %v1849, 1.0
    %v1851 = vrcp.pop %v1850
    %v1852 = vmul.f32 1.0, %v1851
    %v1853 = vtanh.pop %v1839
    %v1854 = vxor.u32 %v1840, 2147483648
    %v1855 = vmul.f32 %v1854, 1.442695
    %v1856 = vpow.pop %v1855
    %v1857 = vadd.f32 %v1856, 1.0
    %v1858 = vrcp.pop %v1857
    %v1859 = vmul.f32 1.0, %v1858
    %v1860 = vmul.f32 %v1852, %v1418
    %v1861 = vmul.f32 %v1846, %v1853
    %v1862 = vadd.f32 %v1860, %v1861
    %v1863 = vtanh.pop %v1862
    %v1864 = vmul.f32 %v1859, %v1863
    %s1865 = scalar_lea.vmem [#allocation8], 6
    %1866 = vst [vmem:[%s1865] sm:$0x3] %v1864
    %s1867 = scalar_lea.vmem [#allocation2], 8
    %v1868 = vld [vmem:[%s1867] sm:$0x3]
    %v1869 = vld [vmem:[#allocation5] sm:$0xff]
    %v1870 = vld [vmem:[#allocation5 + $0x8] sm:$0xff]
    %v1871 = vld [vmem:[#allocation5 + $0x10] sm:$0xff]
    %v1872 = vld [vmem:[#allocation5 + $0x18] sm:$0xff]
    %v1873 = vld [vmem:[#allocation5 + $0x20] sm:$0xff]
    %v1874 = vld [vmem:[#allocation5 + $0x28] sm:$0xff]
    %v1875 = vld [vmem:[#allocation5 + $0x30] sm:$0xff]
    %v1876 = vld [vmem:[#allocation5 + $0x38] sm:$0xff]
    %v1877 = vld [vmem:[#allocation5 + $0x40] sm:$0xff]
    %v1878 = vld [vmem:[#allocation5 + $0x48] sm:$0xff]
    %v1879 = vld [vmem:[#allocation5 + $0x50] sm:$0xff]
    %v1880 = vld [vmem:[#allocation5 + $0x58] sm:$0xff]
    %v1881 = vld [vmem:[#allocation5 + $0x60] sm:$0xff]
    %v1882 = vld [vmem:[#allocation5 + $0x68] sm:$0xff]
    %v1883 = vld [vmem:[#allocation5 + $0x70] sm:$0xff]
    %v1884 = vld [vmem:[#allocation5 + $0x78] sm:$0xff]
    %v1885 = vld [vmem:[#allocation5 + $0x80] sm:$0xff]
    %v1886 = vld [vmem:[#allocation5 + $0x88] sm:$0xff]
    %v1887 = vld [vmem:[#allocation5 + $0x90] sm:$0xff]
    %v1888 = vld [vmem:[#allocation5 + $0x98] sm:$0xff]
    %v1889 = vld [vmem:[#allocation5 + $0xa0] sm:$0xff]
    %v1890 = vld [vmem:[#allocation5 + $0xa8] sm:$0xff]
    %v1891 = vld [vmem:[#allocation5 + $0xb0] sm:$0xff]
    %v1892 = vld [vmem:[#allocation5 + $0xb8] sm:$0xff]
    %v1893 = vld [vmem:[#allocation5 + $0xc0] sm:$0xff]
    %v1894 = vld [vmem:[#allocation5 + $0xc8] sm:$0xff]
    %v1895 = vld [vmem:[#allocation5 + $0xd0] sm:$0xff]
    %v1896 = vld [vmem:[#allocation5 + $0xd8] sm:$0xff]
    %v1897 = vld [vmem:[#allocation5 + $0xe0] sm:$0xff]
    %v1898 = vld [vmem:[#allocation5 + $0xe8] sm:$0xff]
    %v1899 = vld [vmem:[#allocation5 + $0xf0] sm:$0xff]
    %v1900 = vld [vmem:[#allocation5 + $0xf8] sm:$0xff]
    %v1901 = vld [vmem:[#allocation5 + $0x100] sm:$0xff]
    %v1902 = vld [vmem:[#allocation5 + $0x108] sm:$0xff]
    %v1903 = vld [vmem:[#allocation5 + $0x110] sm:$0xff]
    %v1904 = vld [vmem:[#allocation5 + $0x118] sm:$0xff]
    %v1905 = vld [vmem:[#allocation5 + $0x120] sm:$0xff]
    %v1906 = vld [vmem:[#allocation5 + $0x128] sm:$0xff]
    %v1907 = vld [vmem:[#allocation5 + $0x130] sm:$0xff]
    %v1908 = vld [vmem:[#allocation5 + $0x138] sm:$0xff]
    %v1909 = vld [vmem:[#allocation5 + $0x140] sm:$0xff]
    %v1910 = vld [vmem:[#allocation5 + $0x148] sm:$0xff]
    %v1911 = vld [vmem:[#allocation5 + $0x150] sm:$0xff]
    %v1912 = vld [vmem:[#allocation5 + $0x158] sm:$0xff]
    %v1913 = vld [vmem:[#allocation5 + $0x160] sm:$0xff]
    %v1914 = vld [vmem:[#allocation5 + $0x168] sm:$0xff]
    %v1915 = vld [vmem:[#allocation5 + $0x170] sm:$0xff]
    %v1916 = vld [vmem:[#allocation5 + $0x178] sm:$0xff]
    %v1917 = vld [vmem:[#allocation5 + $0x180] sm:$0xff]
    %v1918 = vld [vmem:[#allocation5 + $0x188] sm:$0xff]
    %v1919 = vld [vmem:[#allocation5 + $0x190] sm:$0xff]
    %v1920 = vld [vmem:[#allocation5 + $0x198] sm:$0xff]
    %v1921 = vld [vmem:[#allocation5 + $0x1a0] sm:$0xff]
    %v1922 = vld [vmem:[#allocation5 + $0x1a8] sm:$0xff]
    %v1923 = vld [vmem:[#allocation5 + $0x1b0] sm:$0xff]
    %v1924 = vld [vmem:[#allocation5 + $0x1b8] sm:$0xff]
    %v1925 = vld [vmem:[#allocation5 + $0x1c0] sm:$0xff]
    %v1926 = vld [vmem:[#allocation5 + $0x1c8] sm:$0xff]
    %v1927 = vld [vmem:[#allocation5 + $0x1d0] sm:$0xff]
    %v1928 = vld [vmem:[#allocation5 + $0x1d8] sm:$0xff]
    %v1929 = vld [vmem:[#allocation5 + $0x1e0] sm:$0xff]
    %v1930 = vld [vmem:[#allocation5 + $0x1e8] sm:$0xff]
    %v1931 = vld [vmem:[#allocation5 + $0x1f0] sm:$0xff]
    %v1932 = vld [vmem:[#allocation5 + $0x1f8] sm:$0xff]
    %v1933 = vld [vmem:[#allocation7] sm:$0xff]
    %v1934 = vld [vmem:[#allocation7 + $0x8] sm:$0xff]
    %v1935 = vld [vmem:[#allocation7 + $0x10] sm:$0xff]
    %v1936 = vld [vmem:[#allocation7 + $0x18] sm:$0xff]
    %v1937 = vld [vmem:[#allocation7 + $0x20] sm:$0xff]
    %v1938 = vld [vmem:[#allocation7 + $0x28] sm:$0xff]
    %v1939 = vld [vmem:[#allocation7 + $0x30] sm:$0xff]
    %v1940 = vld [vmem:[#allocation7 + $0x38] sm:$0xff]
    %v1941 = vld [vmem:[#allocation7 + $0x40] sm:$0xff]
    %v1942 = vld [vmem:[#allocation7 + $0x48] sm:$0xff]
    %v1943 = vld [vmem:[#allocation7 + $0x50] sm:$0xff]
    %v1944 = vld [vmem:[#allocation7 + $0x58] sm:$0xff]
    %v1945 = vld [vmem:[#allocation7 + $0x60] sm:$0xff]
    %v1946 = vld [vmem:[#allocation7 + $0x68] sm:$0xff]
    %v1947 = vld [vmem:[#allocation7 + $0x70] sm:$0xff]
    %v1948 = vld [vmem:[#allocation7 + $0x78] sm:$0xff]
    %v1949 = vld [vmem:[#allocation7 + $0x80] sm:$0xff]
    %v1950 = vld [vmem:[#allocation7 + $0x88] sm:$0xff]
    %v1951 = vld [vmem:[#allocation7 + $0x90] sm:$0xff]
    %v1952 = vld [vmem:[#allocation7 + $0x98] sm:$0xff]
    %v1953 = vld [vmem:[#allocation7 + $0xa0] sm:$0xff]
    %v1954 = vld [vmem:[#allocation7 + $0xa8] sm:$0xff]
    %v1955 = vld [vmem:[#allocation7 + $0xb0] sm:$0xff]
    %v1956 = vld [vmem:[#allocation7 + $0xb8] sm:$0xff]
    %v1957 = vld [vmem:[#allocation7 + $0xc0] sm:$0xff]
    %v1958 = vld [vmem:[#allocation7 + $0xc8] sm:$0xff]
    %v1959 = vld [vmem:[#allocation7 + $0xd0] sm:$0xff]
    %v1960 = vld [vmem:[#allocation7 + $0xd8] sm:$0xff]
    %v1961 = vld [vmem:[#allocation7 + $0xe0] sm:$0xff]
    %v1962 = vld [vmem:[#allocation7 + $0xe8] sm:$0xff]
    %v1963 = vld [vmem:[#allocation7 + $0xf0] sm:$0xff]
    %v1964 = vld [vmem:[#allocation7 + $0xf8] sm:$0xff]
    %v1965 = vld [vmem:[#allocation7 + $0x100] sm:$0xff]
    %v1966 = vld [vmem:[#allocation7 + $0x108] sm:$0xff]
    %v1967 = vld [vmem:[#allocation7 + $0x110] sm:$0xff]
    %v1968 = vld [vmem:[#allocation7 + $0x118] sm:$0xff]
    %v1969 = vld [vmem:[#allocation7 + $0x120] sm:$0xff]
    %v1970 = vld [vmem:[#allocation7 + $0x128] sm:$0xff]
    %v1971 = vld [vmem:[#allocation7 + $0x130] sm:$0xff]
    %v1972 = vld [vmem:[#allocation7 + $0x138] sm:$0xff]
    %v1973 = vld [vmem:[#allocation7 + $0x140] sm:$0xff]
    %v1974 = vld [vmem:[#allocation7 + $0x148] sm:$0xff]
    %v1975 = vld [vmem:[#allocation7 + $0x150] sm:$0xff]
    %v1976 = vld [vmem:[#allocation7 + $0x158] sm:$0xff]
    %v1977 = vld [vmem:[#allocation7 + $0x160] sm:$0xff]
    %v1978 = vld [vmem:[#allocation7 + $0x168] sm:$0xff]
    %v1979 = vld [vmem:[#allocation7 + $0x170] sm:$0xff]
    %v1980 = vld [vmem:[#allocation7 + $0x178] sm:$0xff]
    %v1981 = vld [vmem:[#allocation7 + $0x180] sm:$0xff]
    %v1982 = vld [vmem:[#allocation7 + $0x188] sm:$0xff]
    %v1983 = vld [vmem:[#allocation7 + $0x190] sm:$0xff]
    %v1984 = vld [vmem:[#allocation7 + $0x198] sm:$0xff]
    %v1985 = vld [vmem:[#allocation7 + $0x1a0] sm:$0xff]
    %v1986 = vld [vmem:[#allocation7 + $0x1a8] sm:$0xff]
    %v1987 = vld [vmem:[#allocation7 + $0x1b0] sm:$0xff]
    %v1988 = vld [vmem:[#allocation7 + $0x1b8] sm:$0xff]
    %v1989 = vld [vmem:[#allocation7 + $0x1c0] sm:$0xff]
    %v1990 = vld [vmem:[#allocation7 + $0x1c8] sm:$0xff]
    %v1991 = vld [vmem:[#allocation7 + $0x1d0] sm:$0xff]
    %v1992 = vld [vmem:[#allocation7 + $0x1d8] sm:$0xff]
    %v1993 = vld [vmem:[#allocation7 + $0x1e0] sm:$0xff]
    %v1994 = vld [vmem:[#allocation7 + $0x1e8] sm:$0xff]
    %v1995 = vld [vmem:[#allocation7 + $0x1f0] sm:$0xff]
    %v1996 = vld [vmem:[#allocation7 + $0x1f8] sm:$0xff]
    %1997 = vmatprep.subr.mxu0 %v1994
    %1998 = vmatpush1.msra.mxu0 %v1993
    %1999 = vmatprep.subr.mxu0 %v1990
    %2000 = vmatpush1.msra.mxu0 %v1989
    %2001 = vmatprep.subr.mxu0 %v1986
    %2002 = vmatpush1.msra.mxu0 %v1985
    %2003 = vmatprep.subr.mxu0 %v1982
    %2004 = vmatpush1.msra.mxu0 %v1981
    %2005 = vmatprep.subr.mxu0 %v1978
    %2006 = vmatpush1.msra.mxu0 %v1977
    %2007 = vmatprep.subr.mxu0 %v1974
    %2008 = vmatpush1.msra.mxu0 %v1973
    %2009 = vmatprep.subr.mxu0 %v1970
    %2010 = vmatpush1.msra.mxu0 %v1969
    %2011 = vmatprep.subr.mxu0 %v1966
    %2012 = vmatpush1.msra.mxu0 %v1965
    %2013 = vmatprep.subr.mxu0 %v1962
    %2014 = vmatpush1.msra.mxu0 %v1961
    %2015 = vmatprep.subr.mxu0 %v1958
    %2016 = vmatpush1.msra.mxu0 %v1957
    %2017 = vmatprep.subr.mxu0 %v1954
    %2018 = vmatpush1.msra.mxu0 %v1953
    %2019 = vmatprep.subr.mxu0 %v1950
    %2020 = vmatpush1.msra.mxu0 %v1949
    %2021 = vmatprep.subr.mxu0 %v1946
    %2022 = vmatpush1.msra.mxu0 %v1945
    %2023 = vmatprep.subr.mxu0 %v1942
    %2024 = vmatpush1.msra.mxu0 %v1941
    %2025 = vmatprep.subr.mxu0 %v1938
    %2026 = vmatpush1.msra.mxu0 %v1937
    %2027 = vmatprep.subr.mxu0 %v1934
    %2028 = vmatpush1.msra.mxu0 %v1933
    %2029 = vmatprep.subr.mxu0 0.0
    %2030 = vmatpush2.msra.mxu0 0.0
    %2031 = vmatprep.subr.mxu0 0.0
    %2032 = vmatpush2.msra.mxu0 0.0
    %2033 = vmatprep.subr.mxu0 0.0
    %2034 = vmatpush2.msra.mxu0 0.0
    %2035 = vmatprep.subr.mxu0 0.0
    %2036 = vmatpush2.msra.mxu0 0.0
    %2037 = vmatprep.subr.mxu0 0.0
    %2038 = vmatpush2.msra.mxu0 0.0
    %2039 = vmatprep.subr.mxu0 0.0
    %2040 = vmatpush2.msra.mxu0 0.0
    %2041 = vmatprep.subr.mxu0 0.0
    %2042 = vmatpush2.msra.mxu0 0.0
    %2043 = vmatprep.subr.mxu0 0.0
    %2044 = vmatpush2.msra.mxu0 0.0
    %2045 = vmatprep.subr.mxu0 0.0
    %2046 = vmatpush2.msra.mxu0 0.0
    %2047 = vmatprep.subr.mxu0 0.0
    %2048 = vmatpush2.msra.mxu0 0.0
    %2049 = vmatprep.subr.mxu0 0.0
    %2050 = vmatpush2.msra.mxu0 0.0
    %2051 = vmatprep.subr.mxu0 0.0
    %2052 = vmatpush2.msra.mxu0 0.0
    %2053 = vmatprep.subr.mxu0 0.0
    %2054 = vmatpush2.msra.mxu0 0.0
    %2055 = vmatprep.subr.mxu0 0.0
    %2056 = vmatpush2.msra.mxu0 0.0
    %2057 = vmatprep.subr.mxu0 0.0
    %2058 = vmatpush2.msra.mxu0 0.0
    %2059 = vmatprep.subr.mxu0 0.0
    %2060 = vmatpush2.msra.mxu0 0.0
    %2061 = vmatprep.mubr.f32.mxu0 0.0
    %2062 = vmatmul.mubr.f32.gmra.mxu0 %v1864
    %v2063 = vpop.f32.mrf.mxu0
    %v2064 = vadd.f32 0.0, %v2063
    %v2065 = vpop.f32.mrf.mxu0
    %v2066 = vadd.f32 0.0, %v2065
    %2067 = vdwg.mxu0
    %2068 = vmatprep.subr.mxu0 %v1996
    %2069 = vmatpush1.msra.mxu0 %v1995
    %2070 = vmatprep.subr.mxu0 %v1992
    %2071 = vmatpush1.msra.mxu0 %v1991
    %2072 = vmatprep.subr.mxu0 %v1988
    %2073 = vmatpush1.msra.mxu0 %v1987
    %2074 = vmatprep.subr.mxu0 %v1984
    %2075 = vmatpush1.msra.mxu0 %v1983
    %2076 = vmatprep.subr.mxu0 %v1980
    %2077 = vmatpush1.msra.mxu0 %v1979
    %2078 = vmatprep.subr.mxu0 %v1976
    %2079 = vmatpush1.msra.mxu0 %v1975
    %2080 = vmatprep.subr.mxu0 %v1972
    %2081 = vmatpush1.msra.mxu0 %v1971
    %2082 = vmatprep.subr.mxu0 %v1968
    %2083 = vmatpush1.msra.mxu0 %v1967
    %2084 = vmatprep.subr.mxu0 %v1964
    %2085 = vmatpush1.msra.mxu0 %v1963
    %2086 = vmatprep.subr.mxu0 %v1960
    %2087 = vmatpush1.msra.mxu0 %v1959
    %2088 = vmatprep.subr.mxu0 %v1956
    %2089 = vmatpush1.msra.mxu0 %v1955
    %2090 = vmatprep.subr.mxu0 %v1952
    %2091 = vmatpush1.msra.mxu0 %v1951
    %2092 = vmatprep.subr.mxu0 %v1948
    %2093 = vmatpush1.msra.mxu0 %v1947
    %2094 = vmatprep.subr.mxu0 %v1944
    %2095 = vmatpush1.msra.mxu0 %v1943
    %2096 = vmatprep.subr.mxu0 %v1940
    %2097 = vmatpush1.msra.mxu0 %v1939
    %2098 = vmatprep.subr.mxu0 %v1936
    %2099 = vmatpush1.msra.mxu0 %v1935
    %2100 = vmatprep.subr.mxu0 0.0
    %2101 = vmatpush2.msra.mxu0 0.0
    %2102 = vmatprep.subr.mxu0 0.0
    %2103 = vmatpush2.msra.mxu0 0.0
    %2104 = vmatprep.subr.mxu0 0.0
    %2105 = vmatpush2.msra.mxu0 0.0
    %2106 = vmatprep.subr.mxu0 0.0
    %2107 = vmatpush2.msra.mxu0 0.0
    %2108 = vmatprep.subr.mxu0 0.0
    %2109 = vmatpush2.msra.mxu0 0.0
    %2110 = vmatprep.subr.mxu0 0.0
    %2111 = vmatpush2.msra.mxu0 0.0
    %2112 = vmatprep.subr.mxu0 0.0
    %2113 = vmatpush2.msra.mxu0 0.0
    %2114 = vmatprep.subr.mxu0 0.0
    %2115 = vmatpush2.msra.mxu0 0.0
    %2116 = vmatprep.subr.mxu0 0.0
    %2117 = vmatpush2.msra.mxu0 0.0
    %2118 = vmatprep.subr.mxu0 0.0
    %2119 = vmatpush2.msra.mxu0 0.0
    %2120 = vmatprep.subr.mxu0 0.0
    %2121 = vmatpush2.msra.mxu0 0.0
    %2122 = vmatprep.subr.mxu0 0.0
    %2123 = vmatpush2.msra.mxu0 0.0
    %2124 = vmatprep.subr.mxu0 0.0
    %2125 = vmatpush2.msra.mxu0 0.0
    %2126 = vmatprep.subr.mxu0 0.0
    %2127 = vmatpush2.msra.mxu0 0.0
    %2128 = vmatprep.subr.mxu0 0.0
    %2129 = vmatpush2.msra.mxu0 0.0
    %2130 = vmatprep.subr.mxu0 0.0
    %2131 = vmatpush2.msra.mxu0 0.0
    %2132 = vmatprep.mubr.f32.mxu0 0.0
    %2133 = vmatmul.mubr.f32.gmra.mxu0 %v1864
    %v2134 = vpop.f32.mrf.mxu0
    %v2135 = vadd.f32 0.0, %v2134
    %v2136 = vpop.f32.mrf.mxu0
    %v2137 = vadd.f32 0.0, %v2136
    %2138 = vdwg.mxu0
    %2139 = vmatprep.subr.mxu0 %v1930
    %2140 = vmatpush1.msra.mxu0 %v1929
    %2141 = vmatprep.subr.mxu0 %v1926
    %2142 = vmatpush1.msra.mxu0 %v1925
    %2143 = vmatprep.subr.mxu0 %v1922
    %2144 = vmatpush1.msra.mxu0 %v1921
    %2145 = vmatprep.subr.mxu0 %v1918
    %2146 = vmatpush1.msra.mxu0 %v1917
    %2147 = vmatprep.subr.mxu0 %v1914
    %2148 = vmatpush1.msra.mxu0 %v1913
    %2149 = vmatprep.subr.mxu0 %v1910
    %2150 = vmatpush1.msra.mxu0 %v1909
    %2151 = vmatprep.subr.mxu0 %v1906
    %2152 = vmatpush1.msra.mxu0 %v1905
    %2153 = vmatprep.subr.mxu0 %v1902
    %2154 = vmatpush1.msra.mxu0 %v1901
    %2155 = vmatprep.subr.mxu0 %v1898
    %2156 = vmatpush1.msra.mxu0 %v1897
    %2157 = vmatprep.subr.mxu0 %v1894
    %2158 = vmatpush1.msra.mxu0 %v1893
    %2159 = vmatprep.subr.mxu0 %v1890
    %2160 = vmatpush1.msra.mxu0 %v1889
    %2161 = vmatprep.subr.mxu0 %v1886
    %2162 = vmatpush1.msra.mxu0 %v1885
    %2163 = vmatprep.subr.mxu0 %v1882
    %2164 = vmatpush1.msra.mxu0 %v1881
    %2165 = vmatprep.subr.mxu0 %v1878
    %2166 = vmatpush1.msra.mxu0 %v1877
    %2167 = vmatprep.subr.mxu0 %v1874
    %2168 = vmatpush1.msra.mxu0 %v1873
    %2169 = vmatprep.subr.mxu0 %v1870
    %2170 = vmatpush1.msra.mxu0 %v1869
    %2171 = vmatprep.subr.mxu0 0.0
    %2172 = vmatpush2.msra.mxu0 0.0
    %2173 = vmatprep.subr.mxu0 0.0
    %2174 = vmatpush2.msra.mxu0 0.0
    %2175 = vmatprep.subr.mxu0 0.0
    %2176 = vmatpush2.msra.mxu0 0.0
    %2177 = vmatprep.subr.mxu0 0.0
    %2178 = vmatpush2.msra.mxu0 0.0
    %2179 = vmatprep.subr.mxu0 0.0
    %2180 = vmatpush2.msra.mxu0 0.0
    %2181 = vmatprep.subr.mxu0 0.0
    %2182 = vmatpush2.msra.mxu0 0.0
    %2183 = vmatprep.subr.mxu0 0.0
    %2184 = vmatpush2.msra.mxu0 0.0
    %2185 = vmatprep.subr.mxu0 0.0
    %2186 = vmatpush2.msra.mxu0 0.0
    %2187 = vmatprep.subr.mxu0 0.0
    %2188 = vmatpush2.msra.mxu0 0.0
    %2189 = vmatprep.subr.mxu0 0.0
    %2190 = vmatpush2.msra.mxu0 0.0
    %2191 = vmatprep.subr.mxu0 0.0
    %2192 = vmatpush2.msra.mxu0 0.0
    %2193 = vmatprep.subr.mxu0 0.0
    %2194 = vmatpush2.msra.mxu0 0.0
    %2195 = vmatprep.subr.mxu0 0.0
    %2196 = vmatpush2.msra.mxu0 0.0
    %2197 = vmatprep.subr.mxu0 0.0
    %2198 = vmatpush2.msra.mxu0 0.0
    %2199 = vmatprep.subr.mxu0 0.0
    %2200 = vmatpush2.msra.mxu0 0.0
    %2201 = vmatprep.subr.mxu0 0.0
    %2202 = vmatpush2.msra.mxu0 0.0
    %2203 = vmatprep.mubr.f32.mxu0 0.0
    %2204 = vmatmul.mubr.f32.gmra.mxu0 %v1868
    %v2205 = vpop.f32.mrf.mxu0
    %v2206 = vadd.f32 %v2064, %v2205
    %v2207 = vpop.f32.mrf.mxu0
    %v2208 = vadd.f32 %v2066, %v2207
    %2209 = vdwg.mxu0
    %2210 = vmatprep.subr.mxu0 %v1932
    %2211 = vmatpush1.msra.mxu0 %v1931
    %2212 = vmatprep.subr.mxu0 %v1928
    %2213 = vmatpush1.msra.mxu0 %v1927
    %2214 = vmatprep.subr.mxu0 %v1924
    %2215 = vmatpush1.msra.mxu0 %v1923
    %2216 = vmatprep.subr.mxu0 %v1920
    %2217 = vmatpush1.msra.mxu0 %v1919
    %2218 = vmatprep.subr.mxu0 %v1916
    %2219 = vmatpush1.msra.mxu0 %v1915
    %2220 = vmatprep.subr.mxu0 %v1912
    %2221 = vmatpush1.msra.mxu0 %v1911
    %2222 = vmatprep.subr.mxu0 %v1908
    %2223 = vmatpush1.msra.mxu0 %v1907
    %2224 = vmatprep.subr.mxu0 %v1904
    %2225 = vmatpush1.msra.mxu0 %v1903
    %2226 = vmatprep.subr.mxu0 %v1900
    %2227 = vmatpush1.msra.mxu0 %v1899
    %2228 = vmatprep.subr.mxu0 %v1896
    %2229 = vmatpush1.msra.mxu0 %v1895
    %2230 = vmatprep.subr.mxu0 %v1892
    %2231 = vmatpush1.msra.mxu0 %v1891
    %2232 = vmatprep.subr.mxu0 %v1888
    %2233 = vmatpush1.msra.mxu0 %v1887
    %2234 = vmatprep.subr.mxu0 %v1884
    %2235 = vmatpush1.msra.mxu0 %v1883
    %2236 = vmatprep.subr.mxu0 %v1880
    %2237 = vmatpush1.msra.mxu0 %v1879
    %2238 = vmatprep.subr.mxu0 %v1876
    %2239 = vmatpush1.msra.mxu0 %v1875
    %2240 = vmatprep.subr.mxu0 %v1872
    %2241 = vmatpush1.msra.mxu0 %v1871
    %2242 = vmatprep.subr.mxu0 0.0
    %2243 = vmatpush2.msra.mxu0 0.0
    %2244 = vmatprep.subr.mxu0 0.0
    %2245 = vmatpush2.msra.mxu0 0.0
    %2246 = vmatprep.subr.mxu0 0.0
    %2247 = vmatpush2.msra.mxu0 0.0
    %2248 = vmatprep.subr.mxu0 0.0
    %2249 = vmatpush2.msra.mxu0 0.0
    %2250 = vmatprep.subr.mxu0 0.0
    %2251 = vmatpush2.msra.mxu0 0.0
    %2252 = vmatprep.subr.mxu0 0.0
    %2253 = vmatpush2.msra.mxu0 0.0
    %2254 = vmatprep.subr.mxu0 0.0
    %2255 = vmatpush2.msra.mxu0 0.0
    %2256 = vmatprep.subr.mxu0 0.0
    %2257 = vmatpush2.msra.mxu0 0.0
    %2258 = vmatprep.subr.mxu0 0.0
    %2259 = vmatpush2.msra.mxu0 0.0
    %2260 = vmatprep.subr.mxu0 0.0
    %2261 = vmatpush2.msra.mxu0 0.0
    %2262 = vmatprep.subr.mxu0 0.0
    %2263 = vmatpush2.msra.mxu0 0.0
    %2264 = vmatprep.subr.mxu0 0.0
    %2265 = vmatpush2.msra.mxu0 0.0
    %2266 = vmatprep.subr.mxu0 0.0
    %2267 = vmatpush2.msra.mxu0 0.0
    %2268 = vmatprep.subr.mxu0 0.0
    %2269 = vmatpush2.msra.mxu0 0.0
    %2270 = vmatprep.subr.mxu0 0.0
    %2271 = vmatpush2.msra.mxu0 0.0
    %2272 = vmatprep.subr.mxu0 0.0
    %2273 = vmatpush2.msra.mxu0 0.0
    %2274 = vmatprep.mubr.f32.mxu0 0.0
    %2275 = vmatmul.mubr.f32.gmra.mxu0 %v1868
    %v2276 = vpop.f32.mrf.mxu0
    %v2277 = vadd.f32 %v2135, %v2276
    %v2278 = vpop.f32.mrf.mxu0
    %v2279 = vadd.f32 %v2137, %v2278
    %2280 = vdwg.mxu0
    %v2281 = vadd.f32 %v2206, %v74
    %v2282 = vadd.f32 %v2208, %v78
    %v2283 = vadd.f32 %v2277, %v82
    %v2284 = vadd.f32 %v2279, %v86
    %v2285 = vxor.u32 %v2281, 2147483648
    %v2286 = vmul.f32 %v2285, 1.442695
    %v2287 = vpow.pop %v2286
    %v2288 = vadd.f32 %v2287, 1.0
    %v2289 = vrcp.pop %v2288
    %v2290 = vmul.f32 1.0, %v2289
    %v2291 = vxor.u32 %v2282, 2147483648
    %v2292 = vmul.f32 %v2291, 1.442695
    %v2293 = vpow.pop %v2292
    %v2294 = vadd.f32 %v2293, 1.0
    %v2295 = vrcp.pop %v2294
    %v2296 = vmul.f32 1.0, %v2295
    %v2297 = vtanh.pop %v2283
    %v2298 = vxor.u32 %v2284, 2147483648
    %v2299 = vmul.f32 %v2298, 1.442695
    %v2300 = vpow.pop %v2299
    %v2301 = vadd.f32 %v2300, 1.0
    %v2302 = vrcp.pop %v2301
    %v2303 = vmul.f32 1.0, %v2302
    %v2304 = vmul.f32 %v2296, %v1862
    %v2305 = vmul.f32 %v2290, %v2297
    %v2306 = vadd.f32 %v2304, %v2305
    %v2307 = vtanh.pop %v2306
    %v2308 = vmul.f32 %v2303, %v2307
    %s2309 = scalar_lea.vmem [#allocation8], 8
    %2310 = vst [vmem:[%s2309] sm:$0x3] %v2308
    %s2311 = scalar_lea.vmem [#allocation2], 10
    %v2312 = vld [vmem:[%s2311] sm:$0x3]
    %v2313 = vld [vmem:[#allocation5] sm:$0xff]
    %v2314 = vld [vmem:[#allocation5 + $0x8] sm:$0xff]
    %v2315 = vld [vmem:[#allocation5 + $0x10] sm:$0xff]
    %v2316 = vld [vmem:[#allocation5 + $0x18] sm:$0xff]
    %v2317 = vld [vmem:[#allocation5 + $0x20] sm:$0xff]
    %v2318 = vld [vmem:[#allocation5 + $0x28] sm:$0xff]
    %v2319 = vld [vmem:[#allocation5 + $0x30] sm:$0xff]
    %v2320 = vld [vmem:[#allocation5 + $0x38] sm:$0xff]
    %v2321 = vld [vmem:[#allocation5 + $0x40] sm:$0xff]
    %v2322 = vld [vmem:[#allocation5 + $0x48] sm:$0xff]
    %v2323 = vld [vmem:[#allocation5 + $0x50] sm:$0xff]
    %v2324 = vld [vmem:[#allocation5 + $0x58] sm:$0xff]
    %v2325 = vld [vmem:[#allocation5 + $0x60] sm:$0xff]
    %v2326 = vld [vmem:[#allocation5 + $0x68] sm:$0xff]
    %v2327 = vld [vmem:[#allocation5 + $0x70] sm:$0xff]
    %v2328 = vld [vmem:[#allocation5 + $0x78] sm:$0xff]
    %v2329 = vld [vmem:[#allocation5 + $0x80] sm:$0xff]
    %v2330 = vld [vmem:[#allocation5 + $0x88] sm:$0xff]
    %v2331 = vld [vmem:[#allocation5 + $0x90] sm:$0xff]
    %v2332 = vld [vmem:[#allocation5 + $0x98] sm:$0xff]
    %v2333 = vld [vmem:[#allocation5 + $0xa0] sm:$0xff]
    %v2334 = vld [vmem:[#allocation5 + $0xa8] sm:$0xff]
    %v2335 = vld [vmem:[#allocation5 + $0xb0] sm:$0xff]
    %v2336 = vld [vmem:[#allocation5 + $0xb8] sm:$0xff]
    %v2337 = vld [vmem:[#allocation5 + $0xc0] sm:$0xff]
    %v2338 = vld [vmem:[#allocation5 + $0xc8] sm:$0xff]
    %v2339 = vld [vmem:[#allocation5 + $0xd0] sm:$0xff]
    %v2340 = vld [vmem:[#allocation5 + $0xd8] sm:$0xff]
    %v2341 = vld [vmem:[#allocation5 + $0xe0] sm:$0xff]
    %v2342 = vld [vmem:[#allocation5 + $0xe8] sm:$0xff]
    %v2343 = vld [vmem:[#allocation5 + $0xf0] sm:$0xff]
    %v2344 = vld [vmem:[#allocation5 + $0xf8] sm:$0xff]
    %v2345 = vld [vmem:[#allocation5 + $0x100] sm:$0xff]
    %v2346 = vld [vmem:[#allocation5 + $0x108] sm:$0xff]
    %v2347 = vld [vmem:[#allocation5 + $0x110] sm:$0xff]
    %v2348 = vld [vmem:[#allocation5 + $0x118] sm:$0xff]
    %v2349 = vld [vmem:[#allocation5 + $0x120] sm:$0xff]
    %v2350 = vld [vmem:[#allocation5 + $0x128] sm:$0xff]
    %v2351 = vld [vmem:[#allocation5 + $0x130] sm:$0xff]
    %v2352 = vld [vmem:[#allocation5 + $0x138] sm:$0xff]
    %v2353 = vld [vmem:[#allocation5 + $0x140] sm:$0xff]
    %v2354 = vld [vmem:[#allocation5 + $0x148] sm:$0xff]
    %v2355 = vld [vmem:[#allocation5 + $0x150] sm:$0xff]
    %v2356 = vld [vmem:[#allocation5 + $0x158] sm:$0xff]
    %v2357 = vld [vmem:[#allocation5 + $0x160] sm:$0xff]
    %v2358 = vld [vmem:[#allocation5 + $0x168] sm:$0xff]
    %v2359 = vld [vmem:[#allocation5 + $0x170] sm:$0xff]
    %v2360 = vld [vmem:[#allocation5 + $0x178] sm:$0xff]
    %v2361 = vld [vmem:[#allocation5 + $0x180] sm:$0xff]
    %v2362 = vld [vmem:[#allocation5 + $0x188] sm:$0xff]
    %v2363 = vld [vmem:[#allocation5 + $0x190] sm:$0xff]
    %v2364 = vld [vmem:[#allocation5 + $0x198] sm:$0xff]
    %v2365 = vld [vmem:[#allocation5 + $0x1a0] sm:$0xff]
    %v2366 = vld [vmem:[#allocation5 + $0x1a8] sm:$0xff]
    %v2367 = vld [vmem:[#allocation5 + $0x1b0] sm:$0xff]
    %v2368 = vld [vmem:[#allocation5 + $0x1b8] sm:$0xff]
    %v2369 = vld [vmem:[#allocation5 + $0x1c0] sm:$0xff]
    %v2370 = vld [vmem:[#allocation5 + $0x1c8] sm:$0xff]
    %v2371 = vld [vmem:[#allocation5 + $0x1d0] sm:$0xff]
    %v2372 = vld [vmem:[#allocation5 + $0x1d8] sm:$0xff]
    %v2373 = vld [vmem:[#allocation5 + $0x1e0] sm:$0xff]
    %v2374 = vld [vmem:[#allocation5 + $0x1e8] sm:$0xff]
    %v2375 = vld [vmem:[#allocation5 + $0x1f0] sm:$0xff]
    %v2376 = vld [vmem:[#allocation5 + $0x1f8] sm:$0xff]
    %v2377 = vld [vmem:[#allocation7] sm:$0xff]
    %v2378 = vld [vmem:[#allocation7 + $0x8] sm:$0xff]
    %v2379 = vld [vmem:[#allocation7 + $0x10] sm:$0xff]
    %v2380 = vld [vmem:[#allocation7 + $0x18] sm:$0xff]
    %v2381 = vld [vmem:[#allocation7 + $0x20] sm:$0xff]
    %v2382 = vld [vmem:[#allocation7 + $0x28] sm:$0xff]
    %v2383 = vld [vmem:[#allocation7 + $0x30] sm:$0xff]
    %v2384 = vld [vmem:[#allocation7 + $0x38] sm:$0xff]
    %v2385 = vld [vmem:[#allocation7 + $0x40] sm:$0xff]
    %v2386 = vld [vmem:[#allocation7 + $0x48] sm:$0xff]
    %v2387 = vld [vmem:[#allocation7 + $0x50] sm:$0xff]
    %v2388 = vld [vmem:[#allocation7 + $0x58] sm:$0xff]
    %v2389 = vld [vmem:[#allocation7 + $0x60] sm:$0xff]
    %v2390 = vld [vmem:[#allocation7 + $0x68] sm:$0xff]
    %v2391 = vld [vmem:[#allocation7 + $0x70] sm:$0xff]
    %v2392 = vld [vmem:[#allocation7 + $0x78] sm:$0xff]
    %v2393 = vld [vmem:[#allocation7 + $0x80] sm:$0xff]
    %v2394 = vld [vmem:[#allocation7 + $0x88] sm:$0xff]
    %v2395 = vld [vmem:[#allocation7 + $0x90] sm:$0xff]
    %v2396 = vld [vmem:[#allocation7 + $0x98] sm:$0xff]
    %v2397 = vld [vmem:[#allocation7 + $0xa0] sm:$0xff]
    %v2398 = vld [vmem:[#allocation7 + $0xa8] sm:$0xff]
    %v2399 = vld [vmem:[#allocation7 + $0xb0] sm:$0xff]
    %v2400 = vld [vmem:[#allocation7 + $0xb8] sm:$0xff]
    %v2401 = vld [vmem:[#allocation7 + $0xc0] sm:$0xff]
    %v2402 = vld [vmem:[#allocation7 + $0xc8] sm:$0xff]
    %v2403 = vld [vmem:[#allocation7 + $0xd0] sm:$0xff]
    %v2404 = vld [vmem:[#allocation7 + $0xd8] sm:$0xff]
    %v2405 = vld [vmem:[#allocation7 + $0xe0] sm:$0xff]
    %v2406 = vld [vmem:[#allocation7 + $0xe8] sm:$0xff]
    %v2407 = vld [vmem:[#allocation7 + $0xf0] sm:$0xff]
    %v2408 = vld [vmem:[#allocation7 + $0xf8] sm:$0xff]
    %v2409 = vld [vmem:[#allocation7 + $0x100] sm:$0xff]
    %v2410 = vld [vmem:[#allocation7 + $0x108] sm:$0xff]
    %v2411 = vld [vmem:[#allocation7 + $0x110] sm:$0xff]
    %v2412 = vld [vmem:[#allocation7 + $0x118] sm:$0xff]
    %v2413 = vld [vmem:[#allocation7 + $0x120] sm:$0xff]
    %v2414 = vld [vmem:[#allocation7 + $0x128] sm:$0xff]
    %v2415 = vld [vmem:[#allocation7 + $0x130] sm:$0xff]
    %v2416 = vld [vmem:[#allocation7 + $0x138] sm:$0xff]
    %v2417 = vld [vmem:[#allocation7 + $0x140] sm:$0xff]
    %v2418 = vld [vmem:[#allocation7 + $0x148] sm:$0xff]
    %v2419 = vld [vmem:[#allocation7 + $0x150] sm:$0xff]
    %v2420 = vld [vmem:[#allocation7 + $0x158] sm:$0xff]
    %v2421 = vld [vmem:[#allocation7 + $0x160] sm:$0xff]
    %v2422 = vld [vmem:[#allocation7 + $0x168] sm:$0xff]
    %v2423 = vld [vmem:[#allocation7 + $0x170] sm:$0xff]
    %v2424 = vld [vmem:[#allocation7 + $0x178] sm:$0xff]
    %v2425 = vld [vmem:[#allocation7 + $0x180] sm:$0xff]
    %v2426 = vld [vmem:[#allocation7 + $0x188] sm:$0xff]
    %v2427 = vld [vmem:[#allocation7 + $0x190] sm:$0xff]
    %v2428 = vld [vmem:[#allocation7 + $0x198] sm:$0xff]
    %v2429 = vld [vmem:[#allocation7 + $0x1a0] sm:$0xff]
    %v2430 = vld [vmem:[#allocation7 + $0x1a8] sm:$0xff]
    %v2431 = vld [vmem:[#allocation7 + $0x1b0] sm:$0xff]
    %v2432 = vld [vmem:[#allocation7 + $0x1b8] sm:$0xff]
    %v2433 = vld [vmem:[#allocation7 + $0x1c0] sm:$0xff]
    %v2434 = vld [vmem:[#allocation7 + $0x1c8] sm:$0xff]
    %v2435 = vld [vmem:[#allocation7 + $0x1d0] sm:$0xff]
    %v2436 = vld [vmem:[#allocation7 + $0x1d8] sm:$0xff]
    %v2437 = vld [vmem:[#allocation7 + $0x1e0] sm:$0xff]
    %v2438 = vld [vmem:[#allocation7 + $0x1e8] sm:$0xff]
    %v2439 = vld [vmem:[#allocation7 + $0x1f0] sm:$0xff]
    %v2440 = vld [vmem:[#allocation7 + $0x1f8] sm:$0xff]
    %2441 = vmatprep.subr.mxu0 %v2438
    %2442 = vmatpush1.msra.mxu0 %v2437
    %2443 = vmatprep.subr.mxu0 %v2434
    %2444 = vmatpush1.msra.mxu0 %v2433
    %2445 = vmatprep.subr.mxu0 %v2430
    %2446 = vmatpush1.msra.mxu0 %v2429
    %2447 = vmatprep.subr.mxu0 %v2426
    %2448 = vmatpush1.msra.mxu0 %v2425
    %2449 = vmatprep.subr.mxu0 %v2422
    %2450 = vmatpush1.msra.mxu0 %v2421
    %2451 = vmatprep.subr.mxu0 %v2418
    %2452 = vmatpush1.msra.mxu0 %v2417
    %2453 = vmatprep.subr.mxu0 %v2414
    %2454 = vmatpush1.msra.mxu0 %v2413
    %2455 = vmatprep.subr.mxu0 %v2410
    %2456 = vmatpush1.msra.mxu0 %v2409
    %2457 = vmatprep.subr.mxu0 %v2406
    %2458 = vmatpush1.msra.mxu0 %v2405
    %2459 = vmatprep.subr.mxu0 %v2402
    %2460 = vmatpush1.msra.mxu0 %v2401
    %2461 = vmatprep.subr.mxu0 %v2398
    %2462 = vmatpush1.msra.mxu0 %v2397
    %2463 = vmatprep.subr.mxu0 %v2394
    %2464 = vmatpush1.msra.mxu0 %v2393
    %2465 = vmatprep.subr.mxu0 %v2390
    %2466 = vmatpush1.msra.mxu0 %v2389
    %2467 = vmatprep.subr.mxu0 %v2386
    %2468 = vmatpush1.msra.mxu0 %v2385
    %2469 = vmatprep.subr.mxu0 %v2382
    %2470 = vmatpush1.msra.mxu0 %v2381
    %2471 = vmatprep.subr.mxu0 %v2378
    %2472 = vmatpush1.msra.mxu0 %v2377
    %2473 = vmatprep.subr.mxu0 0.0
    %2474 = vmatpush2.msra.mxu0 0.0
    %2475 = vmatprep.subr.mxu0 0.0
    %2476 = vmatpush2.msra.mxu0 0.0
    %2477 = vmatprep.subr.mxu0 0.0
    %2478 = vmatpush2.msra.mxu0 0.0
    %2479 = vmatprep.subr.mxu0 0.0
    %2480 = vmatpush2.msra.mxu0 0.0
    %2481 = vmatprep.subr.mxu0 0.0
    %2482 = vmatpush2.msra.mxu0 0.0
    %2483 = vmatprep.subr.mxu0 0.0
    %2484 = vmatpush2.msra.mxu0 0.0
    %2485 = vmatprep.subr.mxu0 0.0
    %2486 = vmatpush2.msra.mxu0 0.0
    %2487 = vmatprep.subr.mxu0 0.0
    %2488 = vmatpush2.msra.mxu0 0.0
    %2489 = vmatprep.subr.mxu0 0.0
    %2490 = vmatpush2.msra.mxu0 0.0
    %2491 = vmatprep.subr.mxu0 0.0
    %2492 = vmatpush2.msra.mxu0 0.0
    %2493 = vmatprep.subr.mxu0 0.0
    %2494 = vmatpush2.msra.mxu0 0.0
    %2495 = vmatprep.subr.mxu0 0.0
    %2496 = vmatpush2.msra.mxu0 0.0
    %2497 = vmatprep.subr.mxu0 0.0
    %2498 = vmatpush2.msra.mxu0 0.0
    %2499 = vmatprep.subr.mxu0 0.0
    %2500 = vmatpush2.msra.mxu0 0.0
    %2501 = vmatprep.subr.mxu0 0.0
    %2502 = vmatpush2.msra.mxu0 0.0
    %2503 = vmatprep.subr.mxu0 0.0
    %2504 = vmatpush2.msra.mxu0 0.0
    %2505 = vmatprep.mubr.f32.mxu0 0.0
    %2506 = vmatmul.mubr.f32.gmra.mxu0 %v2308
    %v2507 = vpop.f32.mrf.mxu0
    %v2508 = vadd.f32 0.0, %v2507
    %v2509 = vpop.f32.mrf.mxu0
    %v2510 = vadd.f32 0.0, %v2509
    %2511 = vdwg.mxu0
    %2512 = vmatprep.subr.mxu0 %v2440
    %2513 = vmatpush1.msra.mxu0 %v2439
    %2514 = vmatprep.subr.mxu0 %v2436
    %2515 = vmatpush1.msra.mxu0 %v2435
    %2516 = vmatprep.subr.mxu0 %v2432
    %2517 = vmatpush1.msra.mxu0 %v2431
    %2518 = vmatprep.subr.mxu0 %v2428
    %2519 = vmatpush1.msra.mxu0 %v2427
    %2520 = vmatprep.subr.mxu0 %v2424
    %2521 = vmatpush1.msra.mxu0 %v2423
    %2522 = vmatprep.subr.mxu0 %v2420
    %2523 = vmatpush1.msra.mxu0 %v2419
    %2524 = vmatprep.subr.mxu0 %v2416
    %2525 = vmatpush1.msra.mxu0 %v2415
    %2526 = vmatprep.subr.mxu0 %v2412
    %2527 = vmatpush1.msra.mxu0 %v2411
    %2528 = vmatprep.subr.mxu0 %v2408
    %2529 = vmatpush1.msra.mxu0 %v2407
    %2530 = vmatprep.subr.mxu0 %v2404
    %2531 = vmatpush1.msra.mxu0 %v2403
    %2532 = vmatprep.subr.mxu0 %v2400
    %2533 = vmatpush1.msra.mxu0 %v2399
    %2534 = vmatprep.subr.mxu0 %v2396
    %2535 = vmatpush1.msra.mxu0 %v2395
    %2536 = vmatprep.subr.mxu0 %v2392
    %2537 = vmatpush1.msra.mxu0 %v2391
    %2538 = vmatprep.subr.mxu0 %v2388
    %2539 = vmatpush1.msra.mxu0 %v2387
    %2540 = vmatprep.subr.mxu0 %v2384
    %2541 = vmatpush1.msra.mxu0 %v2383
    %2542 = vmatprep.subr.mxu0 %v2380
    %2543 = vmatpush1.msra.mxu0 %v2379
    %2544 = vmatprep.subr.mxu0 0.0
    %2545 = vmatpush2.msra.mxu0 0.0
    %2546 = vmatprep.subr.mxu0 0.0
    %2547 = vmatpush2.msra.mxu0 0.0
    %2548 = vmatprep.subr.mxu0 0.0
    %2549 = vmatpush2.msra.mxu0 0.0
    %2550 = vmatprep.subr.mxu0 0.0
    %2551 = vmatpush2.msra.mxu0 0.0
    %2552 = vmatprep.subr.mxu0 0.0
    %2553 = vmatpush2.msra.mxu0 0.0
    %2554 = vmatprep.subr.mxu0 0.0
    %2555 = vmatpush2.msra.mxu0 0.0
    %2556 = vmatprep.subr.mxu0 0.0
    %2557 = vmatpush2.msra.mxu0 0.0
    %2558 = vmatprep.subr.mxu0 0.0
    %2559 = vmatpush2.msra.mxu0 0.0
    %2560 = vmatprep.subr.mxu0 0.0
    %2561 = vmatpush2.msra.mxu0 0.0
    %2562 = vmatprep.subr.mxu0 0.0
    %2563 = vmatpush2.msra.mxu0 0.0
    %2564 = vmatprep.subr.mxu0 0.0
    %2565 = vmatpush2.msra.mxu0 0.0
    %2566 = vmatprep.subr.mxu0 0.0
    %2567 = vmatpush2.msra.mxu0 0.0
    %2568 = vmatprep.subr.mxu0 0.0
    %2569 = vmatpush2.msra.mxu0 0.0
    %2570 = vmatprep.subr.mxu0 0.0
    %2571 = vmatpush2.msra.mxu0 0.0
    %2572 = vmatprep.subr.mxu0 0.0
    %2573 = vmatpush2.msra.mxu0 0.0
    %2574 = vmatprep.subr.mxu0 0.0
    %2575 = vmatpush2.msra.mxu0 0.0
    %2576 = vmatprep.mubr.f32.mxu0 0.0
    %2577 = vmatmul.mubr.f32.gmra.mxu0 %v2308
    %v2578 = vpop.f32.mrf.mxu0
    %v2579 = vadd.f32 0.0, %v2578
    %v2580 = vpop.f32.mrf.mxu0
    %v2581 = vadd.f32 0.0, %v2580
    %2582 = vdwg.mxu0
    %2583 = vmatprep.subr.mxu0 %v2374
    %2584 = vmatpush1.msra.mxu0 %v2373
    %2585 = vmatprep.subr.mxu0 %v2370
    %2586 = vmatpush1.msra.mxu0 %v2369
    %2587 = vmatprep.subr.mxu0 %v2366
    %2588 = vmatpush1.msra.mxu0 %v2365
    %2589 = vmatprep.subr.mxu0 %v2362
    %2590 = vmatpush1.msra.mxu0 %v2361
    %2591 = vmatprep.subr.mxu0 %v2358
    %2592 = vmatpush1.msra.mxu0 %v2357
    %2593 = vmatprep.subr.mxu0 %v2354
    %2594 = vmatpush1.msra.mxu0 %v2353
    %2595 = vmatprep.subr.mxu0 %v2350
    %2596 = vmatpush1.msra.mxu0 %v2349
    %2597 = vmatprep.subr.mxu0 %v2346
    %2598 = vmatpush1.msra.mxu0 %v2345
    %2599 = vmatprep.subr.mxu0 %v2342
    %2600 = vmatpush1.msra.mxu0 %v2341
    %2601 = vmatprep.subr.mxu0 %v2338
    %2602 = vmatpush1.msra.mxu0 %v2337
    %2603 = vmatprep.subr.mxu0 %v2334
    %2604 = vmatpush1.msra.mxu0 %v2333
    %2605 = vmatprep.subr.mxu0 %v2330
    %2606 = vmatpush1.msra.mxu0 %v2329
    %2607 = vmatprep.subr.mxu0 %v2326
    %2608 = vmatpush1.msra.mxu0 %v2325
    %2609 = vmatprep.subr.mxu0 %v2322
    %2610 = vmatpush1.msra.mxu0 %v2321
    %2611 = vmatprep.subr.mxu0 %v2318
    %2612 = vmatpush1.msra.mxu0 %v2317
    %2613 = vmatprep.subr.mxu0 %v2314
    %2614 = vmatpush1.msra.mxu0 %v2313
    %2615 = vmatprep.subr.mxu0 0.0
    %2616 = vmatpush2.msra.mxu0 0.0
    %2617 = vmatprep.subr.mxu0 0.0
    %2618 = vmatpush2.msra.mxu0 0.0
    %2619 = vmatprep.subr.mxu0 0.0
    %2620 = vmatpush2.msra.mxu0 0.0
    %2621 = vmatprep.subr.mxu0 0.0
    %2622 = vmatpush2.msra.mxu0 0.0
    %2623 = vmatprep.subr.mxu0 0.0
    %2624 = vmatpush2.msra.mxu0 0.0
    %2625 = vmatprep.subr.mxu0 0.0
    %2626 = vmatpush2.msra.mxu0 0.0
    %2627 = vmatprep.subr.mxu0 0.0
    %2628 = vmatpush2.msra.mxu0 0.0
    %2629 = vmatprep.subr.mxu0 0.0
    %2630 = vmatpush2.msra.mxu0 0.0
    %2631 = vmatprep.subr.mxu0 0.0
    %2632 = vmatpush2.msra.mxu0 0.0
    %2633 = vmatprep.subr.mxu0 0.0
    %2634 = vmatpush2.msra.mxu0 0.0
    %2635 = vmatprep.subr.mxu0 0.0
    %2636 = vmatpush2.msra.mxu0 0.0
    %2637 = vmatprep.subr.mxu0 0.0
    %2638 = vmatpush2.msra.mxu0 0.0
    %2639 = vmatprep.subr.mxu0 0.0
    %2640 = vmatpush2.msra.mxu0 0.0
    %2641 = vmatprep.subr.mxu0 0.0
    %2642 = vmatpush2.msra.mxu0 0.0
    %2643 = vmatprep.subr.mxu0 0.0
    %2644 = vmatpush2.msra.mxu0 0.0
    %2645 = vmatprep.subr.mxu0 0.0
    %2646 = vmatpush2.msra.mxu0 0.0
    %2647 = vmatprep.mubr.f32.mxu0 0.0
    %2648 = vmatmul.mubr.f32.gmra.mxu0 %v2312
    %v2649 = vpop.f32.mrf.mxu0
    %v2650 = vadd.f32 %v2508, %v2649
    %v2651 = vpop.f32.mrf.mxu0
    %v2652 = vadd.f32 %v2510, %v2651
    %2653 = vdwg.mxu0
    %2654 = vmatprep.subr.mxu0 %v2376
    %2655 = vmatpush1.msra.mxu0 %v2375
    %2656 = vmatprep.subr.mxu0 %v2372
    %2657 = vmatpush1.msra.mxu0 %v2371
    %2658 = vmatprep.subr.mxu0 %v2368
    %2659 = vmatpush1.msra.mxu0 %v2367
    %2660 = vmatprep.subr.mxu0 %v2364
    %2661 = vmatpush1.msra.mxu0 %v2363
    %2662 = vmatprep.subr.mxu0 %v2360
    %2663 = vmatpush1.msra.mxu0 %v2359
    %2664 = vmatprep.subr.mxu0 %v2356
    %2665 = vmatpush1.msra.mxu0 %v2355
    %2666 = vmatprep.subr.mxu0 %v2352
    %2667 = vmatpush1.msra.mxu0 %v2351
    %2668 = vmatprep.subr.mxu0 %v2348
    %2669 = vmatpush1.msra.mxu0 %v2347
    %2670 = vmatprep.subr.mxu0 %v2344
    %2671 = vmatpush1.msra.mxu0 %v2343
    %2672 = vmatprep.subr.mxu0 %v2340
    %2673 = vmatpush1.msra.mxu0 %v2339
    %2674 = vmatprep.subr.mxu0 %v2336
    %2675 = vmatpush1.msra.mxu0 %v2335
    %2676 = vmatprep.subr.mxu0 %v2332
    %2677 = vmatpush1.msra.mxu0 %v2331
    %2678 = vmatprep.subr.mxu0 %v2328
    %2679 = vmatpush1.msra.mxu0 %v2327
    %2680 = vmatprep.subr.mxu0 %v2324
    %2681 = vmatpush1.msra.mxu0 %v2323
    %2682 = vmatprep.subr.mxu0 %v2320
    %2683 = vmatpush1.msra.mxu0 %v2319
    %2684 = vmatprep.subr.mxu0 %v2316
    %2685 = vmatpush1.msra.mxu0 %v2315
    %2686 = vmatprep.subr.mxu0 0.0
    %2687 = vmatpush2.msra.mxu0 0.0
    %2688 = vmatprep.subr.mxu0 0.0
    %2689 = vmatpush2.msra.mxu0 0.0
    %2690 = vmatprep.subr.mxu0 0.0
    %2691 = vmatpush2.msra.mxu0 0.0
    %2692 = vmatprep.subr.mxu0 0.0
    %2693 = vmatpush2.msra.mxu0 0.0
    %2694 = vmatprep.subr.mxu0 0.0
    %2695 = vmatpush2.msra.mxu0 0.0
    %2696 = vmatprep.subr.mxu0 0.0
    %2697 = vmatpush2.msra.mxu0 0.0
    %2698 = vmatprep.subr.mxu0 0.0
    %2699 = vmatpush2.msra.mxu0 0.0
    %2700 = vmatprep.subr.mxu0 0.0
    %2701 = vmatpush2.msra.mxu0 0.0
    %2702 = vmatprep.subr.mxu0 0.0
    %2703 = vmatpush2.msra.mxu0 0.0
    %2704 = vmatprep.subr.mxu0 0.0
    %2705 = vmatpush2.msra.mxu0 0.0
    %2706 = vmatprep.subr.mxu0 0.0
    %2707 = vmatpush2.msra.mxu0 0.0
    %2708 = vmatprep.subr.mxu0 0.0
    %2709 = vmatpush2.msra.mxu0 0.0
    %2710 = vmatprep.subr.mxu0 0.0
    %2711 = vmatpush2.msra.mxu0 0.0
    %2712 = vmatprep.subr.mxu0 0.0
    %2713 = vmatpush2.msra.mxu0 0.0
    %2714 = vmatprep.subr.mxu0 0.0
    %2715 = vmatpush2.msra.mxu0 0.0
    %2716 = vmatprep.subr.mxu0 0.0
    %2717 = vmatpush2.msra.mxu0 0.0
    %2718 = vmatprep.mubr.f32.mxu0 0.0
    %2719 = vmatmul.mubr.f32.gmra.mxu0 %v2312
    %v2720 = vpop.f32.mrf.mxu0
    %v2721 = vadd.f32 %v2579, %v2720
    %v2722 = vpop.f32.mrf.mxu0
    %v2723 = vadd.f32 %v2581, %v2722
    %2724 = vdwg.mxu0
    %v2725 = vadd.f32 %v2650, %v74
    %v2726 = vadd.f32 %v2652, %v78
    %v2727 = vadd.f32 %v2721, %v82
    %v2728 = vadd.f32 %v2723, %v86
    %v2729 = vxor.u32 %v2725, 2147483648
    %v2730 = vmul.f32 %v2729, 1.442695
    %v2731 = vpow.pop %v2730
    %v2732 = vadd.f32 %v2731, 1.0
    %v2733 = vrcp.pop %v2732
    %v2734 = vmul.f32 1.0, %v2733
    %v2735 = vxor.u32 %v2726, 2147483648
    %v2736 = vmul.f32 %v2735, 1.442695
    %v2737 = vpow.pop %v2736
    %v2738 = vadd.f32 %v2737, 1.0
    %v2739 = vrcp.pop %v2738
    %v2740 = vmul.f32 1.0, %v2739
    %v2741 = vtanh.pop %v2727
    %v2742 = vxor.u32 %v2728, 2147483648
    %v2743 = vmul.f32 %v2742, 1.442695
    %v2744 = vpow.pop %v2743
    %v2745 = vadd.f32 %v2744, 1.0
    %v2746 = vrcp.pop %v2745
    %v2747 = vmul.f32 1.0, %v2746
    %v2748 = vmul.f32 %v2740, %v2306
    %v2749 = vmul.f32 %v2734, %v2741
    %v2750 = vadd.f32 %v2748, %v2749
    %v2751 = vtanh.pop %v2750
    %v2752 = vmul.f32 %v2747, %v2751
    %s2753 = scalar_lea.vmem [#allocation8], 10
    %2754 = vst [vmem:[%s2753] sm:$0x3] %v2752
    %s2755 = scalar_lea.vmem [#allocation2], 12
    %v2756 = vld [vmem:[%s2755] sm:$0x3]
    %v2757 = vld [vmem:[#allocation5] sm:$0xff]
    %v2758 = vld [vmem:[#allocation5 + $0x8] sm:$0xff]
    %v2759 = vld [vmem:[#allocation5 + $0x10] sm:$0xff]
    %v2760 = vld [vmem:[#allocation5 + $0x18] sm:$0xff]
    %v2761 = vld [vmem:[#allocation5 + $0x20] sm:$0xff]
    %v2762 = vld [vmem:[#allocation5 + $0x28] sm:$0xff]
    %v2763 = vld [vmem:[#allocation5 + $0x30] sm:$0xff]
    %v2764 = vld [vmem:[#allocation5 + $0x38] sm:$0xff]
    %v2765 = vld [vmem:[#allocation5 + $0x40] sm:$0xff]
    %v2766 = vld [vmem:[#allocation5 + $0x48] sm:$0xff]
    %v2767 = vld [vmem:[#allocation5 + $0x50] sm:$0xff]
    %v2768 = vld [vmem:[#allocation5 + $0x58] sm:$0xff]
    %v2769 = vld [vmem:[#allocation5 + $0x60] sm:$0xff]
    %v2770 = vld [vmem:[#allocation5 + $0x68] sm:$0xff]
    %v2771 = vld [vmem:[#allocation5 + $0x70] sm:$0xff]
    %v2772 = vld [vmem:[#allocation5 + $0x78] sm:$0xff]
    %v2773 = vld [vmem:[#allocation5 + $0x80] sm:$0xff]
    %v2774 = vld [vmem:[#allocation5 + $0x88] sm:$0xff]
    %v2775 = vld [vmem:[#allocation5 + $0x90] sm:$0xff]
    %v2776 = vld [vmem:[#allocation5 + $0x98] sm:$0xff]
    %v2777 = vld [vmem:[#allocation5 + $0xa0] sm:$0xff]
    %v2778 = vld [vmem:[#allocation5 + $0xa8] sm:$0xff]
    %v2779 = vld [vmem:[#allocation5 + $0xb0] sm:$0xff]
    %v2780 = vld [vmem:[#allocation5 + $0xb8] sm:$0xff]
    %v2781 = vld [vmem:[#allocation5 + $0xc0] sm:$0xff]
    %v2782 = vld [vmem:[#allocation5 + $0xc8] sm:$0xff]
    %v2783 = vld [vmem:[#allocation5 + $0xd0] sm:$0xff]
    %v2784 = vld [vmem:[#allocation5 + $0xd8] sm:$0xff]
    %v2785 = vld [vmem:[#allocation5 + $0xe0] sm:$0xff]
    %v2786 = vld [vmem:[#allocation5 + $0xe8] sm:$0xff]
    %v2787 = vld [vmem:[#allocation5 + $0xf0] sm:$0xff]
    %v2788 = vld [vmem:[#allocation5 + $0xf8] sm:$0xff]
    %v2789 = vld [vmem:[#allocation5 + $0x100] sm:$0xff]
    %v2790 = vld [vmem:[#allocation5 + $0x108] sm:$0xff]
    %v2791 = vld [vmem:[#allocation5 + $0x110] sm:$0xff]
    %v2792 = vld [vmem:[#allocation5 + $0x118] sm:$0xff]
    %v2793 = vld [vmem:[#allocation5 + $0x120] sm:$0xff]
    %v2794 = vld [vmem:[#allocation5 + $0x128] sm:$0xff]
    %v2795 = vld [vmem:[#allocation5 + $0x130] sm:$0xff]
    %v2796 = vld [vmem:[#allocation5 + $0x138] sm:$0xff]
    %v2797 = vld [vmem:[#allocation5 + $0x140] sm:$0xff]
    %v2798 = vld [vmem:[#allocation5 + $0x148] sm:$0xff]
    %v2799 = vld [vmem:[#allocation5 + $0x150] sm:$0xff]
    %v2800 = vld [vmem:[#allocation5 + $0x158] sm:$0xff]
    %v2801 = vld [vmem:[#allocation5 + $0x160] sm:$0xff]
    %v2802 = vld [vmem:[#allocation5 + $0x168] sm:$0xff]
    %v2803 = vld [vmem:[#allocation5 + $0x170] sm:$0xff]
    %v2804 = vld [vmem:[#allocation5 + $0x178] sm:$0xff]
    %v2805 = vld [vmem:[#allocation5 + $0x180] sm:$0xff]
    %v2806 = vld [vmem:[#allocation5 + $0x188] sm:$0xff]
    %v2807 = vld [vmem:[#allocation5 + $0x190] sm:$0xff]
    %v2808 = vld [vmem:[#allocation5 + $0x198] sm:$0xff]
    %v2809 = vld [vmem:[#allocation5 + $0x1a0] sm:$0xff]
    %v2810 = vld [vmem:[#allocation5 + $0x1a8] sm:$0xff]
    %v2811 = vld [vmem:[#allocation5 + $0x1b0] sm:$0xff]
    %v2812 = vld [vmem:[#allocation5 + $0x1b8] sm:$0xff]
    %v2813 = vld [vmem:[#allocation5 + $0x1c0] sm:$0xff]
    %v2814 = vld [vmem:[#allocation5 + $0x1c8] sm:$0xff]
    %v2815 = vld [vmem:[#allocation5 + $0x1d0] sm:$0xff]
    %v2816 = vld [vmem:[#allocation5 + $0x1d8] sm:$0xff]
    %v2817 = vld [vmem:[#allocation5 + $0x1e0] sm:$0xff]
    %v2818 = vld [vmem:[#allocation5 + $0x1e8] sm:$0xff]
    %v2819 = vld [vmem:[#allocation5 + $0x1f0] sm:$0xff]
    %v2820 = vld [vmem:[#allocation5 + $0x1f8] sm:$0xff]
    %v2821 = vld [vmem:[#allocation7] sm:$0xff]
    %v2822 = vld [vmem:[#allocation7 + $0x8] sm:$0xff]
    %v2823 = vld [vmem:[#allocation7 + $0x10] sm:$0xff]
    %v2824 = vld [vmem:[#allocation7 + $0x18] sm:$0xff]
    %v2825 = vld [vmem:[#allocation7 + $0x20] sm:$0xff]
    %v2826 = vld [vmem:[#allocation7 + $0x28] sm:$0xff]
    %v2827 = vld [vmem:[#allocation7 + $0x30] sm:$0xff]
    %v2828 = vld [vmem:[#allocation7 + $0x38] sm:$0xff]
    %v2829 = vld [vmem:[#allocation7 + $0x40] sm:$0xff]
    %v2830 = vld [vmem:[#allocation7 + $0x48] sm:$0xff]
    %v2831 = vld [vmem:[#allocation7 + $0x50] sm:$0xff]
    %v2832 = vld [vmem:[#allocation7 + $0x58] sm:$0xff]
    %v2833 = vld [vmem:[#allocation7 + $0x60] sm:$0xff]
    %v2834 = vld [vmem:[#allocation7 + $0x68] sm:$0xff]
    %v2835 = vld [vmem:[#allocation7 + $0x70] sm:$0xff]
    %v2836 = vld [vmem:[#allocation7 + $0x78] sm:$0xff]
    %v2837 = vld [vmem:[#allocation7 + $0x80] sm:$0xff]
    %v2838 = vld [vmem:[#allocation7 + $0x88] sm:$0xff]
    %v2839 = vld [vmem:[#allocation7 + $0x90] sm:$0xff]
    %v2840 = vld [vmem:[#allocation7 + $0x98] sm:$0xff]
    %v2841 = vld [vmem:[#allocation7 + $0xa0] sm:$0xff]
    %v2842 = vld [vmem:[#allocation7 + $0xa8] sm:$0xff]
    %v2843 = vld [vmem:[#allocation7 + $0xb0] sm:$0xff]
    %v2844 = vld [vmem:[#allocation7 + $0xb8] sm:$0xff]
    %v2845 = vld [vmem:[#allocation7 + $0xc0] sm:$0xff]
    %v2846 = vld [vmem:[#allocation7 + $0xc8] sm:$0xff]
    %v2847 = vld [vmem:[#allocation7 + $0xd0] sm:$0xff]
    %v2848 = vld [vmem:[#allocation7 + $0xd8] sm:$0xff]
    %v2849 = vld [vmem:[#allocation7 + $0xe0] sm:$0xff]
    %v2850 = vld [vmem:[#allocation7 + $0xe8] sm:$0xff]
    %v2851 = vld [vmem:[#allocation7 + $0xf0] sm:$0xff]
    %v2852 = vld [vmem:[#allocation7 + $0xf8] sm:$0xff]
    %v2853 = vld [vmem:[#allocation7 + $0x100] sm:$0xff]
    %v2854 = vld [vmem:[#allocation7 + $0x108] sm:$0xff]
    %v2855 = vld [vmem:[#allocation7 + $0x110] sm:$0xff]
    %v2856 = vld [vmem:[#allocation7 + $0x118] sm:$0xff]
    %v2857 = vld [vmem:[#allocation7 + $0x120] sm:$0xff]
    %v2858 = vld [vmem:[#allocation7 + $0x128] sm:$0xff]
    %v2859 = vld [vmem:[#allocation7 + $0x130] sm:$0xff]
    %v2860 = vld [vmem:[#allocation7 + $0x138] sm:$0xff]
    %v2861 = vld [vmem:[#allocation7 + $0x140] sm:$0xff]
    %v2862 = vld [vmem:[#allocation7 + $0x148] sm:$0xff]
    %v2863 = vld [vmem:[#allocation7 + $0x150] sm:$0xff]
    %v2864 = vld [vmem:[#allocation7 + $0x158] sm:$0xff]
    %v2865 = vld [vmem:[#allocation7 + $0x160] sm:$0xff]
    %v2866 = vld [vmem:[#allocation7 + $0x168] sm:$0xff]
    %v2867 = vld [vmem:[#allocation7 + $0x170] sm:$0xff]
    %v2868 = vld [vmem:[#allocation7 + $0x178] sm:$0xff]
    %v2869 = vld [vmem:[#allocation7 + $0x180] sm:$0xff]
    %v2870 = vld [vmem:[#allocation7 + $0x188] sm:$0xff]
    %v2871 = vld [vmem:[#allocation7 + $0x190] sm:$0xff]
    %v2872 = vld [vmem:[#allocation7 + $0x198] sm:$0xff]
    %v2873 = vld [vmem:[#allocation7 + $0x1a0] sm:$0xff]
    %v2874 = vld [vmem:[#allocation7 + $0x1a8] sm:$0xff]
    %v2875 = vld [vmem:[#allocation7 + $0x1b0] sm:$0xff]
    %v2876 = vld [vmem:[#allocation7 + $0x1b8] sm:$0xff]
    %v2877 = vld [vmem:[#allocation7 + $0x1c0] sm:$0xff]
    %v2878 = vld [vmem:[#allocation7 + $0x1c8] sm:$0xff]
    %v2879 = vld [vmem:[#allocation7 + $0x1d0] sm:$0xff]
    %v2880 = vld [vmem:[#allocation7 + $0x1d8] sm:$0xff]
    %v2881 = vld [vmem:[#allocation7 + $0x1e0] sm:$0xff]
    %v2882 = vld [vmem:[#allocation7 + $0x1e8] sm:$0xff]
    %v2883 = vld [vmem:[#allocation7 + $0x1f0] sm:$0xff]
    %v2884 = vld [vmem:[#allocation7 + $0x1f8] sm:$0xff]
    %2885 = vmatprep.subr.mxu0 %v2882
    %2886 = vmatpush1.msra.mxu0 %v2881
    %2887 = vmatprep.subr.mxu0 %v2878
    %2888 = vmatpush1.msra.mxu0 %v2877
    %2889 = vmatprep.subr.mxu0 %v2874
    %2890 = vmatpush1.msra.mxu0 %v2873
    %2891 = vmatprep.subr.mxu0 %v2870
    %2892 = vmatpush1.msra.mxu0 %v2869
    %2893 = vmatprep.subr.mxu0 %v2866
    %2894 = vmatpush1.msra.mxu0 %v2865
    %2895 = vmatprep.subr.mxu0 %v2862
    %2896 = vmatpush1.msra.mxu0 %v2861
    %2897 = vmatprep.subr.mxu0 %v2858
    %2898 = vmatpush1.msra.mxu0 %v2857
    %2899 = vmatprep.subr.mxu0 %v2854
    %2900 = vmatpush1.msra.mxu0 %v2853
    %2901 = vmatprep.subr.mxu0 %v2850
    %2902 = vmatpush1.msra.mxu0 %v2849
    %2903 = vmatprep.subr.mxu0 %v2846
    %2904 = vmatpush1.msra.mxu0 %v2845
    %2905 = vmatprep.subr.mxu0 %v2842
    %2906 = vmatpush1.msra.mxu0 %v2841
    %2907 = vmatprep.subr.mxu0 %v2838
    %2908 = vmatpush1.msra.mxu0 %v2837
    %2909 = vmatprep.subr.mxu0 %v2834
    %2910 = vmatpush1.msra.mxu0 %v2833
    %2911 = vmatprep.subr.mxu0 %v2830
    %2912 = vmatpush1.msra.mxu0 %v2829
    %2913 = vmatprep.subr.mxu0 %v2826
    %2914 = vmatpush1.msra.mxu0 %v2825
    %2915 = vmatprep.subr.mxu0 %v2822
    %2916 = vmatpush1.msra.mxu0 %v2821
    %2917 = vmatprep.subr.mxu0 0.0
    %2918 = vmatpush2.msra.mxu0 0.0
    %2919 = vmatprep.subr.mxu0 0.0
    %2920 = vmatpush2.msra.mxu0 0.0
    %2921 = vmatprep.subr.mxu0 0.0
    %2922 = vmatpush2.msra.mxu0 0.0
    %2923 = vmatprep.subr.mxu0 0.0
    %2924 = vmatpush2.msra.mxu0 0.0
    %2925 = vmatprep.subr.mxu0 0.0
    %2926 = vmatpush2.msra.mxu0 0.0
    %2927 = vmatprep.subr.mxu0 0.0
    %2928 = vmatpush2.msra.mxu0 0.0
    %2929 = vmatprep.subr.mxu0 0.0
    %2930 = vmatpush2.msra.mxu0 0.0
    %2931 = vmatprep.subr.mxu0 0.0
    %2932 = vmatpush2.msra.mxu0 0.0
    %2933 = vmatprep.subr.mxu0 0.0
    %2934 = vmatpush2.msra.mxu0 0.0
    %2935 = vmatprep.subr.mxu0 0.0
    %2936 = vmatpush2.msra.mxu0 0.0
    %2937 = vmatprep.subr.mxu0 0.0
    %2938 = vmatpush2.msra.mxu0 0.0
    %2939 = vmatprep.subr.mxu0 0.0
    %2940 = vmatpush2.msra.mxu0 0.0
    %2941 = vmatprep.subr.mxu0 0.0
    %2942 = vmatpush2.msra.mxu0 0.0
    %2943 = vmatprep.subr.mxu0 0.0
    %2944 = vmatpush2.msra.mxu0 0.0
    %2945 = vmatprep.subr.mxu0 0.0
    %2946 = vmatpush2.msra.mxu0 0.0
    %2947 = vmatprep.subr.mxu0 0.0
    %2948 = vmatpush2.msra.mxu0 0.0
    %2949 = vmatprep.mubr.f32.mxu0 0.0
    %2950 = vmatmul.mubr.f32.gmra.mxu0 %v2752
    %v2951 = vpop.f32.mrf.mxu0
    %v2952 = vadd.f32 0.0, %v2951
    %v2953 = vpop.f32.mrf.mxu0
    %v2954 = vadd.f32 0.0, %v2953
    %2955 = vdwg.mxu0
    %2956 = vmatprep.subr.mxu0 %v2884
    %2957 = vmatpush1.msra.mxu0 %v2883
    %2958 = vmatprep.subr.mxu0 %v2880
    %2959 = vmatpush1.msra.mxu0 %v2879
    %2960 = vmatprep.subr.mxu0 %v2876
    %2961 = vmatpush1.msra.mxu0 %v2875
    %2962 = vmatprep.subr.mxu0 %v2872
    %2963 = vmatpush1.msra.mxu0 %v2871
    %2964 = vmatprep.subr.mxu0 %v2868
    %2965 = vmatpush1.msra.mxu0 %v2867
    %2966 = vmatprep.subr.mxu0 %v2864
    %2967 = vmatpush1.msra.mxu0 %v2863
    %2968 = vmatprep.subr.mxu0 %v2860
    %2969 = vmatpush1.msra.mxu0 %v2859
    %2970 = vmatprep.subr.mxu0 %v2856
    %2971 = vmatpush1.msra.mxu0 %v2855
    %2972 = vmatprep.subr.mxu0 %v2852
    %2973 = vmatpush1.msra.mxu0 %v2851
    %2974 = vmatprep.subr.mxu0 %v2848
    %2975 = vmatpush1.msra.mxu0 %v2847
    %2976 = vmatprep.subr.mxu0 %v2844
    %2977 = vmatpush1.msra.mxu0 %v2843
    %2978 = vmatprep.subr.mxu0 %v2840
    %2979 = vmatpush1.msra.mxu0 %v2839
    %2980 = vmatprep.subr.mxu0 %v2836
    %2981 = vmatpush1.msra.mxu0 %v2835
    %2982 = vmatprep.subr.mxu0 %v2832
    %2983 = vmatpush1.msra.mxu0 %v2831
    %2984 = vmatprep.subr.mxu0 %v2828
    %2985 = vmatpush1.msra.mxu0 %v2827
    %2986 = vmatprep.subr.mxu0 %v2824
    %2987 = vmatpush1.msra.mxu0 %v2823
    %2988 = vmatprep.subr.mxu0 0.0
    %2989 = vmatpush2.msra.mxu0 0.0
    %2990 = vmatprep.subr.mxu0 0.0
    %2991 = vmatpush2.msra.mxu0 0.0
    %2992 = vmatprep.subr.mxu0 0.0
    %2993 = vmatpush2.msra.mxu0 0.0
    %2994 = vmatprep.subr.mxu0 0.0
    %2995 = vmatpush2.msra.mxu0 0.0
    %2996 = vmatprep.subr.mxu0 0.0
    %2997 = vmatpush2.msra.mxu0 0.0
    %2998 = vmatprep.subr.mxu0 0.0
    %2999 = vmatpush2.msra.mxu0 0.0
    %3000 = vmatprep.subr.mxu0 0.0
    %3001 = vmatpush2.msra.mxu0 0.0
    %3002 = vmatprep.subr.mxu0 0.0
    %3003 = vmatpush2.msra.mxu0 0.0
    %3004 = vmatprep.subr.mxu0 0.0
    %3005 = vmatpush2.msra.mxu0 0.0
    %3006 = vmatprep.subr.mxu0 0.0
    %3007 = vmatpush2.msra.mxu0 0.0
    %3008 = vmatprep.subr.mxu0 0.0
    %3009 = vmatpush2.msra.mxu0 0.0
    %3010 = vmatprep.subr.mxu0 0.0
    %3011 = vmatpush2.msra.mxu0 0.0
    %3012 = vmatprep.subr.mxu0 0.0
    %3013 = vmatpush2.msra.mxu0 0.0
    %3014 = vmatprep.subr.mxu0 0.0
    %3015 = vmatpush2.msra.mxu0 0.0
    %3016 = vmatprep.subr.mxu0 0.0
    %3017 = vmatpush2.msra.mxu0 0.0
    %3018 = vmatprep.subr.mxu0 0.0
    %3019 = vmatpush2.msra.mxu0 0.0
    %3020 = vmatprep.mubr.f32.mxu0 0.0
    %3021 = vmatmul.mubr.f32.gmra.mxu0 %v2752
    %v3022 = vpop.f32.mrf.mxu0
    %v3023 = vadd.f32 0.0, %v3022
    %v3024 = vpop.f32.mrf.mxu0
    %v3025 = vadd.f32 0.0, %v3024
    %3026 = vdwg.mxu0
    %3027 = vmatprep.subr.mxu0 %v2818
    %3028 = vmatpush1.msra.mxu0 %v2817
    %3029 = vmatprep.subr.mxu0 %v2814
    %3030 = vmatpush1.msra.mxu0 %v2813
    %3031 = vmatprep.subr.mxu0 %v2810
    %3032 = vmatpush1.msra.mxu0 %v2809
    %3033 = vmatprep.subr.mxu0 %v2806
    %3034 = vmatpush1.msra.mxu0 %v2805
    %3035 = vmatprep.subr.mxu0 %v2802
    %3036 = vmatpush1.msra.mxu0 %v2801
    %3037 = vmatprep.subr.mxu0 %v2798
    %3038 = vmatpush1.msra.mxu0 %v2797
    %3039 = vmatprep.subr.mxu0 %v2794
    %3040 = vmatpush1.msra.mxu0 %v2793
    %3041 = vmatprep.subr.mxu0 %v2790
    %3042 = vmatpush1.msra.mxu0 %v2789
    %3043 = vmatprep.subr.mxu0 %v2786
    %3044 = vmatpush1.msra.mxu0 %v2785
    %3045 = vmatprep.subr.mxu0 %v2782
    %3046 = vmatpush1.msra.mxu0 %v2781
    %3047 = vmatprep.subr.mxu0 %v2778
    %3048 = vmatpush1.msra.mxu0 %v2777
    %3049 = vmatprep.subr.mxu0 %v2774
    %3050 = vmatpush1.msra.mxu0 %v2773
    %3051 = vmatprep.subr.mxu0 %v2770
    %3052 = vmatpush1.msra.mxu0 %v2769
    %3053 = vmatprep.subr.mxu0 %v2766
    %3054 = vmatpush1.msra.mxu0 %v2765
    %3055 = vmatprep.subr.mxu0 %v2762
    %3056 = vmatpush1.msra.mxu0 %v2761
    %3057 = vmatprep.subr.mxu0 %v2758
    %3058 = vmatpush1.msra.mxu0 %v2757
    %3059 = vmatprep.subr.mxu0 0.0
    %3060 = vmatpush2.msra.mxu0 0.0
    %3061 = vmatprep.subr.mxu0 0.0
    %3062 = vmatpush2.msra.mxu0 0.0
    %3063 = vmatprep.subr.mxu0 0.0
    %3064 = vmatpush2.msra.mxu0 0.0
    %3065 = vmatprep.subr.mxu0 0.0
    %3066 = vmatpush2.msra.mxu0 0.0
    %3067 = vmatprep.subr.mxu0 0.0
    %3068 = vmatpush2.msra.mxu0 0.0
    %3069 = vmatprep.subr.mxu0 0.0
    %3070 = vmatpush2.msra.mxu0 0.0
    %3071 = vmatprep.subr.mxu0 0.0
    %3072 = vmatpush2.msra.mxu0 0.0
    %3073 = vmatprep.subr.mxu0 0.0
    %3074 = vmatpush2.msra.mxu0 0.0
    %3075 = vmatprep.subr.mxu0 0.0
    %3076 = vmatpush2.msra.mxu0 0.0
    %3077 = vmatprep.subr.mxu0 0.0
    %3078 = vmatpush2.msra.mxu0 0.0
    %3079 = vmatprep.subr.mxu0 0.0
    %3080 = vmatpush2.msra.mxu0 0.0
    %3081 = vmatprep.subr.mxu0 0.0
    %3082 = vmatpush2.msra.mxu0 0.0
    %3083 = vmatprep.subr.mxu0 0.0
    %3084 = vmatpush2.msra.mxu0 0.0
    %3085 = vmatprep.subr.mxu0 0.0
    %3086 = vmatpush2.msra.mxu0 0.0
    %3087 = vmatprep.subr.mxu0 0.0
    %3088 = vmatpush2.msra.mxu0 0.0
    %3089 = vmatprep.subr.mxu0 0.0
    %3090 = vmatpush2.msra.mxu0 0.0
    %3091 = vmatprep.mubr.f32.mxu0 0.0
    %3092 = vmatmul.mubr.f32.gmra.mxu0 %v2756
    %v3093 = vpop.f32.mrf.mxu0
    %v3094 = vadd.f32 %v2952, %v3093
    %v3095 = vpop.f32.mrf.mxu0
    %v3096 = vadd.f32 %v2954, %v3095
    %3097 = vdwg.mxu0
    %3098 = vmatprep.subr.mxu0 %v2820
    %3099 = vmatpush1.msra.mxu0 %v2819
    %3100 = vmatprep.subr.mxu0 %v2816
    %3101 = vmatpush1.msra.mxu0 %v2815
    %3102 = vmatprep.subr.mxu0 %v2812
    %3103 = vmatpush1.msra.mxu0 %v2811
    %3104 = vmatprep.subr.mxu0 %v2808
    %3105 = vmatpush1.msra.mxu0 %v2807
    %3106 = vmatprep.subr.mxu0 %v2804
    %3107 = vmatpush1.msra.mxu0 %v2803
    %3108 = vmatprep.subr.mxu0 %v2800
    %3109 = vmatpush1.msra.mxu0 %v2799
    %3110 = vmatprep.subr.mxu0 %v2796
    %3111 = vmatpush1.msra.mxu0 %v2795
    %3112 = vmatprep.subr.mxu0 %v2792
    %3113 = vmatpush1.msra.mxu0 %v2791
    %3114 = vmatprep.subr.mxu0 %v2788
    %3115 = vmatpush1.msra.mxu0 %v2787
    %3116 = vmatprep.subr.mxu0 %v2784
    %3117 = vmatpush1.msra.mxu0 %v2783
    %3118 = vmatprep.subr.mxu0 %v2780
    %3119 = vmatpush1.msra.mxu0 %v2779
    %3120 = vmatprep.subr.mxu0 %v2776
    %3121 = vmatpush1.msra.mxu0 %v2775
    %3122 = vmatprep.subr.mxu0 %v2772
    %3123 = vmatpush1.msra.mxu0 %v2771
    %3124 = vmatprep.subr.mxu0 %v2768
    %3125 = vmatpush1.msra.mxu0 %v2767
    %3126 = vmatprep.subr.mxu0 %v2764
    %3127 = vmatpush1.msra.mxu0 %v2763
    %3128 = vmatprep.subr.mxu0 %v2760
    %3129 = vmatpush1.msra.mxu0 %v2759
    %3130 = vmatprep.subr.mxu0 0.0
    %3131 = vmatpush2.msra.mxu0 0.0
    %3132 = vmatprep.subr.mxu0 0.0
    %3133 = vmatpush2.msra.mxu0 0.0
    %3134 = vmatprep.subr.mxu0 0.0
    %3135 = vmatpush2.msra.mxu0 0.0
    %3136 = vmatprep.subr.mxu0 0.0
    %3137 = vmatpush2.msra.mxu0 0.0
    %3138 = vmatprep.subr.mxu0 0.0
    %3139 = vmatpush2.msra.mxu0 0.0
    %3140 = vmatprep.subr.mxu0 0.0
    %3141 = vmatpush2.msra.mxu0 0.0
    %3142 = vmatprep.subr.mxu0 0.0
    %3143 = vmatpush2.msra.mxu0 0.0
    %3144 = vmatprep.subr.mxu0 0.0
    %3145 = vmatpush2.msra.mxu0 0.0
    %3146 = vmatprep.subr.mxu0 0.0
    %3147 = vmatpush2.msra.mxu0 0.0
    %3148 = vmatprep.subr.mxu0 0.0
    %3149 = vmatpush2.msra.mxu0 0.0
    %3150 = vmatprep.subr.mxu0 0.0
    %3151 = vmatpush2.msra.mxu0 0.0
    %3152 = vmatprep.subr.mxu0 0.0
    %3153 = vmatpush2.msra.mxu0 0.0
    %3154 = vmatprep.subr.mxu0 0.0
    %3155 = vmatpush2.msra.mxu0 0.0
    %3156 = vmatprep.subr.mxu0 0.0
    %3157 = vmatpush2.msra.mxu0 0.0
    %3158 = vmatprep.subr.mxu0 0.0
    %3159 = vmatpush2.msra.mxu0 0.0
    %3160 = vmatprep.subr.mxu0 0.0
    %3161 = vmatpush2.msra.mxu0 0.0
    %3162 = vmatprep.mubr.f32.mxu0 0.0
    %3163 = vmatmul.mubr.f32.gmra.mxu0 %v2756
    %v3164 = vpop.f32.mrf.mxu0
    %v3165 = vadd.f32 %v3023, %v3164
    %v3166 = vpop.f32.mrf.mxu0
    %v3167 = vadd.f32 %v3025, %v3166
    %3168 = vdwg.mxu0
    %v3169 = vadd.f32 %v3094, %v74
    %v3170 = vadd.f32 %v3096, %v78
    %v3171 = vadd.f32 %v3165, %v82
    %v3172 = vadd.f32 %v3167, %v86
    %v3173 = vxor.u32 %v3169, 2147483648
    %v3174 = vmul.f32 %v3173, 1.442695
    %v3175 = vpow.pop %v3174
    %v3176 = vadd.f32 %v3175, 1.0
    %v3177 = vrcp.pop %v3176
    %v3178 = vmul.f32 1.0, %v3177
    %v3179 = vxor.u32 %v3170, 2147483648
    %v3180 = vmul.f32 %v3179, 1.442695
    %v3181 = vpow.pop %v3180
    %v3182 = vadd.f32 %v3181, 1.0
    %v3183 = vrcp.pop %v3182
    %v3184 = vmul.f32 1.0, %v3183
    %v3185 = vtanh.pop %v3171
    %v3186 = vxor.u32 %v3172, 2147483648
    %v3187 = vmul.f32 %v3186, 1.442695
    %v3188 = vpow.pop %v3187
    %v3189 = vadd.f32 %v3188, 1.0
    %v3190 = vrcp.pop %v3189
    %v3191 = vmul.f32 1.0, %v3190
    %v3192 = vmul.f32 %v3184, %v2750
    %v3193 = vmul.f32 %v3178, %v3185
    %v3194 = vadd.f32 %v3192, %v3193
    %v3195 = vtanh.pop %v3194
    %v3196 = vmul.f32 %v3191, %v3195
    %s3197 = scalar_lea.vmem [#allocation8], 12
    %3198 = vst [vmem:[%s3197] sm:$0x3] %v3196
    %s3199 = scalar_lea.vmem [#allocation2], 14
    %v3200 = vld [vmem:[%s3199] sm:$0x3]
    %v3201 = vld [vmem:[#allocation5] sm:$0xff]
    %v3202 = vld [vmem:[#allocation5 + $0x8] sm:$0xff]
    %v3203 = vld [vmem:[#allocation5 + $0x10] sm:$0xff]
    %v3204 = vld [vmem:[#allocation5 + $0x18] sm:$0xff]
    %v3205 = vld [vmem:[#allocation5 + $0x20] sm:$0xff]
    %v3206 = vld [vmem:[#allocation5 + $0x28] sm:$0xff]
    %v3207 = vld [vmem:[#allocation5 + $0x30] sm:$0xff]
    %v3208 = vld [vmem:[#allocation5 + $0x38] sm:$0xff]
    %v3209 = vld [vmem:[#allocation5 + $0x40] sm:$0xff]
    %v3210 = vld [vmem:[#allocation5 + $0x48] sm:$0xff]
    %v3211 = vld [vmem:[#allocation5 + $0x50] sm:$0xff]
    %v3212 = vld [vmem:[#allocation5 + $0x58] sm:$0xff]
    %v3213 = vld [vmem:[#allocation5 + $0x60] sm:$0xff]
    %v3214 = vld [vmem:[#allocation5 + $0x68] sm:$0xff]
    %v3215 = vld [vmem:[#allocation5 + $0x70] sm:$0xff]
    %v3216 = vld [vmem:[#allocation5 + $0x78] sm:$0xff]
    %v3217 = vld [vmem:[#allocation5 + $0x80] sm:$0xff]
    %v3218 = vld [vmem:[#allocation5 + $0x88] sm:$0xff]
    %v3219 = vld [vmem:[#allocation5 + $0x90] sm:$0xff]
    %v3220 = vld [vmem:[#allocation5 + $0x98] sm:$0xff]
    %v3221 = vld [vmem:[#allocation5 + $0xa0] sm:$0xff]
    %v3222 = vld [vmem:[#allocation5 + $0xa8] sm:$0xff]
    %v3223 = vld [vmem:[#allocation5 + $0xb0] sm:$0xff]
    %v3224 = vld [vmem:[#allocation5 + $0xb8] sm:$0xff]
    %v3225 = vld [vmem:[#allocation5 + $0xc0] sm:$0xff]
    %v3226 = vld [vmem:[#allocation5 + $0xc8] sm:$0xff]
    %v3227 = vld [vmem:[#allocation5 + $0xd0] sm:$0xff]
    %v3228 = vld [vmem:[#allocation5 + $0xd8] sm:$0xff]
    %v3229 = vld [vmem:[#allocation5 + $0xe0] sm:$0xff]
    %v3230 = vld [vmem:[#allocation5 + $0xe8] sm:$0xff]
    %v3231 = vld [vmem:[#allocation5 + $0xf0] sm:$0xff]
    %v3232 = vld [vmem:[#allocation5 + $0xf8] sm:$0xff]
    %v3233 = vld [vmem:[#allocation5 + $0x100] sm:$0xff]
    %v3234 = vld [vmem:[#allocation5 + $0x108] sm:$0xff]
    %v3235 = vld [vmem:[#allocation5 + $0x110] sm:$0xff]
    %v3236 = vld [vmem:[#allocation5 + $0x118] sm:$0xff]
    %v3237 = vld [vmem:[#allocation5 + $0x120] sm:$0xff]
    %v3238 = vld [vmem:[#allocation5 + $0x128] sm:$0xff]
    %v3239 = vld [vmem:[#allocation5 + $0x130] sm:$0xff]
    %v3240 = vld [vmem:[#allocation5 + $0x138] sm:$0xff]
    %v3241 = vld [vmem:[#allocation5 + $0x140] sm:$0xff]
    %v3242 = vld [vmem:[#allocation5 + $0x148] sm:$0xff]
    %v3243 = vld [vmem:[#allocation5 + $0x150] sm:$0xff]
    %v3244 = vld [vmem:[#allocation5 + $0x158] sm:$0xff]
    %v3245 = vld [vmem:[#allocation5 + $0x160] sm:$0xff]
    %v3246 = vld [vmem:[#allocation5 + $0x168] sm:$0xff]
    %v3247 = vld [vmem:[#allocation5 + $0x170] sm:$0xff]
    %v3248 = vld [vmem:[#allocation5 + $0x178] sm:$0xff]
    %v3249 = vld [vmem:[#allocation5 + $0x180] sm:$0xff]
    %v3250 = vld [vmem:[#allocation5 + $0x188] sm:$0xff]
    %v3251 = vld [vmem:[#allocation5 + $0x190] sm:$0xff]
    %v3252 = vld [vmem:[#allocation5 + $0x198] sm:$0xff]
    %v3253 = vld [vmem:[#allocation5 + $0x1a0] sm:$0xff]
    %v3254 = vld [vmem:[#allocation5 + $0x1a8] sm:$0xff]
    %v3255 = vld [vmem:[#allocation5 + $0x1b0] sm:$0xff]
    %v3256 = vld [vmem:[#allocation5 + $0x1b8] sm:$0xff]
    %v3257 = vld [vmem:[#allocation5 + $0x1c0] sm:$0xff]
    %v3258 = vld [vmem:[#allocation5 + $0x1c8] sm:$0xff]
    %v3259 = vld [vmem:[#allocation5 + $0x1d0] sm:$0xff]
    %v3260 = vld [vmem:[#allocation5 + $0x1d8] sm:$0xff]
    %v3261 = vld [vmem:[#allocation5 + $0x1e0] sm:$0xff]
    %v3262 = vld [vmem:[#allocation5 + $0x1e8] sm:$0xff]
    %v3263 = vld [vmem:[#allocation5 + $0x1f0] sm:$0xff]
    %v3264 = vld [vmem:[#allocation5 + $0x1f8] sm:$0xff]
    %v3265 = vld [vmem:[#allocation7] sm:$0xff]
    %v3266 = vld [vmem:[#allocation7 + $0x8] sm:$0xff]
    %v3267 = vld [vmem:[#allocation7 + $0x10] sm:$0xff]
    %v3268 = vld [vmem:[#allocation7 + $0x18] sm:$0xff]
    %v3269 = vld [vmem:[#allocation7 + $0x20] sm:$0xff]
    %v3270 = vld [vmem:[#allocation7 + $0x28] sm:$0xff]
    %v3271 = vld [vmem:[#allocation7 + $0x30] sm:$0xff]
    %v3272 = vld [vmem:[#allocation7 + $0x38] sm:$0xff]
    %v3273 = vld [vmem:[#allocation7 + $0x40] sm:$0xff]
    %v3274 = vld [vmem:[#allocation7 + $0x48] sm:$0xff]
    %v3275 = vld [vmem:[#allocation7 + $0x50] sm:$0xff]
    %v3276 = vld [vmem:[#allocation7 + $0x58] sm:$0xff]
    %v3277 = vld [vmem:[#allocation7 + $0x60] sm:$0xff]
    %v3278 = vld [vmem:[#allocation7 + $0x68] sm:$0xff]
    %v3279 = vld [vmem:[#allocation7 + $0x70] sm:$0xff]
    %v3280 = vld [vmem:[#allocation7 + $0x78] sm:$0xff]
    %v3281 = vld [vmem:[#allocation7 + $0x80] sm:$0xff]
    %v3282 = vld [vmem:[#allocation7 + $0x88] sm:$0xff]
    %v3283 = vld [vmem:[#allocation7 + $0x90] sm:$0xff]
    %v3284 = vld [vmem:[#allocation7 + $0x98] sm:$0xff]
    %v3285 = vld [vmem:[#allocation7 + $0xa0] sm:$0xff]
    %v3286 = vld [vmem:[#allocation7 + $0xa8] sm:$0xff]
    %v3287 = vld [vmem:[#allocation7 + $0xb0] sm:$0xff]
    %v3288 = vld [vmem:[#allocation7 + $0xb8] sm:$0xff]
    %v3289 = vld [vmem:[#allocation7 + $0xc0] sm:$0xff]
    %v3290 = vld [vmem:[#allocation7 + $0xc8] sm:$0xff]
    %v3291 = vld [vmem:[#allocation7 + $0xd0] sm:$0xff]
    %v3292 = vld [vmem:[#allocation7 + $0xd8] sm:$0xff]
    %v3293 = vld [vmem:[#allocation7 + $0xe0] sm:$0xff]
    %v3294 = vld [vmem:[#allocation7 + $0xe8] sm:$0xff]
    %v3295 = vld [vmem:[#allocation7 + $0xf0] sm:$0xff]
    %v3296 = vld [vmem:[#allocation7 + $0xf8] sm:$0xff]
    %v3297 = vld [vmem:[#allocation7 + $0x100] sm:$0xff]
    %v3298 = vld [vmem:[#allocation7 + $0x108] sm:$0xff]
    %v3299 = vld [vmem:[#allocation7 + $0x110] sm:$0xff]
    %v3300 = vld [vmem:[#allocation7 + $0x118] sm:$0xff]
    %v3301 = vld [vmem:[#allocation7 + $0x120] sm:$0xff]
    %v3302 = vld [vmem:[#allocation7 + $0x128] sm:$0xff]
    %v3303 = vld [vmem:[#allocation7 + $0x130] sm:$0xff]
    %v3304 = vld [vmem:[#allocation7 + $0x138] sm:$0xff]
    %v3305 = vld [vmem:[#allocation7 + $0x140] sm:$0xff]
    %v3306 = vld [vmem:[#allocation7 + $0x148] sm:$0xff]
    %v3307 = vld [vmem:[#allocation7 + $0x150] sm:$0xff]
    %v3308 = vld [vmem:[#allocation7 + $0x158] sm:$0xff]
    %v3309 = vld [vmem:[#allocation7 + $0x160] sm:$0xff]
    %v3310 = vld [vmem:[#allocation7 + $0x168] sm:$0xff]
    %v3311 = vld [vmem:[#allocation7 + $0x170] sm:$0xff]
    %v3312 = vld [vmem:[#allocation7 + $0x178] sm:$0xff]
    %v3313 = vld [vmem:[#allocation7 + $0x180] sm:$0xff]
    %v3314 = vld [vmem:[#allocation7 + $0x188] sm:$0xff]
    %v3315 = vld [vmem:[#allocation7 + $0x190] sm:$0xff]
    %v3316 = vld [vmem:[#allocation7 + $0x198] sm:$0xff]
    %v3317 = vld [vmem:[#allocation7 + $0x1a0] sm:$0xff]
    %v3318 = vld [vmem:[#allocation7 + $0x1a8] sm:$0xff]
    %v3319 = vld [vmem:[#allocation7 + $0x1b0] sm:$0xff]
    %v3320 = vld [vmem:[#allocation7 + $0x1b8] sm:$0xff]
    %v3321 = vld [vmem:[#allocation7 + $0x1c0] sm:$0xff]
    %v3322 = vld [vmem:[#allocation7 + $0x1c8] sm:$0xff]
    %v3323 = vld [vmem:[#allocation7 + $0x1d0] sm:$0xff]
    %v3324 = vld [vmem:[#allocation7 + $0x1d8] sm:$0xff]
    %v3325 = vld [vmem:[#allocation7 + $0x1e0] sm:$0xff]
    %v3326 = vld [vmem:[#allocation7 + $0x1e8] sm:$0xff]
    %v3327 = vld [vmem:[#allocation7 + $0x1f0] sm:$0xff]
    %v3328 = vld [vmem:[#allocation7 + $0x1f8] sm:$0xff]
    %3329 = vmatprep.subr.mxu0 %v3326
    %3330 = vmatpush1.msra.mxu0 %v3325
    %3331 = vmatprep.subr.mxu0 %v3322
    %3332 = vmatpush1.msra.mxu0 %v3321
    %3333 = vmatprep.subr.mxu0 %v3318
    %3334 = vmatpush1.msra.mxu0 %v3317
    %3335 = vmatprep.subr.mxu0 %v3314
    %3336 = vmatpush1.msra.mxu0 %v3313
    %3337 = vmatprep.subr.mxu0 %v3310
    %3338 = vmatpush1.msra.mxu0 %v3309
    %3339 = vmatprep.subr.mxu0 %v3306
    %3340 = vmatpush1.msra.mxu0 %v3305
    %3341 = vmatprep.subr.mxu0 %v3302
    %3342 = vmatpush1.msra.mxu0 %v3301
    %3343 = vmatprep.subr.mxu0 %v3298
    %3344 = vmatpush1.msra.mxu0 %v3297
    %3345 = vmatprep.subr.mxu0 %v3294
    %3346 = vmatpush1.msra.mxu0 %v3293
    %3347 = vmatprep.subr.mxu0 %v3290
    %3348 = vmatpush1.msra.mxu0 %v3289
    %3349 = vmatprep.subr.mxu0 %v3286
    %3350 = vmatpush1.msra.mxu0 %v3285
    %3351 = vmatprep.subr.mxu0 %v3282
    %3352 = vmatpush1.msra.mxu0 %v3281
    %3353 = vmatprep.subr.mxu0 %v3278
    %3354 = vmatpush1.msra.mxu0 %v3277
    %3355 = vmatprep.subr.mxu0 %v3274
    %3356 = vmatpush1.msra.mxu0 %v3273
    %3357 = vmatprep.subr.mxu0 %v3270
    %3358 = vmatpush1.msra.mxu0 %v3269
    %3359 = vmatprep.subr.mxu0 %v3266
    %3360 = vmatpush1.msra.mxu0 %v3265
    %3361 = vmatprep.subr.mxu0 0.0
    %3362 = vmatpush2.msra.mxu0 0.0
    %3363 = vmatprep.subr.mxu0 0.0
    %3364 = vmatpush2.msra.mxu0 0.0
    %3365 = vmatprep.subr.mxu0 0.0
    %3366 = vmatpush2.msra.mxu0 0.0
    %3367 = vmatprep.subr.mxu0 0.0
    %3368 = vmatpush2.msra.mxu0 0.0
    %3369 = vmatprep.subr.mxu0 0.0
    %3370 = vmatpush2.msra.mxu0 0.0
    %3371 = vmatprep.subr.mxu0 0.0
    %3372 = vmatpush2.msra.mxu0 0.0
    %3373 = vmatprep.subr.mxu0 0.0
    %3374 = vmatpush2.msra.mxu0 0.0
    %3375 = vmatprep.subr.mxu0 0.0
    %3376 = vmatpush2.msra.mxu0 0.0
    %3377 = vmatprep.subr.mxu0 0.0
    %3378 = vmatpush2.msra.mxu0 0.0
    %3379 = vmatprep.subr.mxu0 0.0
    %3380 = vmatpush2.msra.mxu0 0.0
    %3381 = vmatprep.subr.mxu0 0.0
    %3382 = vmatpush2.msra.mxu0 0.0
    %3383 = vmatprep.subr.mxu0 0.0
    %3384 = vmatpush2.msra.mxu0 0.0
    %3385 = vmatprep.subr.mxu0 0.0
    %3386 = vmatpush2.msra.mxu0 0.0
    %3387 = vmatprep.subr.mxu0 0.0
    %3388 = vmatpush2.msra.mxu0 0.0
    %3389 = vmatprep.subr.mxu0 0.0
    %3390 = vmatpush2.msra.mxu0 0.0
    %3391 = vmatprep.subr.mxu0 0.0
    %3392 = vmatpush2.msra.mxu0 0.0
    %3393 = vmatprep.mubr.f32.mxu0 0.0
    %3394 = vmatmul.mubr.f32.gmra.mxu0 %v3196
    %v3395 = vpop.f32.mrf.mxu0
    %v3396 = vadd.f32 0.0, %v3395
    %v3397 = vpop.f32.mrf.mxu0
    %v3398 = vadd.f32 0.0, %v3397
    %3399 = vdwg.mxu0
    %3400 = vmatprep.subr.mxu0 %v3328
    %3401 = vmatpush1.msra.mxu0 %v3327
    %3402 = vmatprep.subr.mxu0 %v3324
    %3403 = vmatpush1.msra.mxu0 %v3323
    %3404 = vmatprep.subr.mxu0 %v3320
    %3405 = vmatpush1.msra.mxu0 %v3319
    %3406 = vmatprep.subr.mxu0 %v3316
    %3407 = vmatpush1.msra.mxu0 %v3315
    %3408 = vmatprep.subr.mxu0 %v3312
    %3409 = vmatpush1.msra.mxu0 %v3311
    %3410 = vmatprep.subr.mxu0 %v3308
    %3411 = vmatpush1.msra.mxu0 %v3307
    %3412 = vmatprep.subr.mxu0 %v3304
    %3413 = vmatpush1.msra.mxu0 %v3303
    %3414 = vmatprep.subr.mxu0 %v3300
    %3415 = vmatpush1.msra.mxu0 %v3299
    %3416 = vmatprep.subr.mxu0 %v3296
    %3417 = vmatpush1.msra.mxu0 %v3295
    %3418 = vmatprep.subr.mxu0 %v3292
    %3419 = vmatpush1.msra.mxu0 %v3291
    %3420 = vmatprep.subr.mxu0 %v3288
    %3421 = vmatpush1.msra.mxu0 %v3287
    %3422 = vmatprep.subr.mxu0 %v3284
    %3423 = vmatpush1.msra.mxu0 %v3283
    %3424 = vmatprep.subr.mxu0 %v3280
    %3425 = vmatpush1.msra.mxu0 %v3279
    %3426 = vmatprep.subr.mxu0 %v3276
    %3427 = vmatpush1.msra.mxu0 %v3275
    %3428 = vmatprep.subr.mxu0 %v3272
    %3429 = vmatpush1.msra.mxu0 %v3271
    %3430 = vmatprep.subr.mxu0 %v3268
    %3431 = vmatpush1.msra.mxu0 %v3267
    %3432 = vmatprep.subr.mxu0 0.0
    %3433 = vmatpush2.msra.mxu0 0.0
    %3434 = vmatprep.subr.mxu0 0.0
    %3435 = vmatpush2.msra.mxu0 0.0
    %3436 = vmatprep.subr.mxu0 0.0
    %3437 = vmatpush2.msra.mxu0 0.0
    %3438 = vmatprep.subr.mxu0 0.0
    %3439 = vmatpush2.msra.mxu0 0.0
    %3440 = vmatprep.subr.mxu0 0.0
    %3441 = vmatpush2.msra.mxu0 0.0
    %3442 = vmatprep.subr.mxu0 0.0
    %3443 = vmatpush2.msra.mxu0 0.0
    %3444 = vmatprep.subr.mxu0 0.0
    %3445 = vmatpush2.msra.mxu0 0.0
    %3446 = vmatprep.subr.mxu0 0.0
    %3447 = vmatpush2.msra.mxu0 0.0
    %3448 = vmatprep.subr.mxu0 0.0
    %3449 = vmatpush2.msra.mxu0 0.0
    %3450 = vmatprep.subr.mxu0 0.0
    %3451 = vmatpush2.msra.mxu0 0.0
    %3452 = vmatprep.subr.mxu0 0.0
    %3453 = vmatpush2.msra.mxu0 0.0
    %3454 = vmatprep.subr.mxu0 0.0
    %3455 = vmatpush2.msra.mxu0 0.0
    %3456 = vmatprep.subr.mxu0 0.0
    %3457 = vmatpush2.msra.mxu0 0.0
    %3458 = vmatprep.subr.mxu0 0.0
    %3459 = vmatpush2.msra.mxu0 0.0
    %3460 = vmatprep.subr.mxu0 0.0
    %3461 = vmatpush2.msra.mxu0 0.0
    %3462 = vmatprep.subr.mxu0 0.0
    %3463 = vmatpush2.msra.mxu0 0.0
    %3464 = vmatprep.mubr.f32.mxu0 0.0
    %3465 = vmatmul.mubr.f32.gmra.mxu0 %v3196
    %v3466 = vpop.f32.mrf.mxu0
    %v3467 = vadd.f32 0.0, %v3466
    %v3468 = vpop.f32.mrf.mxu0
    %v3469 = vadd.f32 0.0, %v3468
    %3470 = vdwg.mxu0
    %3471 = vmatprep.subr.mxu0 %v3262
    %3472 = vmatpush1.msra.mxu0 %v3261
    %3473 = vmatprep.subr.mxu0 %v3258
    %3474 = vmatpush1.msra.mxu0 %v3257
    %3475 = vmatprep.subr.mxu0 %v3254
    %3476 = vmatpush1.msra.mxu0 %v3253
    %3477 = vmatprep.subr.mxu0 %v3250
    %3478 = vmatpush1.msra.mxu0 %v3249
    %3479 = vmatprep.subr.mxu0 %v3246
    %3480 = vmatpush1.msra.mxu0 %v3245
    %3481 = vmatprep.subr.mxu0 %v3242
    %3482 = vmatpush1.msra.mxu0 %v3241
    %3483 = vmatprep.subr.mxu0 %v3238
    %3484 = vmatpush1.msra.mxu0 %v3237
    %3485 = vmatprep.subr.mxu0 %v3234
    %3486 = vmatpush1.msra.mxu0 %v3233
    %3487 = vmatprep.subr.mxu0 %v3230
    %3488 = vmatpush1.msra.mxu0 %v3229
    %3489 = vmatprep.subr.mxu0 %v3226
    %3490 = vmatpush1.msra.mxu0 %v3225
    %3491 = vmatprep.subr.mxu0 %v3222
    %3492 = vmatpush1.msra.mxu0 %v3221
    %3493 = vmatprep.subr.mxu0 %v3218
    %3494 = vmatpush1.msra.mxu0 %v3217
    %3495 = vmatprep.subr.mxu0 %v3214
    %3496 = vmatpush1.msra.mxu0 %v3213
    %3497 = vmatprep.subr.mxu0 %v3210
    %3498 = vmatpush1.msra.mxu0 %v3209
    %3499 = vmatprep.subr.mxu0 %v3206
    %3500 = vmatpush1.msra.mxu0 %v3205
    %3501 = vmatprep.subr.mxu0 %v3202
    %3502 = vmatpush1.msra.mxu0 %v3201
    %3503 = vmatprep.subr.mxu0 0.0
    %3504 = vmatpush2.msra.mxu0 0.0
    %3505 = vmatprep.subr.mxu0 0.0
    %3506 = vmatpush2.msra.mxu0 0.0
    %3507 = vmatprep.subr.mxu0 0.0
    %3508 = vmatpush2.msra.mxu0 0.0
    %3509 = vmatprep.subr.mxu0 0.0
    %3510 = vmatpush2.msra.mxu0 0.0
    %3511 = vmatprep.subr.mxu0 0.0
    %3512 = vmatpush2.msra.mxu0 0.0
    %3513 = vmatprep.subr.mxu0 0.0
    %3514 = vmatpush2.msra.mxu0 0.0
    %3515 = vmatprep.subr.mxu0 0.0
    %3516 = vmatpush2.msra.mxu0 0.0
    %3517 = vmatprep.subr.mxu0 0.0
    %3518 = vmatpush2.msra.mxu0 0.0
    %3519 = vmatprep.subr.mxu0 0.0
    %3520 = vmatpush2.msra.mxu0 0.0
    %3521 = vmatprep.subr.mxu0 0.0
    %3522 = vmatpush2.msra.mxu0 0.0
    %3523 = vmatprep.subr.mxu0 0.0
    %3524 = vmatpush2.msra.mxu0 0.0
    %3525 = vmatprep.subr.mxu0 0.0
    %3526 = vmatpush2.msra.mxu0 0.0
    %3527 = vmatprep.subr.mxu0 0.0
    %3528 = vmatpush2.msra.mxu0 0.0
    %3529 = vmatprep.subr.mxu0 0.0
    %3530 = vmatpush2.msra.mxu0 0.0
    %3531 = vmatprep.subr.mxu0 0.0
    %3532 = vmatpush2.msra.mxu0 0.0
    %3533 = vmatprep.subr.mxu0 0.0
    %3534 = vmatpush2.msra.mxu0 0.0
    %3535 = vmatprep.mubr.f32.mxu0 0.0
    %3536 = vmatmul.mubr.f32.gmra.mxu0 %v3200
    %v3537 = vpop.f32.mrf.mxu0
    %v3538 = vadd.f32 %v3396, %v3537
    %v3539 = vpop.f32.mrf.mxu0
    %v3540 = vadd.f32 %v3398, %v3539
    %3541 = vdwg.mxu0
    %3542 = vmatprep.subr.mxu0 %v3264
    %3543 = vmatpush1.msra.mxu0 %v3263
    %3544 = vmatprep.subr.mxu0 %v3260
    %3545 = vmatpush1.msra.mxu0 %v3259
    %3546 = vmatprep.subr.mxu0 %v3256
    %3547 = vmatpush1.msra.mxu0 %v3255
    %3548 = vmatprep.subr.mxu0 %v3252
    %3549 = vmatpush1.msra.mxu0 %v3251
    %3550 = vmatprep.subr.mxu0 %v3248
    %3551 = vmatpush1.msra.mxu0 %v3247
    %3552 = vmatprep.subr.mxu0 %v3244
    %3553 = vmatpush1.msra.mxu0 %v3243
    %3554 = vmatprep.subr.mxu0 %v3240
    %3555 = vmatpush1.msra.mxu0 %v3239
    %3556 = vmatprep.subr.mxu0 %v3236
    %3557 = vmatpush1.msra.mxu0 %v3235
    %3558 = vmatprep.subr.mxu0 %v3232
    %3559 = vmatpush1.msra.mxu0 %v3231
    %3560 = vmatprep.subr.mxu0 %v3228
    %3561 = vmatpush1.msra.mxu0 %v3227
    %3562 = vmatprep.subr.mxu0 %v3224
    %3563 = vmatpush1.msra.mxu0 %v3223
    %3564 = vmatprep.subr.mxu0 %v3220
    %3565 = vmatpush1.msra.mxu0 %v3219
    %3566 = vmatprep.subr.mxu0 %v3216
    %3567 = vmatpush1.msra.mxu0 %v3215
    %3568 = vmatprep.subr.mxu0 %v3212
    %3569 = vmatpush1.msra.mxu0 %v3211
    %3570 = vmatprep.subr.mxu0 %v3208
    %3571 = vmatpush1.msra.mxu0 %v3207
    %3572 = vmatprep.subr.mxu0 %v3204
    %3573 = vmatpush1.msra.mxu0 %v3203
    %3574 = vmatprep.subr.mxu0 0.0
    %3575 = vmatpush2.msra.mxu0 0.0
    %3576 = vmatprep.subr.mxu0 0.0
    %3577 = vmatpush2.msra.mxu0 0.0
    %3578 = vmatprep.subr.mxu0 0.0
    %3579 = vmatpush2.msra.mxu0 0.0
    %3580 = vmatprep.subr.mxu0 0.0
    %3581 = vmatpush2.msra.mxu0 0.0
    %3582 = vmatprep.subr.mxu0 0.0
    %3583 = vmatpush2.msra.mxu0 0.0
    %3584 = vmatprep.subr.mxu0 0.0
    %3585 = vmatpush2.msra.mxu0 0.0
    %3586 = vmatprep.subr.mxu0 0.0
    %3587 = vmatpush2.msra.mxu0 0.0
    %3588 = vmatprep.subr.mxu0 0.0
    %3589 = vmatpush2.msra.mxu0 0.0
    %3590 = vmatprep.subr.mxu0 0.0
    %3591 = vmatpush2.msra.mxu0 0.0
    %3592 = vmatprep.subr.mxu0 0.0
    %3593 = vmatpush2.msra.mxu0 0.0
    %3594 = vmatprep.subr.mxu0 0.0
    %3595 = vmatpush2.msra.mxu0 0.0
    %3596 = vmatprep.subr.mxu0 0.0
    %3597 = vmatpush2.msra.mxu0 0.0
    %3598 = vmatprep.subr.mxu0 0.0
    %3599 = vmatpush2.msra.mxu0 0.0
    %3600 = vmatprep.subr.mxu0 0.0
    %3601 = vmatpush2.msra.mxu0 0.0
    %3602 = vmatprep.subr.mxu0 0.0
    %3603 = vmatpush2.msra.mxu0 0.0
    %3604 = vmatprep.subr.mxu0 0.0
    %3605 = vmatpush2.msra.mxu0 0.0
    %3606 = vmatprep.mubr.f32.mxu0 0.0
    %3607 = vmatmul.mubr.f32.gmra.mxu0 %v3200
    %v3608 = vpop.f32.mrf.mxu0
    %v3609 = vadd.f32 %v3467, %v3608
    %v3610 = vpop.f32.mrf.mxu0
    %v3611 = vadd.f32 %v3469, %v3610
    %3612 = vdwg.mxu0
    %v3613 = vadd.f32 %v3538, %v74
    %v3614 = vadd.f32 %v3540, %v78
    %v3615 = vadd.f32 %v3609, %v82
    %v3616 = vadd.f32 %v3611, %v86
    %v3617 = vxor.u32 %v3613, 2147483648
    %v3618 = vmul.f32 %v3617, 1.442695
    %v3619 = vpow.pop %v3618
    %v3620 = vadd.f32 %v3619, 1.0
    %v3621 = vrcp.pop %v3620
    %v3622 = vmul.f32 1.0, %v3621
    %v3623 = vxor.u32 %v3614, 2147483648
    %v3624 = vmul.f32 %v3623, 1.442695
    %v3625 = vpow.pop %v3624
    %v3626 = vadd.f32 %v3625, 1.0
    %v3627 = vrcp.pop %v3626
    %v3628 = vmul.f32 1.0, %v3627
    %v3629 = vtanh.pop %v3615
    %v3630 = vxor.u32 %v3616, 2147483648
    %v3631 = vmul.f32 %v3630, 1.442695
    %v3632 = vpow.pop %v3631
    %v3633 = vadd.f32 %v3632, 1.0
    %v3634 = vrcp.pop %v3633
    %v3635 = vmul.f32 1.0, %v3634
    %v3636 = vmul.f32 %v3628, %v3194
    %v3637 = vmul.f32 %v3622, %v3629
    %v3638 = vadd.f32 %v3636, %v3637
    %v3639 = vtanh.pop %v3638
    %v3640 = vmul.f32 %v3635, %v3639
    %s3641 = scalar_lea.vmem [#allocation8], 14
    %3642 = vst [vmem:[%s3641] sm:$0x3] %v3640
    %3643 = vst [vmem:[#allocation9] sm:$0x3] %v3640
    %3644 = vst [vmem:[#allocation11] sm:$0x3] %v3638
    // Predicated region
    $region34: #{tpu_custom_call.1} parent=1 // pred_check
      _
    $region35: #{tpu_custom_call.1} parent=1 // pred_check_branch
      %3646 = sbr.rel (0) target = $region37
    $region36: #{tpu_custom_call.1} parent=1 // pred_region
      %s3648 = ssub.s32 256, 256
      %3649 = vsyncadd [#allocation4], %s3648
      %s3650 = sshll.u32 [#allocation8], 4
      %s3651 = int_to_ptr.vmem [resolvable:$true] %s3650
      %3656 = dma.vmem_to_hbm [thread:$0]  %s3651, 256, %s4, [#allocation4], 32, 32, 2
    $region37: #{tpu_custom_call.1} parent=1 // pred_fallthru
      _
    // Predicated region
    $region38: #{tpu_custom_call.1} parent=1 // pred_check
      _
    $region39: #{tpu_custom_call.1} parent=1 // pred_check_branch
      %3658 = sbr.rel (0) target = $region41
    $region40: #{tpu_custom_call.1} parent=1 // pred_region
      %s3660 = ssub.s32 32, 32
      %3661 = vsyncadd [#allocation10], %s3660
      %s3663 = sshll.u32 [#allocation9], 4
      %s3664 = int_to_ptr.vmem [resolvable:$true] %s3663
      %3666 = dma.vmem_to_hbm [thread:$0]  %s3664, 32, %s5, [#allocation10]
    $region41: #{tpu_custom_call.1} parent=1 // pred_fallthru
      _
    // Predicated region
    $region42: #{tpu_custom_call.1} parent=1 // pred_check
      _
    $region43: #{tpu_custom_call.1} parent=1 // pred_check_branch
      %3668 = sbr.rel (0) target = $region45
    $region44: #{tpu_custom_call.1} parent=1 // pred_region
      %s3670 = ssub.s32 32, 32
      %3671 = vsyncadd [#allocation10], %s3670
      %s3673 = sshll.u32 [#allocation11], 4
      %s3674 = int_to_ptr.vmem [resolvable:$true] %s3673
      %3676 = dma.vmem_to_hbm [thread:$0]  %s3674, 32, %s6, [#allocation10]
    $region45: #{tpu_custom_call.1} parent=1 // pred_fallthru
      _
    // Predicated region
    $region46: #{tpu_custom_call.1} parent=1 // pred_check
      _
    $region47: #{tpu_custom_call.1} parent=1 // pred_check_branch
      %3678 = sbr.rel (0) target = $region49
    $region48: #{tpu_custom_call.1} parent=1 // pred_region
      %3679 = dma.done [#allocation4], 256
    $region49: #{tpu_custom_call.1} parent=1 // pred_fallthru
      _
    // Predicated region
    $region50: #{tpu_custom_call.1} parent=1 // pred_check
      _
    $region51: #{tpu_custom_call.1} parent=1 // pred_check_branch
      %3681 = sbr.rel (0) target = $region53
    $region52: #{tpu_custom_call.1} parent=1 // pred_region
      %3682 = dma.done [#allocation10], 32
    $region53: #{tpu_custom_call.1} parent=1 // pred_fallthru
      _
    // Predicated region
    $region54: #{tpu_custom_call.1} parent=1 // pred_check
      _
    $region55: #{tpu_custom_call.1} parent=1 // pred_check_branch
      %3684 = sbr.rel (0) target = $region57
    $region56: #{tpu_custom_call.1} parent=1 // pred_region
      %3685 = dma.done [#allocation10], 32
    $region57: #{tpu_custom_call.1} parent=1 // pred_fallthru
      _
    %3686 = vsyncpa [#allocation3], 1
    %3687 = vsyncpa [#allocation6], 1
    %3688 = vsyncpa [#allocation4], 1
    %3689 = vsyncpa [#allocation10], 1

</llo_original>
